<compile_context>
chip_gen: v7x
topology: tpu7x:2x2x1
jax: 0.10.0
libtpu: 0.0.40
codegen_flags: <defaults>
</compile_context>

<pallas_src>
import functools

import jax
import jax.numpy as jnp
import numpy as np
from jax.experimental import pallas as pl
from jax.experimental.pallas import tpu as pltpu


def _basic_block_kernel(*refs, n_layers, H, W):
    """Fused forward for one image.

    refs = (x_ref, w0_ref, b0_ref, w1_ref, b1_ref, ..., o_ref)
      x_ref : (1, Cin0, H, W)            input image (channels-first)
      wl_ref: (Cout_l, 9*Cin_l)          im2col-reshaped weights, k = (dy*3+dx)*Cin + c
      bl_ref: (Cout_l, 1)                bias
      o_ref : (1, Cout_last, Ho*Wo)      lane-dense output slab
    """
    x_ref = refs[0]
    o_ref = refs[-1]
    wb_refs = refs[1:-1]

    x = x_ref[0]                                   # (Cin, H, W), f32
    h, w = H, W
    for l in range(n_layers):                      # static Python unroll
        w_ref = wb_refs[2 * l]
        b_ref = wb_refs[2 * l + 1]
        cout, k9 = w_ref.shape
        cin = k9 // 9
        ho, wo = h - 2, w - 2

        # im2col: patches[(dy*3+dx)*cin + c, i*wo + j] = x[c, dy+i, dx+j]
        taps = []
        for dy in range(3):
            for dx in range(3):
                taps.append(x[:, dy:dy + ho, dx:dx + wo].reshape(cin, ho * wo))
        patches = jnp.concatenate(taps, axis=0)    # (9*cin, ho*wo)

        # Single MXU matmul per layer; f32 accumulate.
        # TODO(synk): cast to bf16 for the MXU on v6e/v7x if precision allows.
        y = jnp.dot(w_ref[...], patches, preferred_element_type=jnp.float32)
        y = jnp.maximum(y + b_ref[...], 0.0)       # bias + ReLU, (cout, ho*wo)

        if l + 1 < n_layers:
            x = y.reshape(cout, ho, wo)            # stays on-core for next layer
        else:
            o_ref[0] = y.astype(o_ref.dtype)       # lane-dense final store
        h, w = ho, wo


def basic_block_forward(x_nchw, params):
    """Forward pass of BasicBlock. Input/output are NCHW (PyTorch convention).

    params: list of (w_oihw (Cout, Cin, 3, 3), b (Cout,)) per created conv layer.
    """
    if not params:                                  # no layers created (inp_size <= 6)
        return x_nchw

    N, Cin, H, W = x_nchw.shape

    flat_args = [x_nchw]
    in_specs = [pl.BlockSpec((1, Cin, H, W), lambda n: (n, 0, 0, 0))]

    cin, h, w = Cin, H, W
    for (w_oihw, b) in params:
        cout = w_oihw.shape[0]
        # (Cout, Cin, 3, 3) -> (Cout, 3, 3, Cin) -> (Cout, 9*Cin); matches the
        # kernel's tap ordering k = (dy*3+dx)*Cin + c. Done once in the wrapper.
        w2 = jnp.transpose(w_oihw, (0, 2, 3, 1)).reshape(cout, 9 * cin)
        b2 = b.reshape(cout, 1)
        flat_args += [w2, b2]
        in_specs += [
            pl.BlockSpec((cout, 9 * cin), lambda n: (0, 0)),
            pl.BlockSpec((cout, 1), lambda n: (0, 0)),
        ]
        cin = cout
        h -= 2
        w -= 2

    n_layers = len(params)
    kernel = functools.partial(_basic_block_kernel, n_layers=n_layers, H=H, W=W)

    out = pl.pallas_call(
        kernel,
        out_shape=jax.ShapeDtypeStruct((N, cin, h * w), x_nchw.dtype),
        grid_spec=pltpu.PrefetchScalarGridSpec(
            num_scalar_prefetch=0,
            grid=(N,),
            in_specs=in_specs,
            out_specs=pl.BlockSpec((1, cin, h * w), lambda n: (n, 0, 0)),
        ),
        compiler_params=pltpu.CompilerParams(
            dimension_semantics=("parallel",)),   # v7x: 2 TCs split the batch
    )(*flat_args)

    # Free reshape back to NCHW spatial form (no transpose needed).
    return out.reshape(N, cin, h, w)


def make_basic_block_params(key, in_channels, out_channels, inp_size):
    """Build the conv stack exactly like BasicBlock._make_convs (PyTorch OIHW)."""
    params = []
    cin = in_channels
    size = inp_size
    for cout in out_channels:
        if size > 6:
            key, kw, kb = jax.random.split(key, 3)
            w = jax.random.normal(kw, (cout, cin, 3, 3), jnp.float32) * 0.1
            b = jax.random.normal(kb, (cout,), jnp.float32) * 0.1
            params.append((w, b))
            cin = cout
            size -= 2
    return params


def _reference_forward(x_nchw, params):
    """Pure-JAX reference (lax conv) for correctness checking."""
    x = x_nchw
    for w_oihw, b in params:
        y = jax.lax.conv_general_dilated(
            x, w_oihw, window_strides=(1, 1), padding="VALID",
            dimension_numbers=("NCHW", "OIHW", "NCHW"))
        x = jnp.maximum(y + b[None, :, None, None], 0.0)
    return x


if __name__ == "__main__":
    # Module config: activation=ReLU, in_channels=4, out_channels=(8, 8), inp_size=16
    in_channels = 4
    out_channels = (8, 8)
    inp_size = 16
    batch = 2

    key = jax.random.PRNGKey(0)
    key, kx = jax.random.split(key)
    x = jax.random.normal(kx, (batch, in_channels, inp_size, inp_size), jnp.float32)

    params = make_basic_block_params(key, in_channels, out_channels, inp_size)

    out = jax.block_until_ready(basic_block_forward(x, params))
    ref = jax.block_until_ready(_reference_forward(x, params))

    expected_hw = inp_size - 2 * len(params)
    assert out.shape == (batch, out_channels[-1], expected_hw, expected_hw), out.shape
    np.testing.assert_allclose(np.asarray(out), np.asarray(ref), rtol=1e-4, atol=1e-4)

    print("KERNEL_OK")
</pallas_src>

<mosaic_0001>
module attributes {stable_mosaic.version = 11 : i64} {
  func.func @_basic_block_kernel(%arg0: i32, %arg1: memref<1x4x16x16xf32, #tpu.memory_space<vmem>>, %arg2: memref<8x36xf32, #tpu.memory_space<vmem>>, %arg3: memref<8x1xf32, #tpu.memory_space<vmem>>, %arg4: memref<8x72xf32, #tpu.memory_space<vmem>>, %arg5: memref<8x1xf32, #tpu.memory_space<vmem>>, %arg6: memref<1x8x144xf32, #tpu.memory_space<vmem>>) attributes {dimension_semantics = [#tpu.dimension_semantics<parallel>], iteration_bounds = array<i64: 2>, scalar_prefetch = 0 : i64, scratch_operands = 0 : i64, tpu.core_type = #tpu.core_type<tc>, window_params = [{transform_indices = @transform_0, window_bounds = array<i64: 1, 4, 16, 16>}, {pipeline_mode = #tpu.pipeline_mode<synchronous>, transform_indices = @transform_1, window_bounds = array<i64: 8, 36>}, {pipeline_mode = #tpu.pipeline_mode<synchronous>, transform_indices = @transform_2, window_bounds = array<i64: 8, 1>}, {pipeline_mode = #tpu.pipeline_mode<synchronous>, transform_indices = @transform_3, window_bounds = array<i64: 8, 72>}, {pipeline_mode = #tpu.pipeline_mode<synchronous>, transform_indices = @transform_4, window_bounds = array<i64: 8, 1>}, {transform_indices = @transform_5, window_bounds = array<i64: 1, 8, 144>}]} {
    %c0 = arith.constant 0 : index
    %c0_0 = arith.constant 0 : index
    %c0_1 = arith.constant 0 : index
    %c0_2 = arith.constant 0 : index
    %0 = vector.load %arg1[%c0, %c0_0, %c0_1, %c0_2] : memref<1x4x16x16xf32, #tpu.memory_space<vmem>>, vector<1x4x16x16xf32>
    %1 = vector.shape_cast %0 : vector<1x4x16x16xf32> to vector<4x16x16xf32>
    %2 = vector.extract_strided_slice %1 {offsets = [0, 0, 0], sizes = [4, 14, 14], strides = [1, 1, 1]} : vector<4x16x16xf32> to vector<4x14x14xf32>
    %3 = vector.shape_cast %2 : vector<4x14x14xf32> to vector<4x196xf32>
    %4 = vector.extract_strided_slice %1 {offsets = [0, 0, 1], sizes = [4, 14, 14], strides = [1, 1, 1]} : vector<4x16x16xf32> to vector<4x14x14xf32>
    %5 = vector.shape_cast %4 : vector<4x14x14xf32> to vector<4x196xf32>
    %6 = vector.extract_strided_slice %1 {offsets = [0, 0, 2], sizes = [4, 14, 14], strides = [1, 1, 1]} : vector<4x16x16xf32> to vector<4x14x14xf32>
    %7 = vector.shape_cast %6 : vector<4x14x14xf32> to vector<4x196xf32>
    %8 = vector.extract_strided_slice %1 {offsets = [0, 1, 0], sizes = [4, 14, 14], strides = [1, 1, 1]} : vector<4x16x16xf32> to vector<4x14x14xf32>
    %9 = vector.shape_cast %8 : vector<4x14x14xf32> to vector<4x196xf32>
    %10 = vector.extract_strided_slice %1 {offsets = [0, 1, 1], sizes = [4, 14, 14], strides = [1, 1, 1]} : vector<4x16x16xf32> to vector<4x14x14xf32>
    %11 = vector.shape_cast %10 : vector<4x14x14xf32> to vector<4x196xf32>
    %12 = vector.extract_strided_slice %1 {offsets = [0, 1, 2], sizes = [4, 14, 14], strides = [1, 1, 1]} : vector<4x16x16xf32> to vector<4x14x14xf32>
    %13 = vector.shape_cast %12 : vector<4x14x14xf32> to vector<4x196xf32>
    %14 = vector.extract_strided_slice %1 {offsets = [0, 2, 0], sizes = [4, 14, 14], strides = [1, 1, 1]} : vector<4x16x16xf32> to vector<4x14x14xf32>
    %15 = vector.shape_cast %14 : vector<4x14x14xf32> to vector<4x196xf32>
    %16 = vector.extract_strided_slice %1 {offsets = [0, 2, 1], sizes = [4, 14, 14], strides = [1, 1, 1]} : vector<4x16x16xf32> to vector<4x14x14xf32>
    %17 = vector.shape_cast %16 : vector<4x14x14xf32> to vector<4x196xf32>
    %18 = vector.extract_strided_slice %1 {offsets = [0, 2, 2], sizes = [4, 14, 14], strides = [1, 1, 1]} : vector<4x16x16xf32> to vector<4x14x14xf32>
    %19 = vector.shape_cast %18 : vector<4x14x14xf32> to vector<4x196xf32>
    %20 = tpu.concatenate %3, %5, %7, %9, %11, %13, %15, %17, %19 in 0 : vector<4x196xf32>, vector<4x196xf32>, vector<4x196xf32>, vector<4x196xf32>, vector<4x196xf32>, vector<4x196xf32>, vector<4x196xf32>, vector<4x196xf32>, vector<4x196xf32> -> vector<36x196xf32>
    %c0_3 = arith.constant 0 : index
    %c0_4 = arith.constant 0 : index
    %21 = vector.load %arg2[%c0_3, %c0_4] : memref<8x36xf32, #tpu.memory_space<vmem>>, vector<8x36xf32>
    %cst = arith.constant dense<0.000000e+00> : vector<8x196xf32>
    %22 = tpu.matmul %21, %20, %cst {dimension_numbers = #tpu.dot_dimension_numbers<[1], [0], [0], [1], [0, 0, 1, 1], [], []>} : vector<8x36xf32>, vector<36x196xf32>, vector<8x196xf32> -> vector<8x196xf32>
    %c0_5 = arith.constant 0 : index
    %c0_6 = arith.constant 0 : index
    %23 = vector.load %arg3[%c0_5, %c0_6] : memref<8x1xf32, #tpu.memory_space<vmem>>, vector<8x1xf32>
    %24 = vector.broadcast %23 : vector<8x1xf32> to vector<8x196xf32>
    %25 = arith.addf %22, %24 : vector<8x196xf32>
    %cst_7 = arith.constant 0.000000e+00 : f32
    %26 = vector.broadcast %cst_7 : f32 to vector<8x196xf32>
    %27 = arith.maximumf %25, %26 : vector<8x196xf32>
    %28 = vector.shape_cast %27 : vector<8x196xf32> to vector<8x14x14xf32>
    %29 = vector.extract_strided_slice %28 {offsets = [0, 0, 0], sizes = [8, 12, 12], strides = [1, 1, 1]} : vector<8x14x14xf32> to vector<8x12x12xf32>
    %30 = vector.shape_cast %29 : vector<8x12x12xf32> to vector<8x144xf32>
    %31 = vector.extract_strided_slice %28 {offsets = [0, 0, 1], sizes = [8, 12, 12], strides = [1, 1, 1]} : vector<8x14x14xf32> to vector<8x12x12xf32>
    %32 = vector.shape_cast %31 : vector<8x12x12xf32> to vector<8x144xf32>
    %33 = vector.extract_strided_slice %28 {offsets = [0, 0, 2], sizes = [8, 12, 12], strides = [1, 1, 1]} : vector<8x14x14xf32> to vector<8x12x12xf32>
    %34 = vector.shape_cast %33 : vector<8x12x12xf32> to vector<8x144xf32>
    %35 = vector.extract_strided_slice %28 {offsets = [0, 1, 0], sizes = [8, 12, 12], strides = [1, 1, 1]} : vector<8x14x14xf32> to vector<8x12x12xf32>
    %36 = vector.shape_cast %35 : vector<8x12x12xf32> to vector<8x144xf32>
    %37 = vector.extract_strided_slice %28 {offsets = [0, 1, 1], sizes = [8, 12, 12], strides = [1, 1, 1]} : vector<8x14x14xf32> to vector<8x12x12xf32>
    %38 = vector.shape_cast %37 : vector<8x12x12xf32> to vector<8x144xf32>
    %39 = vector.extract_strided_slice %28 {offsets = [0, 1, 2], sizes = [8, 12, 12], strides = [1, 1, 1]} : vector<8x14x14xf32> to vector<8x12x12xf32>
    %40 = vector.shape_cast %39 : vector<8x12x12xf32> to vector<8x144xf32>
    %41 = vector.extract_strided_slice %28 {offsets = [0, 2, 0], sizes = [8, 12, 12], strides = [1, 1, 1]} : vector<8x14x14xf32> to vector<8x12x12xf32>
    %42 = vector.shape_cast %41 : vector<8x12x12xf32> to vector<8x144xf32>
    %43 = vector.extract_strided_slice %28 {offsets = [0, 2, 1], sizes = [8, 12, 12], strides = [1, 1, 1]} : vector<8x14x14xf32> to vector<8x12x12xf32>
    %44 = vector.shape_cast %43 : vector<8x12x12xf32> to vector<8x144xf32>
    %45 = vector.extract_strided_slice %28 {offsets = [0, 2, 2], sizes = [8, 12, 12], strides = [1, 1, 1]} : vector<8x14x14xf32> to vector<8x12x12xf32>
    %46 = vector.shape_cast %45 : vector<8x12x12xf32> to vector<8x144xf32>
    %47 = tpu.concatenate %30, %32, %34, %36, %38, %40, %42, %44, %46 in 0 : vector<8x144xf32>, vector<8x144xf32>, vector<8x144xf32>, vector<8x144xf32>, vector<8x144xf32>, vector<8x144xf32>, vector<8x144xf32>, vector<8x144xf32>, vector<8x144xf32> -> vector<72x144xf32>
    %c0_8 = arith.constant 0 : index
    %c0_9 = arith.constant 0 : index
    %48 = vector.load %arg4[%c0_8, %c0_9] : memref<8x72xf32, #tpu.memory_space<vmem>>, vector<8x72xf32>
    %cst_10 = arith.constant dense<0.000000e+00> : vector<8x144xf32>
    %49 = tpu.matmul %48, %47, %cst_10 {dimension_numbers = #tpu.dot_dimension_numbers<[1], [0], [0], [1], [0, 0, 1, 1], [], []>} : vector<8x72xf32>, vector<72x144xf32>, vector<8x144xf32> -> vector<8x144xf32>
    %c0_11 = arith.constant 0 : index
    %c0_12 = arith.constant 0 : index
    %50 = vector.load %arg5[%c0_11, %c0_12] : memref<8x1xf32, #tpu.memory_space<vmem>>, vector<8x1xf32>
    %51 = vector.broadcast %50 : vector<8x1xf32> to vector<8x144xf32>
    %52 = arith.addf %49, %51 : vector<8x144xf32>
    %cst_13 = arith.constant 0.000000e+00 : f32
    %53 = vector.broadcast %cst_13 : f32 to vector<8x144xf32>
    %54 = arith.maximumf %52, %53 : vector<8x144xf32>
    %c0_14 = arith.constant 0 : index
    %c0_15 = arith.constant 0 : index
    %c0_16 = arith.constant 0 : index
    %55 = vector.load %arg6[%c0_14, %c0_15, %c0_16] : memref<1x8x144xf32, #tpu.memory_space<vmem>>, vector<1x8x144xf32>
    %56 = vector.shape_cast %55 : vector<1x8x144xf32> to vector<8x144xf32>
    %57 = vector.shape_cast %54 : vector<8x144xf32> to vector<1x8x144xf32>
    tpu.vector_store %arg6[%c0_14, %c0_15, %c0_16], %57 {strides = array<i32>} : memref<1x8x144xf32, #tpu.memory_space<vmem>>, vector<1x8x144xf32>,
    return
  }
  func.func @transform_0(%arg0: i32) -> (i32, i32, i32, i32) {
    %c0_i32 = arith.constant 0 : i32
    %c0_i32_0 = arith.constant 0 : i32
    %c0_i32_1 = arith.constant 0 : i32
    %c0_i32_2 = arith.constant 0 : i32
    return %arg0, %c0_i32, %c0_i32_0, %c0_i32_1 : i32, i32, i32, i32
  }
  func.func @transform_1(%arg0: i32) -> (i32, i32) {
    %c0_i32 = arith.constant 0 : i32
    %c0_i32_0 = arith.constant 0 : i32
    %c0_i32_1 = arith.constant 0 : i32
    return %c0_i32, %c0_i32_0 : i32, i32
  }
  func.func @transform_2(%arg0: i32) -> (i32, i32) {
    %c0_i32 = arith.constant 0 : i32
    %c0_i32_0 = arith.constant 0 : i32
    %c0_i32_1 = arith.constant 0 : i32
    return %c0_i32, %c0_i32_0 : i32, i32
  }
  func.func @transform_3(%arg0: i32) -> (i32, i32) {
    %c0_i32 = arith.constant 0 : i32
    %c0_i32_0 = arith.constant 0 : i32
    %c0_i32_1 = arith.constant 0 : i32
    return %c0_i32, %c0_i32_0 : i32, i32
  }
  func.func @transform_4(%arg0: i32) -> (i32, i32) {
    %c0_i32 = arith.constant 0 : i32
    %c0_i32_0 = arith.constant 0 : i32
    %c0_i32_1 = arith.constant 0 : i32
    return %c0_i32, %c0_i32_0 : i32, i32
  }
  func.func @transform_5(%arg0: i32) -> (i32, i32, i32) {
    %c0_i32 = arith.constant 0 : i32
    %c0_i32_0 = arith.constant 0 : i32
    %c0_i32_1 = arith.constant 0 : i32
    return %arg0, %c0_i32, %c0_i32_0 : i32, i32, i32
  }
}

</mosaic_0001>

<llo_original>
// kernel: tpu_custom_call.1
$region0: #{tpu_custom_call.1}
  #allocation0 [shape = 'u32[]', space=smem, size = 0x4, offset = 0x4, fixed_abs, tag = 'smem constant byte address 0x4 - core index']
  #allocation1 [shape = 'u32[144,128]{1,0:T(1,128)}', space=vmem, size = 0x12000, scoped, tag = 'internal scratch']
  %s0 = inlined_call_operand.hbm [shape: f32[2,4,16,16], index: 0, kind: input, shape index: {}]
  %s1 = inlined_call_operand.vmem [shape: f32[8,36], index: 1, kind: input, shape index: {}]
  %s2 = inlined_call_operand.vmem [shape: f32[8,1], index: 2, kind: input, shape index: {}]
  %s3 = inlined_call_operand.vmem [shape: f32[8,72], index: 3, kind: input, shape index: {}]
  %s4 = inlined_call_operand.vmem [shape: f32[8,1], index: 4, kind: input, shape index: {}]
  %s5 = inlined_call_operand.hbm [shape: f32[2,8,144], index: 5, kind: output, shape index: {}]
  %s6 = sld [smem:[#allocation0]]
  $region57: #{tpu_custom_call.1} parent=0
    _
  %s8 = ssub.s32 1, %s6
  %s9 = scalar_select 0, %s8, %s6
  $region1: #{tpu_custom_call.1} parent=0
    #allocation2 [shape = 'u8[65536]{0}', space=vmem, size = 0x10000, scoped, tag = 'input window, operand 0']
    #allocation3 [shape = 's32[2]{0}', space=sflag, size = 0x8, scoped, tag = 'scoped memory for tpu_custom_call.1']
    #allocation4 [shape = 's32[2]{0}', space=sflag, size = 0x8, scoped, tag = 'scoped memory for tpu_custom_call.1']
    #allocation5 [shape = 'u8[16384]{0}', space=vmem, size = 0x4000, scoped, tag = 'output window, operand 0']
    %10 = vsyncpa [#allocation3], 0
    %s11 = scalar_lea.sflag [#allocation3], 1
    %12 = vsyncpa %s11, 0
    %13 = vsyncpa [#allocation4], 0
    %s14 = scalar_lea.sflag [#allocation4], 1
    %15 = vsyncpa %s14, 0
    loop: start=0, step=1, limit=4
    $region2: #{tpu_custom_call.1} parent=1 // loop_pre_header
      _
    $region3: #{tpu_custom_call.1} parent=1 // loop_header
      %s17 = sphi 0, %s21
      %p18 = scmp.ge.s32.totalorder %s17, 4
      %s27 = sphi 0, %s29
      %s30 = sphi 0, %s27
      %s31 = sphi 0, %s30
      %s47 = sphi 0, %s31
      %s51 = sphi 0, %s51
      %s53 = sphi 0, %s51
      %s54 = sphi 0, %s53
      %s68 = sphi 0, %s54
      %s72 = sphi 0, %s72
      %s74 = sphi 0, %s72
      %s75 = sphi 0, %s74
      %s89 = sphi 0, %s75
      %s93 = sphi 0, %s93
      %s95 = sphi 0, %s93
      %s96 = sphi 0, %s95
      %s110 = sphi 0, %s96
      %s114 = sphi 0, %s114
      %s116 = sphi 0, %s114
      %s117 = sphi 0, %s116
      %s131 = sphi 0, %s117
      %s137 = sphi 0, %s139
      %s140 = sphi 0, %s137
      %s141 = sphi 0, %s140
      %s157 = sphi 0, %s141
    $region4: #{tpu_custom_call.1} parent=1 // loop_header_branch
      %20 = sbr.rel (%p18) target = $region8
    $region5: #{tpu_custom_call.1} parent=1 // loop_body
      %s22 = ssub.s32 %s17, 1
      %s23 = ssub.s32 %s17, 2
      %s24 = sadd.s32 %s17, 1
      %s25 = ssub.s32 %s17, %s24
      %p26 = scmp.eq.s32.totalorder %s25, 0
      %s28 = sadd.s32 %s27, 1
      %s29 = scalar_select %p26, %s27, %s28
      %p32 = pneg %p26
      %p33 = scmp.eq.s32.totalorder %s17, 1
      %p34 = por %p32, %p33
      %p35 = scmp.ne.s32.totalorder %s27, %s30
      %p36 = scmp.eq.s32.totalorder %s17, 0
      %p37 = por %p35, %p36
      %p38 = scmp.ne.s32.totalorder %s27, %s30
      %p39 = scmp.eq.s32.totalorder %s22, 1
      %p40 = por %p38, %p39
      %p41 = scmp.ne.s32.totalorder %s30, %s31
      %p42 = scmp.eq.s32.totalorder %s22, 0
      %p43 = por %p41, %p42
      %p44 = scmp.ne.s32.totalorder %s30, %s31
      %p45 = scmp.eq.s32.totalorder %s23, 1
      %p46 = por %p44, %p45
      %p48 = scmp.ne.s32.totalorder %s31, %s47
      %p49 = scmp.eq.s32.totalorder %s23, 0
      %p50 = por %p48, %p49
      %s52 = sadd.s32 %s51, 1
      %p55 = scmp.eq.s32.totalorder %s17, 1
      %p56 = scmp.ne.s32.totalorder %s51, %s53
      %p57 = scmp.eq.s32.totalorder %s17, 0
      %p58 = por %p56, %p57
      %p59 = scmp.ne.s32.totalorder %s51, %s53
      %p60 = scmp.eq.s32.totalorder %s22, 1
      %p61 = por %p59, %p60
      %p62 = scmp.ne.s32.totalorder %s53, %s54
      %p63 = scmp.eq.s32.totalorder %s22, 0
      %p64 = por %p62, %p63
      %p65 = scmp.ne.s32.totalorder %s53, %s54
      %p66 = scmp.eq.s32.totalorder %s23, 1
      %p67 = por %p65, %p66
      %p69 = scmp.ne.s32.totalorder %s54, %s68
      %p70 = scmp.eq.s32.totalorder %s23, 0
      %p71 = por %p69, %p70
      %s73 = sadd.s32 %s72, 1
      %p76 = scmp.eq.s32.totalorder %s17, 1
      %p77 = scmp.ne.s32.totalorder %s72, %s74
      %p78 = scmp.eq.s32.totalorder %s17, 0
      %p79 = por %p77, %p78
      %p80 = scmp.ne.s32.totalorder %s72, %s74
      %p81 = scmp.eq.s32.totalorder %s22, 1
      %p82 = por %p80, %p81
      %p83 = scmp.ne.s32.totalorder %s74, %s75
      %p84 = scmp.eq.s32.totalorder %s22, 0
      %p85 = por %p83, %p84
      %p86 = scmp.ne.s32.totalorder %s74, %s75
      %p87 = scmp.eq.s32.totalorder %s23, 1
      %p88 = por %p86, %p87
      %p90 = scmp.ne.s32.totalorder %s75, %s89
      %p91 = scmp.eq.s32.totalorder %s23, 0
      %p92 = por %p90, %p91
      %s94 = sadd.s32 %s93, 1
      %p97 = scmp.eq.s32.totalorder %s17, 1
      %p98 = scmp.ne.s32.totalorder %s93, %s95
      %p99 = scmp.eq.s32.totalorder %s17, 0
      %p100 = por %p98, %p99
      %p101 = scmp.ne.s32.totalorder %s93, %s95
      %p102 = scmp.eq.s32.totalorder %s22, 1
      %p103 = por %p101, %p102
      %p104 = scmp.ne.s32.totalorder %s95, %s96
      %p105 = scmp.eq.s32.totalorder %s22, 0
      %p106 = por %p104, %p105
      %p107 = scmp.ne.s32.totalorder %s95, %s96
      %p108 = scmp.eq.s32.totalorder %s23, 1
      %p109 = por %p107, %p108
      %p111 = scmp.ne.s32.totalorder %s96, %s110
      %p112 = scmp.eq.s32.totalorder %s23, 0
      %p113 = por %p111, %p112
      %s115 = sadd.s32 %s114, 1
      %p118 = scmp.eq.s32.totalorder %s17, 1
      %p119 = scmp.ne.s32.totalorder %s114, %s116
      %p120 = scmp.eq.s32.totalorder %s17, 0
      %p121 = por %p119, %p120
      %p122 = scmp.ne.s32.totalorder %s114, %s116
      %p123 = scmp.eq.s32.totalorder %s22, 1
      %p124 = por %p122, %p123
      %p125 = scmp.ne.s32.totalorder %s116, %s117
      %p126 = scmp.eq.s32.totalorder %s22, 0
      %p127 = por %p125, %p126
      %p128 = scmp.ne.s32.totalorder %s116, %s117
      %p129 = scmp.eq.s32.totalorder %s23, 1
      %p130 = por %p128, %p129
      %p132 = scmp.ne.s32.totalorder %s117, %s131
      %p133 = scmp.eq.s32.totalorder %s23, 0
      %p134 = por %p132, %p133
      %s135 = ssub.s32 %s17, %s24
      %p136 = scmp.eq.s32.totalorder %s135, 0
      %s138 = sadd.s32 %s137, 1
      %s139 = scalar_select %p136, %s137, %s138
      %p142 = pneg %p136
      %p143 = scmp.eq.s32.totalorder %s17, 1
      %p144 = por %p142, %p143
      %p145 = scmp.ne.s32.totalorder %s137, %s140
      %p146 = scmp.eq.s32.totalorder %s17, 0
      %p147 = por %p145, %p146
      %p148 = scmp.ne.s32.totalorder %s137, %s140
      %p149 = scmp.eq.s32.totalorder %s22, 1
      %p150 = por %p148, %p149
      %p151 = scmp.ne.s32.totalorder %s140, %s141
      %p152 = scmp.eq.s32.totalorder %s22, 0
      %p153 = por %p151, %p152
      %p154 = scmp.ne.s32.totalorder %s140, %s141
      %p155 = scmp.eq.s32.totalorder %s23, 1
      %p156 = por %p154, %p155
      %p158 = scmp.ne.s32.totalorder %s141, %s157
      %p159 = scmp.eq.s32.totalorder %s23, 0
      %p160 = por %p158, %p159
      %p161 = scmp.le.s32.totalorder 1, %s17
      %p162 = scmp.lt.s32.totalorder %s17, 3
      %p163 = pnand %p161, %p162
      %p164 = pneg %p163
      // Predicated region
      $region9: #{tpu_custom_call.1} parent=5 // pred_check
        _
      $region10: #{tpu_custom_call.1} parent=5 // pred_check_branch
        %166 = sbr.rel (%p163) target = $region12
      $region11: #{tpu_custom_call.1} parent=5 // pred_region
        %s167 = ssub.s32 %s17, 1
        // Predicated region
        $region13: #{tpu_custom_call.1} parent=11 // pred_check
          %p168 = pneg %p64
        $region14: #{tpu_custom_call.1} parent=11 // pred_check_branch
          %170 = sbr.rel (%p168) target = $region16
        $region15: #{tpu_custom_call.1} parent=11 // pred_region
          _
        $region16: #{tpu_custom_call.1} parent=11 // pred_fallthru
          _
        // Predicated region
        $region17: #{tpu_custom_call.1} parent=11 // pred_check
          %p171 = pneg %p85
        $region18: #{tpu_custom_call.1} parent=11 // pred_check_branch
          %173 = sbr.rel (%p171) target = $region20
        $region19: #{tpu_custom_call.1} parent=11 // pred_region
          _
        $region20: #{tpu_custom_call.1} parent=11 // pred_fallthru
          _
        // Predicated region
        $region21: #{tpu_custom_call.1} parent=11 // pred_check
          %p174 = pneg %p106
        $region22: #{tpu_custom_call.1} parent=11 // pred_check_branch
          %176 = sbr.rel (%p174) target = $region24
        $region23: #{tpu_custom_call.1} parent=11 // pred_region
          _
        $region24: #{tpu_custom_call.1} parent=11 // pred_fallthru
          _
        // Predicated region
        $region25: #{tpu_custom_call.1} parent=11 // pred_check
          %p177 = pneg %p127
        $region26: #{tpu_custom_call.1} parent=11 // pred_check_branch
          %179 = sbr.rel (%p177) target = $region28
        $region27: #{tpu_custom_call.1} parent=11 // pred_region
          _
        $region28: #{tpu_custom_call.1} parent=11 // pred_fallthru
          _
      $region12: #{tpu_custom_call.1} parent=5 // pred_fallthru
        _
      %p180 = scmp.lt.s32.totalorder %s17, 2
      // Predicated region
      $region29: #{tpu_custom_call.1} parent=5 // pred_check
        %p181 = pneg %p180
      $region30: #{tpu_custom_call.1} parent=5 // pred_check_branch
        %183 = sbr.rel (%p181) target = $region32
      $region31: #{tpu_custom_call.1} parent=5 // pred_region
        // Predicated region
        $region33: #{tpu_custom_call.1} parent=31 // pred_check
          %p184 = pneg %p37
        $region34: #{tpu_custom_call.1} parent=31 // pred_check_branch
          %186 = sbr.rel (%p184) target = $region36
        $region35: #{tpu_custom_call.1} parent=31 // pred_region
          %s187 = sand.u32 %s27, 1
          %s188 = scalar_lea.sflag [#allocation3], %s187
          %s189 = sand.u32 %s27, 1
          %s190 = smul.addr %s189, 64
          %s191 = scalar_lea.vmem [#allocation2], %s190
          %s193 = ssub.s32 1024, 1024
          %194 = vsyncadd %s188, %s193
          %s195 = smul.addr %s17, 8
          %s196 = smul.addr %s195, 128
          %s197 = scalar_lea.hbm %s0, %s196
          %s198 = sshll.u32 %s191, 4
          %s199 = int_to_ptr.vmem [resolvable:$true] %s198
          %204 = dma.hbm_to_vmem [thread:$0]  %s197, 1024, %s199, %s188, 128, 128, 8
        $region36: #{tpu_custom_call.1} parent=31 // pred_fallthru
          _
      $region32: #{tpu_custom_call.1} parent=5 // pred_fallthru
        _
      %p205 = scmp.le.s32.totalorder 1, %s17
      %p206 = scmp.lt.s32.totalorder %s17, 3
      %p207 = pnand %p205, %p206
      %p208 = pneg %p207
      // Predicated region
      $region37: #{tpu_custom_call.1} parent=5 // pred_check
        _
      $region38: #{tpu_custom_call.1} parent=5 // pred_check_branch
        %210 = sbr.rel (%p207) target = $region40
      $region39: #{tpu_custom_call.1} parent=5 // pred_region
        %s211 = ssub.s32 %s17, 1
        %s212 = sand.u32 %s30, 1
        %s213 = scalar_lea.sflag [#allocation3], %s212
        %s214 = sand.u32 %s30, 1
        %s215 = smul.addr %s214, 64
        %s216 = scalar_lea.vmem [#allocation2], %s215
        // Predicated region
        $region41: #{tpu_custom_call.1} parent=39 // pred_check
          %p217 = pneg %p43
        $region42: #{tpu_custom_call.1} parent=39 // pred_check_branch
          %219 = sbr.rel (%p217) target = $region44
        $region43: #{tpu_custom_call.1} parent=39 // pred_region
          %220 = dma.done %s213, 1024
        $region44: #{tpu_custom_call.1} parent=39 // pred_fallthru
          _
        %s221 = sand.u32 %s30, 1
        %s222 = scalar_lea.sflag [#allocation3], %s221
        %s223 = sand.u32 %s30, 1
        %s224 = smul.addr %s223, 64
        %s225 = scalar_lea.vmem [#allocation2], %s224
        %p226 = pneg %p43
        %p227 = pneg %p40
        %p228 = pneg %p64
        %p229 = pneg %p61
        %p230 = pneg %p85
        %p231 = pneg %p82
        %p232 = pneg %p106
        %p233 = pneg %p103
        %p234 = pneg %p127
        %p235 = pneg %p124
        %p236 = pneg %p153
        %p237 = pneg %p150
        %s238 = sand.u32 %s140, 1
        %s239 = scalar_lea.sflag [#allocation4], %s238
        %s240 = sand.u32 %s140, 1
        %s241 = smul.addr %s240, 16
        %s242 = scalar_lea.vmem [#allocation5], %s241
        %v243 = vld [vmem:[%s216] sm:$0xff]
        %v244 = vld [vmem:[%s216 + $0x8] sm:$0xff]
        %v245 = vld [vmem:[%s216 + $0x10] sm:$0xff]
        %v246 = vld [vmem:[%s216 + $0x18] sm:$0xff]
        %v247 = vld [vmem:[%s216 + $0x20] sm:$0xff]
        %v248 = vld [vmem:[%s216 + $0x28] sm:$0xff]
        %v249 = vld [vmem:[%s216 + $0x30] sm:$0xff]
        %v250 = vld [vmem:[%s216 + $0x38] sm:$0xff]
        %v251 = vcombine.low %v243, %v247
        %v252 = vcombine.high %v243, %v247
        %v254 = vunpack.c.l.s4 1983009808
        %v255 = vunpack.c.0.s8 %v254
        %v256 = vlaneseq
        %v257 = vshrl.u32 %v256, 7
        %v258 = vsub.s32 %v255, %v257
        %v259 = vrot.slane %v251, %v258
        %v261 = vunpack.c.l.s4 1983009808
        %v262 = vunpack.c.0.s8 %v261
        %v263 = vlaneseq
        %v264 = vshrl.u32 %v263, 7
        %v265 = vsub.s32 %v262, %v264
        %v266 = vrot.slane %v252, %v265
        %v267 = vcombine.low %v245, %v249
        %v268 = vcombine.high %v245, %v249
        %v270 = vunpack.c.l.s4 1983009808
        %v271 = vunpack.c.0.s8 %v270
        %v272 = vlaneseq
        %v273 = vshrl.u32 %v272, 7
        %v274 = vsub.s32 %v271, %v273
        %v275 = vrot.slane %v267, %v274
        %v277 = vunpack.c.l.s4 1983009808
        %v278 = vunpack.c.0.s8 %v277
        %v279 = vlaneseq
        %v280 = vshrl.u32 %v279, 7
        %v281 = vsub.s32 %v278, %v280
        %v282 = vrot.slane %v268, %v281
        %v283 = vcombine.low %v259, %v275
        %v284 = vcombine.high %v259, %v275
        %v286 = vunpack.c.l.s4 1934713408
        %v287 = vunpack.c.0.s8 %v286
        %v288 = vlaneseq
        %v289 = vshrl.u32 %v288, 7
        %v290 = vsub.s32 %v287, %v289
        %v291 = vrot.slane %v283, %v290
        %v293 = vunpack.c.l.s4 1934713408
        %v294 = vunpack.c.0.s8 %v293
        %v295 = vlaneseq
        %v296 = vshrl.u32 %v295, 7
        %v297 = vsub.s32 %v294, %v296
        %v298 = vrot.slane %v284, %v297
        %v299 = vcombine.low %v266, %v282
        %v300 = vcombine.high %v266, %v282
        %v302 = vunpack.c.l.s4 1934713408
        %v303 = vunpack.c.0.s8 %v302
        %v304 = vlaneseq
        %v305 = vshrl.u32 %v304, 7
        %v306 = vsub.s32 %v303, %v305
        %v307 = vrot.slane %v299, %v306
        %v309 = vunpack.c.l.s4 1934713408
        %v310 = vunpack.c.0.s8 %v309
        %v311 = vlaneseq
        %v312 = vshrl.u32 %v311, 7
        %v313 = vsub.s32 %v310, %v312
        %v314 = vrot.slane %v300, %v313
        %v315 = vcombine.high %v291, 0.0
        %v316 = vcombine.high %v298, 0.0
        %v317 = vcombine.high %v307, 0.0
        %v318 = vcombine.high %v314, 0.0
        %v319 = vcombine.low %v244, %v248
        %v320 = vcombine.high %v244, %v248
        %v322 = vunpack.c.l.s4 1983009808
        %v323 = vunpack.c.0.s8 %v322
        %v324 = vlaneseq
        %v325 = vshrl.u32 %v324, 7
        %v326 = vsub.s32 %v323, %v325
        %v327 = vrot.slane %v319, %v326
        %v329 = vunpack.c.l.s4 1983009808
        %v330 = vunpack.c.0.s8 %v329
        %v331 = vlaneseq
        %v332 = vshrl.u32 %v331, 7
        %v333 = vsub.s32 %v330, %v332
        %v334 = vrot.slane %v320, %v333
        %v335 = vcombine.low %v246, %v250
        %v336 = vcombine.high %v246, %v250
        %v338 = vunpack.c.l.s4 1983009808
        %v339 = vunpack.c.0.s8 %v338
        %v340 = vlaneseq
        %v341 = vshrl.u32 %v340, 7
        %v342 = vsub.s32 %v339, %v341
        %v343 = vrot.slane %v335, %v342
        %v345 = vunpack.c.l.s4 1983009808
        %v346 = vunpack.c.0.s8 %v345
        %v347 = vlaneseq
        %v348 = vshrl.u32 %v347, 7
        %v349 = vsub.s32 %v346, %v348
        %v350 = vrot.slane %v336, %v349
        %v351 = vcombine.low %v327, %v343
        %v352 = vcombine.high %v327, %v343
        %v354 = vunpack.c.l.s4 1934713408
        %v355 = vunpack.c.0.s8 %v354
        %v356 = vlaneseq
        %v357 = vshrl.u32 %v356, 7
        %v358 = vsub.s32 %v355, %v357
        %v359 = vrot.slane %v351, %v358
        %v361 = vunpack.c.l.s4 1934713408
        %v362 = vunpack.c.0.s8 %v361
        %v363 = vlaneseq
        %v364 = vshrl.u32 %v363, 7
        %v365 = vsub.s32 %v362, %v364
        %v366 = vrot.slane %v352, %v365
        %v367 = vcombine.low %v334, %v350
        %v369 = vunpack.c.l.s4 1934713408
        %v370 = vunpack.c.0.s8 %v369
        %v371 = vlaneseq
        %v372 = vshrl.u32 %v371, 7
        %v373 = vsub.s32 %v370, %v372
        %v374 = vrot.slane %v367, %v373
        %v375 = vcombine.high %v359, 0.0
        %v376 = vcombine.high %v366, 0.0
        %v377 = vcombine.high %v374, 0.0
        %379 = vrot.lane.b32.xlu0 %v315, 14
        %v380 = vpop.permute.xlu0 %379
        %383 = vrot.lane.b32.xlu0 %v298, 28
        %v384 = vpop.permute.xlu0 %383
        %387 = vrot.lane.b32.xlu0 %v316, 42
        %v388 = vpop.permute.xlu0 %387
        %391 = vrot.lane.b32.xlu0 %v307, 56
        %v392 = vpop.permute.xlu0 %391
        %395 = vrot.lane.b32.xlu0 %v317, 70
        %v396 = vpop.permute.xlu0 %395
        %399 = vrot.lane.b32.xlu0 %v314, 84
        %v400 = vpop.permute.xlu0 %399
        %403 = vrot.lane.b32.xlu0 %v318, 98
        %v404 = vpop.permute.xlu0 %403
        %407 = vrot.lane.b32.xlu0 %v359, 112
        %v408 = vpop.permute.xlu0 %407
        %411 = vrot.lane.b32.xlu0 %v375, 126
        %v412 = vpop.permute.xlu0 %411
        %415 = vrot.lane.b32.xlu0 %v366, 12
        %v416 = vpop.permute.xlu0 %415
        %419 = vrot.lane.b32.xlu0 %v376, 26
        %v420 = vpop.permute.xlu0 %419
        %423 = vrot.lane.b32.xlu0 %v374, 40
        %v424 = vpop.permute.xlu0 %423
        %427 = vrot.lane.b32.xlu0 %v377, 54
        %v428 = vpop.permute.xlu0 %427
        %vm430 = vcmask 113664
        %v431 = vsel %vm430, %v291, %v380
        %vm432 = vcmask 228352
        %v433 = vsel %vm432, %v431, %v384
        %vm434 = vcmask 343040
        %v435 = vsel %vm434, %v433, %v388
        %vm436 = vcmask 457728
        %v437 = vsel %vm436, %v435, %v392
        %vm438 = vcmask 572416
        %v439 = vsel %vm438, %v437, %v396
        %vm440 = vcmask 687104
        %v441 = vsel %vm440, %v439, %v400
        %vm442 = vcmask 801792
        %v443 = vsel %vm442, %v441, %v404
        %vm444 = vcmask 916480
        %v445 = vsel %vm444, %v443, %v408
        %vm446 = vcmask 1031168
        %v447 = vsel %vm446, %v445, %v412
        %vm448 = vcmask 97280
        %v449 = vsel %vm448, %v412, %v416
        %vm450 = vcmask 211968
        %v451 = vsel %vm450, %v449, %v420
        %vm452 = vcmask 326656
        %v453 = vsel %vm452, %v451, %v424
        %vm454 = vcmask 441344
        %v455 = vsel %vm454, %v453, %v428
        %464 = vrot.lane.b32.xlu0 %v243, 127
        %v465 = vpop.permute.xlu0 %464
        %466 = vrot.lane.b32.xlu0 %v244, 127
        %v467 = vpop.permute.xlu0 %466
        %468 = vrot.lane.b32.xlu0 %v245, 127
        %v469 = vpop.permute.xlu0 %468
        %470 = vrot.lane.b32.xlu0 %v246, 127
        %v471 = vpop.permute.xlu0 %470
        %472 = vrot.lane.b32.xlu0 %v247, 127
        %v473 = vpop.permute.xlu0 %472
        %474 = vrot.lane.b32.xlu0 %v248, 127
        %v475 = vpop.permute.xlu0 %474
        %476 = vrot.lane.b32.xlu0 %v249, 127
        %v477 = vpop.permute.xlu0 %476
        %478 = vrot.lane.b32.xlu0 %v250, 127
        %v479 = vpop.permute.xlu0 %478
        %v488 = vcombine.low %v465, %v473
        %v489 = vcombine.high %v465, %v473
        %v491 = vunpack.c.l.s4 1983009808
        %v492 = vunpack.c.0.s8 %v491
        %v493 = vlaneseq
        %v494 = vshrl.u32 %v493, 7
        %v495 = vsub.s32 %v492, %v494
        %v496 = vrot.slane %v488, %v495
        %v498 = vunpack.c.l.s4 1983009808
        %v499 = vunpack.c.0.s8 %v498
        %v500 = vlaneseq
        %v501 = vshrl.u32 %v500, 7
        %v502 = vsub.s32 %v499, %v501
        %v503 = vrot.slane %v489, %v502
        %v504 = vcombine.low %v469, %v477
        %v505 = vcombine.high %v469, %v477
        %v507 = vunpack.c.l.s4 1983009808
        %v508 = vunpack.c.0.s8 %v507
        %v509 = vlaneseq
        %v510 = vshrl.u32 %v509, 7
        %v511 = vsub.s32 %v508, %v510
        %v512 = vrot.slane %v504, %v511
        %v514 = vunpack.c.l.s4 1983009808
        %v515 = vunpack.c.0.s8 %v514
        %v516 = vlaneseq
        %v517 = vshrl.u32 %v516, 7
        %v518 = vsub.s32 %v515, %v517
        %v519 = vrot.slane %v505, %v518
        %v520 = vcombine.low %v496, %v512
        %v521 = vcombine.high %v496, %v512
        %v523 = vunpack.c.l.s4 1934713408
        %v524 = vunpack.c.0.s8 %v523
        %v525 = vlaneseq
        %v526 = vshrl.u32 %v525, 7
        %v527 = vsub.s32 %v524, %v526
        %v528 = vrot.slane %v520, %v527
        %v530 = vunpack.c.l.s4 1934713408
        %v531 = vunpack.c.0.s8 %v530
        %v532 = vlaneseq
        %v533 = vshrl.u32 %v532, 7
        %v534 = vsub.s32 %v531, %v533
        %v535 = vrot.slane %v521, %v534
        %v536 = vcombine.low %v503, %v519
        %v537 = vcombine.high %v503, %v519
        %v539 = vunpack.c.l.s4 1934713408
        %v540 = vunpack.c.0.s8 %v539
        %v541 = vlaneseq
        %v542 = vshrl.u32 %v541, 7
        %v543 = vsub.s32 %v540, %v542
        %v544 = vrot.slane %v536, %v543
        %v546 = vunpack.c.l.s4 1934713408
        %v547 = vunpack.c.0.s8 %v546
        %v548 = vlaneseq
        %v549 = vshrl.u32 %v548, 7
        %v550 = vsub.s32 %v547, %v549
        %v551 = vrot.slane %v537, %v550
        %v552 = vcombine.high %v528, 0.0
        %v553 = vcombine.high %v535, 0.0
        %v554 = vcombine.high %v544, 0.0
        %v555 = vcombine.high %v551, 0.0
        %v556 = vcombine.low %v467, %v475
        %v557 = vcombine.high %v467, %v475
        %v559 = vunpack.c.l.s4 1983009808
        %v560 = vunpack.c.0.s8 %v559
        %v561 = vlaneseq
        %v562 = vshrl.u32 %v561, 7
        %v563 = vsub.s32 %v560, %v562
        %v564 = vrot.slane %v556, %v563
        %v566 = vunpack.c.l.s4 1983009808
        %v567 = vunpack.c.0.s8 %v566
        %v568 = vlaneseq
        %v569 = vshrl.u32 %v568, 7
        %v570 = vsub.s32 %v567, %v569
        %v571 = vrot.slane %v557, %v570
        %v572 = vcombine.low %v471, %v479
        %v573 = vcombine.high %v471, %v479
        %v575 = vunpack.c.l.s4 1983009808
        %v576 = vunpack.c.0.s8 %v575
        %v577 = vlaneseq
        %v578 = vshrl.u32 %v577, 7
        %v579 = vsub.s32 %v576, %v578
        %v580 = vrot.slane %v572, %v579
        %v582 = vunpack.c.l.s4 1983009808
        %v583 = vunpack.c.0.s8 %v582
        %v584 = vlaneseq
        %v585 = vshrl.u32 %v584, 7
        %v586 = vsub.s32 %v583, %v585
        %v587 = vrot.slane %v573, %v586
        %v588 = vcombine.low %v564, %v580
        %v589 = vcombine.high %v564, %v580
        %v591 = vunpack.c.l.s4 1934713408
        %v592 = vunpack.c.0.s8 %v591
        %v593 = vlaneseq
        %v594 = vshrl.u32 %v593, 7
        %v595 = vsub.s32 %v592, %v594
        %v596 = vrot.slane %v588, %v595
        %v598 = vunpack.c.l.s4 1934713408
        %v599 = vunpack.c.0.s8 %v598
        %v600 = vlaneseq
        %v601 = vshrl.u32 %v600, 7
        %v602 = vsub.s32 %v599, %v601
        %v603 = vrot.slane %v589, %v602
        %v604 = vcombine.low %v571, %v587
        %v606 = vunpack.c.l.s4 1934713408
        %v607 = vunpack.c.0.s8 %v606
        %v608 = vlaneseq
        %v609 = vshrl.u32 %v608, 7
        %v610 = vsub.s32 %v607, %v609
        %v611 = vrot.slane %v604, %v610
        %v612 = vcombine.high %v596, 0.0
        %v613 = vcombine.high %v603, 0.0
        %v614 = vcombine.high %v611, 0.0
        %616 = vrot.lane.b32.xlu0 %v552, 14
        %v617 = vpop.permute.xlu0 %616
        %620 = vrot.lane.b32.xlu0 %v535, 28
        %v621 = vpop.permute.xlu0 %620
        %624 = vrot.lane.b32.xlu0 %v553, 42
        %v625 = vpop.permute.xlu0 %624
        %628 = vrot.lane.b32.xlu0 %v544, 56
        %v629 = vpop.permute.xlu0 %628
        %632 = vrot.lane.b32.xlu0 %v554, 70
        %v633 = vpop.permute.xlu0 %632
        %636 = vrot.lane.b32.xlu0 %v551, 84
        %v637 = vpop.permute.xlu0 %636
        %640 = vrot.lane.b32.xlu0 %v555, 98
        %v641 = vpop.permute.xlu0 %640
        %644 = vrot.lane.b32.xlu0 %v596, 112
        %v645 = vpop.permute.xlu0 %644
        %648 = vrot.lane.b32.xlu0 %v612, 126
        %v649 = vpop.permute.xlu0 %648
        %652 = vrot.lane.b32.xlu0 %v603, 12
        %v653 = vpop.permute.xlu0 %652
        %656 = vrot.lane.b32.xlu0 %v613, 26
        %v657 = vpop.permute.xlu0 %656
        %660 = vrot.lane.b32.xlu0 %v611, 40
        %v661 = vpop.permute.xlu0 %660
        %664 = vrot.lane.b32.xlu0 %v614, 54
        %v665 = vpop.permute.xlu0 %664
        %v667 = vsel %vm430, %v528, %v617
        %v668 = vsel %vm432, %v667, %v621
        %v669 = vsel %vm434, %v668, %v625
        %v670 = vsel %vm436, %v669, %v629
        %v671 = vsel %vm438, %v670, %v633
        %v672 = vsel %vm440, %v671, %v637
        %v673 = vsel %vm442, %v672, %v641
        %v674 = vsel %vm444, %v673, %v645
        %v675 = vsel %vm446, %v674, %v649
        %v676 = vsel %vm448, %v649, %v653
        %v677 = vsel %vm450, %v676, %v657
        %v678 = vsel %vm452, %v677, %v661
        %v679 = vsel %vm454, %v678, %v665
        %680 = vrot.lane.b32.xlu0 %v243, 126
        %v681 = vpop.permute.xlu0 %680
        %682 = vrot.lane.b32.xlu0 %v244, 126
        %v683 = vpop.permute.xlu0 %682
        %684 = vrot.lane.b32.xlu0 %v245, 126
        %v685 = vpop.permute.xlu0 %684
        %686 = vrot.lane.b32.xlu0 %v246, 126
        %v687 = vpop.permute.xlu0 %686
        %688 = vrot.lane.b32.xlu0 %v247, 126
        %v689 = vpop.permute.xlu0 %688
        %690 = vrot.lane.b32.xlu0 %v248, 126
        %v691 = vpop.permute.xlu0 %690
        %692 = vrot.lane.b32.xlu0 %v249, 126
        %v693 = vpop.permute.xlu0 %692
        %694 = vrot.lane.b32.xlu0 %v250, 126
        %v695 = vpop.permute.xlu0 %694
        %v704 = vcombine.low %v681, %v689
        %v705 = vcombine.high %v681, %v689
        %v707 = vunpack.c.l.s4 1983009808
        %v708 = vunpack.c.0.s8 %v707
        %v709 = vlaneseq
        %v710 = vshrl.u32 %v709, 7
        %v711 = vsub.s32 %v708, %v710
        %v712 = vrot.slane %v704, %v711
        %v714 = vunpack.c.l.s4 1983009808
        %v715 = vunpack.c.0.s8 %v714
        %v716 = vlaneseq
        %v717 = vshrl.u32 %v716, 7
        %v718 = vsub.s32 %v715, %v717
        %v719 = vrot.slane %v705, %v718
        %v720 = vcombine.low %v685, %v693
        %v721 = vcombine.high %v685, %v693
        %v723 = vunpack.c.l.s4 1983009808
        %v724 = vunpack.c.0.s8 %v723
        %v725 = vlaneseq
        %v726 = vshrl.u32 %v725, 7
        %v727 = vsub.s32 %v724, %v726
        %v728 = vrot.slane %v720, %v727
        %v730 = vunpack.c.l.s4 1983009808
        %v731 = vunpack.c.0.s8 %v730
        %v732 = vlaneseq
        %v733 = vshrl.u32 %v732, 7
        %v734 = vsub.s32 %v731, %v733
        %v735 = vrot.slane %v721, %v734
        %v736 = vcombine.low %v712, %v728
        %v737 = vcombine.high %v712, %v728
        %v739 = vunpack.c.l.s4 1934713408
        %v740 = vunpack.c.0.s8 %v739
        %v741 = vlaneseq
        %v742 = vshrl.u32 %v741, 7
        %v743 = vsub.s32 %v740, %v742
        %v744 = vrot.slane %v736, %v743
        %v746 = vunpack.c.l.s4 1934713408
        %v747 = vunpack.c.0.s8 %v746
        %v748 = vlaneseq
        %v749 = vshrl.u32 %v748, 7
        %v750 = vsub.s32 %v747, %v749
        %v751 = vrot.slane %v737, %v750
        %v752 = vcombine.low %v719, %v735
        %v753 = vcombine.high %v719, %v735
        %v755 = vunpack.c.l.s4 1934713408
        %v756 = vunpack.c.0.s8 %v755
        %v757 = vlaneseq
        %v758 = vshrl.u32 %v757, 7
        %v759 = vsub.s32 %v756, %v758
        %v760 = vrot.slane %v752, %v759
        %v762 = vunpack.c.l.s4 1934713408
        %v763 = vunpack.c.0.s8 %v762
        %v764 = vlaneseq
        %v765 = vshrl.u32 %v764, 7
        %v766 = vsub.s32 %v763, %v765
        %v767 = vrot.slane %v753, %v766
        %v768 = vcombine.high %v744, 0.0
        %v769 = vcombine.high %v751, 0.0
        %v770 = vcombine.high %v760, 0.0
        %v771 = vcombine.high %v767, 0.0
        %v772 = vcombine.low %v683, %v691
        %v773 = vcombine.high %v683, %v691
        %v775 = vunpack.c.l.s4 1983009808
        %v776 = vunpack.c.0.s8 %v775
        %v777 = vlaneseq
        %v778 = vshrl.u32 %v777, 7
        %v779 = vsub.s32 %v776, %v778
        %v780 = vrot.slane %v772, %v779
        %v782 = vunpack.c.l.s4 1983009808
        %v783 = vunpack.c.0.s8 %v782
        %v784 = vlaneseq
        %v785 = vshrl.u32 %v784, 7
        %v786 = vsub.s32 %v783, %v785
        %v787 = vrot.slane %v773, %v786
        %v788 = vcombine.low %v687, %v695
        %v789 = vcombine.high %v687, %v695
        %v791 = vunpack.c.l.s4 1983009808
        %v792 = vunpack.c.0.s8 %v791
        %v793 = vlaneseq
        %v794 = vshrl.u32 %v793, 7
        %v795 = vsub.s32 %v792, %v794
        %v796 = vrot.slane %v788, %v795
        %v798 = vunpack.c.l.s4 1983009808
        %v799 = vunpack.c.0.s8 %v798
        %v800 = vlaneseq
        %v801 = vshrl.u32 %v800, 7
        %v802 = vsub.s32 %v799, %v801
        %v803 = vrot.slane %v789, %v802
        %v804 = vcombine.low %v780, %v796
        %v805 = vcombine.high %v780, %v796
        %v807 = vunpack.c.l.s4 1934713408
        %v808 = vunpack.c.0.s8 %v807
        %v809 = vlaneseq
        %v810 = vshrl.u32 %v809, 7
        %v811 = vsub.s32 %v808, %v810
        %v812 = vrot.slane %v804, %v811
        %v814 = vunpack.c.l.s4 1934713408
        %v815 = vunpack.c.0.s8 %v814
        %v816 = vlaneseq
        %v817 = vshrl.u32 %v816, 7
        %v818 = vsub.s32 %v815, %v817
        %v819 = vrot.slane %v805, %v818
        %v820 = vcombine.low %v787, %v803
        %v822 = vunpack.c.l.s4 1934713408
        %v823 = vunpack.c.0.s8 %v822
        %v824 = vlaneseq
        %v825 = vshrl.u32 %v824, 7
        %v826 = vsub.s32 %v823, %v825
        %v827 = vrot.slane %v820, %v826
        %v828 = vcombine.high %v812, 0.0
        %v829 = vcombine.high %v819, 0.0
        %v830 = vcombine.high %v827, 0.0
        %832 = vrot.lane.b32.xlu0 %v768, 14
        %v833 = vpop.permute.xlu0 %832
        %836 = vrot.lane.b32.xlu0 %v751, 28
        %v837 = vpop.permute.xlu0 %836
        %840 = vrot.lane.b32.xlu0 %v769, 42
        %v841 = vpop.permute.xlu0 %840
        %844 = vrot.lane.b32.xlu0 %v760, 56
        %v845 = vpop.permute.xlu0 %844
        %848 = vrot.lane.b32.xlu0 %v770, 70
        %v849 = vpop.permute.xlu0 %848
        %852 = vrot.lane.b32.xlu0 %v767, 84
        %v853 = vpop.permute.xlu0 %852
        %856 = vrot.lane.b32.xlu0 %v771, 98
        %v857 = vpop.permute.xlu0 %856
        %860 = vrot.lane.b32.xlu0 %v812, 112
        %v861 = vpop.permute.xlu0 %860
        %864 = vrot.lane.b32.xlu0 %v828, 126
        %v865 = vpop.permute.xlu0 %864
        %868 = vrot.lane.b32.xlu0 %v819, 12
        %v869 = vpop.permute.xlu0 %868
        %872 = vrot.lane.b32.xlu0 %v829, 26
        %v873 = vpop.permute.xlu0 %872
        %876 = vrot.lane.b32.xlu0 %v827, 40
        %v877 = vpop.permute.xlu0 %876
        %880 = vrot.lane.b32.xlu0 %v830, 54
        %v881 = vpop.permute.xlu0 %880
        %v883 = vsel %vm430, %v744, %v833
        %v884 = vsel %vm432, %v883, %v837
        %v885 = vsel %vm434, %v884, %v841
        %v886 = vsel %vm436, %v885, %v845
        %v887 = vsel %vm438, %v886, %v849
        %v888 = vsel %vm440, %v887, %v853
        %v889 = vsel %vm442, %v888, %v857
        %v890 = vsel %vm444, %v889, %v861
        %v891 = vsel %vm446, %v890, %v865
        %v892 = vsel %vm448, %v865, %v869
        %v893 = vsel %vm450, %v892, %v873
        %v894 = vsel %vm452, %v893, %v877
        %v895 = vsel %vm454, %v894, %v881
        %vm896 = vcmask 1046528
        %v897 = vrot.slane %v243, 1
        %v898 = vrot.slane %v244, 1
        %v899 = vsel %vm896, %v897, %v898
        %v900 = vrot.slane %v245, 1
        %v901 = vrot.slane %v246, 1
        %v902 = vsel %vm896, %v900, %v901
        %v903 = vrot.slane %v247, 1
        %v904 = vrot.slane %v248, 1
        %v905 = vsel %vm896, %v903, %v904
        %v906 = vrot.slane %v249, 1
        %v907 = vrot.slane %v250, 1
        %v908 = vsel %vm896, %v906, %v907
        %v917 = vcombine.low %v899, %v905
        %v918 = vcombine.high %v899, %v905
        %v920 = vunpack.c.l.s4 1983009808
        %v921 = vunpack.c.0.s8 %v920
        %v922 = vlaneseq
        %v923 = vshrl.u32 %v922, 7
        %v924 = vsub.s32 %v921, %v923
        %v925 = vrot.slane %v917, %v924
        %v927 = vunpack.c.l.s4 1983009808
        %v928 = vunpack.c.0.s8 %v927
        %v929 = vlaneseq
        %v930 = vshrl.u32 %v929, 7
        %v931 = vsub.s32 %v928, %v930
        %v932 = vrot.slane %v918, %v931
        %v933 = vcombine.low %v902, %v908
        %v934 = vcombine.high %v902, %v908
        %v936 = vunpack.c.l.s4 1983009808
        %v937 = vunpack.c.0.s8 %v936
        %v938 = vlaneseq
        %v939 = vshrl.u32 %v938, 7
        %v940 = vsub.s32 %v937, %v939
        %v941 = vrot.slane %v933, %v940
        %v943 = vunpack.c.l.s4 1983009808
        %v944 = vunpack.c.0.s8 %v943
        %v945 = vlaneseq
        %v946 = vshrl.u32 %v945, 7
        %v947 = vsub.s32 %v944, %v946
        %v948 = vrot.slane %v934, %v947
        %v949 = vcombine.low %v925, %v941
        %v950 = vcombine.high %v925, %v941
        %v952 = vunpack.c.l.s4 1934713408
        %v953 = vunpack.c.0.s8 %v952
        %v954 = vlaneseq
        %v955 = vshrl.u32 %v954, 7
        %v956 = vsub.s32 %v953, %v955
        %v957 = vrot.slane %v949, %v956
        %v959 = vunpack.c.l.s4 1934713408
        %v960 = vunpack.c.0.s8 %v959
        %v961 = vlaneseq
        %v962 = vshrl.u32 %v961, 7
        %v963 = vsub.s32 %v960, %v962
        %v964 = vrot.slane %v950, %v963
        %v965 = vcombine.low %v932, %v948
        %v966 = vcombine.high %v932, %v948
        %v968 = vunpack.c.l.s4 1934713408
        %v969 = vunpack.c.0.s8 %v968
        %v970 = vlaneseq
        %v971 = vshrl.u32 %v970, 7
        %v972 = vsub.s32 %v969, %v971
        %v973 = vrot.slane %v965, %v972
        %v975 = vunpack.c.l.s4 1934713408
        %v976 = vunpack.c.0.s8 %v975
        %v977 = vlaneseq
        %v978 = vshrl.u32 %v977, 7
        %v979 = vsub.s32 %v976, %v978
        %v980 = vrot.slane %v966, %v979
        %v981 = vcombine.high %v957, 0.0
        %v982 = vcombine.high %v964, 0.0
        %v983 = vcombine.high %v973, 0.0
        %v984 = vcombine.high %v980, 0.0
        %v985 = vcombine.low %v898, %v904
        %v986 = vcombine.high %v898, %v904
        %v988 = vunpack.c.l.s4 1983009808
        %v989 = vunpack.c.0.s8 %v988
        %v990 = vlaneseq
        %v991 = vshrl.u32 %v990, 7
        %v992 = vsub.s32 %v989, %v991
        %v993 = vrot.slane %v985, %v992
        %v995 = vunpack.c.l.s4 1983009808
        %v996 = vunpack.c.0.s8 %v995
        %v997 = vlaneseq
        %v998 = vshrl.u32 %v997, 7
        %v999 = vsub.s32 %v996, %v998
        %v1000 = vrot.slane %v986, %v999
        %v1001 = vcombine.low %v901, %v907
        %v1002 = vcombine.high %v901, %v907
        %v1004 = vunpack.c.l.s4 1983009808
        %v1005 = vunpack.c.0.s8 %v1004
        %v1006 = vlaneseq
        %v1007 = vshrl.u32 %v1006, 7
        %v1008 = vsub.s32 %v1005, %v1007
        %v1009 = vrot.slane %v1001, %v1008
        %v1011 = vunpack.c.l.s4 1983009808
        %v1012 = vunpack.c.0.s8 %v1011
        %v1013 = vlaneseq
        %v1014 = vshrl.u32 %v1013, 7
        %v1015 = vsub.s32 %v1012, %v1014
        %v1016 = vrot.slane %v1002, %v1015
        %v1017 = vcombine.low %v993, %v1009
        %v1018 = vcombine.high %v993, %v1009
        %v1020 = vunpack.c.l.s4 1934713408
        %v1021 = vunpack.c.0.s8 %v1020
        %v1022 = vlaneseq
        %v1023 = vshrl.u32 %v1022, 7
        %v1024 = vsub.s32 %v1021, %v1023
        %v1025 = vrot.slane %v1017, %v1024
        %v1027 = vunpack.c.l.s4 1934713408
        %v1028 = vunpack.c.0.s8 %v1027
        %v1029 = vlaneseq
        %v1030 = vshrl.u32 %v1029, 7
        %v1031 = vsub.s32 %v1028, %v1030
        %v1032 = vrot.slane %v1018, %v1031
        %v1033 = vcombine.low %v1000, %v1016
        %v1035 = vunpack.c.l.s4 1934713408
        %v1036 = vunpack.c.0.s8 %v1035
        %v1037 = vlaneseq
        %v1038 = vshrl.u32 %v1037, 7
        %v1039 = vsub.s32 %v1036, %v1038
        %v1040 = vrot.slane %v1033, %v1039
        %v1041 = vcombine.high %v1025, 0.0
        %v1042 = vcombine.high %v1032, 0.0
        %v1043 = vcombine.high %v1040, 0.0
        %1045 = vrot.lane.b32.xlu0 %v981, 14
        %v1046 = vpop.permute.xlu0 %1045
        %1049 = vrot.lane.b32.xlu0 %v964, 28
        %v1050 = vpop.permute.xlu0 %1049
        %1053 = vrot.lane.b32.xlu0 %v982, 42
        %v1054 = vpop.permute.xlu0 %1053
        %1057 = vrot.lane.b32.xlu0 %v973, 56
        %v1058 = vpop.permute.xlu0 %1057
        %1061 = vrot.lane.b32.xlu0 %v983, 70
        %v1062 = vpop.permute.xlu0 %1061
        %1065 = vrot.lane.b32.xlu0 %v980, 84
        %v1066 = vpop.permute.xlu0 %1065
        %1069 = vrot.lane.b32.xlu0 %v984, 98
        %v1070 = vpop.permute.xlu0 %1069
        %1073 = vrot.lane.b32.xlu0 %v1025, 112
        %v1074 = vpop.permute.xlu0 %1073
        %1077 = vrot.lane.b32.xlu0 %v1041, 126
        %v1078 = vpop.permute.xlu0 %1077
        %1081 = vrot.lane.b32.xlu0 %v1032, 12
        %v1082 = vpop.permute.xlu0 %1081
        %1085 = vrot.lane.b32.xlu0 %v1042, 26
        %v1086 = vpop.permute.xlu0 %1085
        %1089 = vrot.lane.b32.xlu0 %v1040, 40
        %v1090 = vpop.permute.xlu0 %1089
        %1093 = vrot.lane.b32.xlu0 %v1043, 54
        %v1094 = vpop.permute.xlu0 %1093
        %v1096 = vsel %vm430, %v957, %v1046
        %v1097 = vsel %vm432, %v1096, %v1050
        %v1098 = vsel %vm434, %v1097, %v1054
        %v1099 = vsel %vm436, %v1098, %v1058
        %v1100 = vsel %vm438, %v1099, %v1062
        %v1101 = vsel %vm440, %v1100, %v1066
        %v1102 = vsel %vm442, %v1101, %v1070
        %v1103 = vsel %vm444, %v1102, %v1074
        %v1104 = vsel %vm446, %v1103, %v1078
        %v1105 = vsel %vm448, %v1078, %v1082
        %v1106 = vsel %vm450, %v1105, %v1086
        %v1107 = vsel %vm452, %v1106, %v1090
        %v1108 = vsel %vm454, %v1107, %v1094
        %1109 = vrot.lane.b32.xlu0 %v899, 127
        %v1110 = vpop.permute.xlu0 %1109
        %1111 = vrot.lane.b32.xlu0 %v898, 127
        %v1112 = vpop.permute.xlu0 %1111
        %1113 = vrot.lane.b32.xlu0 %v902, 127
        %v1114 = vpop.permute.xlu0 %1113
        %1115 = vrot.lane.b32.xlu0 %v901, 127
        %v1116 = vpop.permute.xlu0 %1115
        %1117 = vrot.lane.b32.xlu0 %v905, 127
        %v1118 = vpop.permute.xlu0 %1117
        %1119 = vrot.lane.b32.xlu0 %v904, 127
        %v1120 = vpop.permute.xlu0 %1119
        %1121 = vrot.lane.b32.xlu0 %v908, 127
        %v1122 = vpop.permute.xlu0 %1121
        %1123 = vrot.lane.b32.xlu0 %v907, 127
        %v1124 = vpop.permute.xlu0 %1123
        %v1133 = vcombine.low %v1110, %v1118
        %v1134 = vcombine.high %v1110, %v1118
        %v1136 = vunpack.c.l.s4 1983009808
        %v1137 = vunpack.c.0.s8 %v1136
        %v1138 = vlaneseq
        %v1139 = vshrl.u32 %v1138, 7
        %v1140 = vsub.s32 %v1137, %v1139
        %v1141 = vrot.slane %v1133, %v1140
        %v1143 = vunpack.c.l.s4 1983009808
        %v1144 = vunpack.c.0.s8 %v1143
        %v1145 = vlaneseq
        %v1146 = vshrl.u32 %v1145, 7
        %v1147 = vsub.s32 %v1144, %v1146
        %v1148 = vrot.slane %v1134, %v1147
        %v1149 = vcombine.low %v1114, %v1122
        %v1150 = vcombine.high %v1114, %v1122
        %v1152 = vunpack.c.l.s4 1983009808
        %v1153 = vunpack.c.0.s8 %v1152
        %v1154 = vlaneseq
        %v1155 = vshrl.u32 %v1154, 7
        %v1156 = vsub.s32 %v1153, %v1155
        %v1157 = vrot.slane %v1149, %v1156
        %v1159 = vunpack.c.l.s4 1983009808
        %v1160 = vunpack.c.0.s8 %v1159
        %v1161 = vlaneseq
        %v1162 = vshrl.u32 %v1161, 7
        %v1163 = vsub.s32 %v1160, %v1162
        %v1164 = vrot.slane %v1150, %v1163
        %v1165 = vcombine.low %v1141, %v1157
        %v1166 = vcombine.high %v1141, %v1157
        %v1168 = vunpack.c.l.s4 1934713408
        %v1169 = vunpack.c.0.s8 %v1168
        %v1170 = vlaneseq
        %v1171 = vshrl.u32 %v1170, 7
        %v1172 = vsub.s32 %v1169, %v1171
        %v1173 = vrot.slane %v1165, %v1172
        %v1175 = vunpack.c.l.s4 1934713408
        %v1176 = vunpack.c.0.s8 %v1175
        %v1177 = vlaneseq
        %v1178 = vshrl.u32 %v1177, 7
        %v1179 = vsub.s32 %v1176, %v1178
        %v1180 = vrot.slane %v1166, %v1179
        %v1181 = vcombine.low %v1148, %v1164
        %v1182 = vcombine.high %v1148, %v1164
        %v1184 = vunpack.c.l.s4 1934713408
        %v1185 = vunpack.c.0.s8 %v1184
        %v1186 = vlaneseq
        %v1187 = vshrl.u32 %v1186, 7
        %v1188 = vsub.s32 %v1185, %v1187
        %v1189 = vrot.slane %v1181, %v1188
        %v1191 = vunpack.c.l.s4 1934713408
        %v1192 = vunpack.c.0.s8 %v1191
        %v1193 = vlaneseq
        %v1194 = vshrl.u32 %v1193, 7
        %v1195 = vsub.s32 %v1192, %v1194
        %v1196 = vrot.slane %v1182, %v1195
        %v1197 = vcombine.high %v1173, 0.0
        %v1198 = vcombine.high %v1180, 0.0
        %v1199 = vcombine.high %v1189, 0.0
        %v1200 = vcombine.high %v1196, 0.0
        %v1201 = vcombine.low %v1112, %v1120
        %v1202 = vcombine.high %v1112, %v1120
        %v1204 = vunpack.c.l.s4 1983009808
        %v1205 = vunpack.c.0.s8 %v1204
        %v1206 = vlaneseq
        %v1207 = vshrl.u32 %v1206, 7
        %v1208 = vsub.s32 %v1205, %v1207
        %v1209 = vrot.slane %v1201, %v1208
        %v1211 = vunpack.c.l.s4 1983009808
        %v1212 = vunpack.c.0.s8 %v1211
        %v1213 = vlaneseq
        %v1214 = vshrl.u32 %v1213, 7
        %v1215 = vsub.s32 %v1212, %v1214
        %v1216 = vrot.slane %v1202, %v1215
        %v1217 = vcombine.low %v1116, %v1124
        %v1218 = vcombine.high %v1116, %v1124
        %v1220 = vunpack.c.l.s4 1983009808
        %v1221 = vunpack.c.0.s8 %v1220
        %v1222 = vlaneseq
        %v1223 = vshrl.u32 %v1222, 7
        %v1224 = vsub.s32 %v1221, %v1223
        %v1225 = vrot.slane %v1217, %v1224
        %v1227 = vunpack.c.l.s4 1983009808
        %v1228 = vunpack.c.0.s8 %v1227
        %v1229 = vlaneseq
        %v1230 = vshrl.u32 %v1229, 7
        %v1231 = vsub.s32 %v1228, %v1230
        %v1232 = vrot.slane %v1218, %v1231
        %v1233 = vcombine.low %v1209, %v1225
        %v1234 = vcombine.high %v1209, %v1225
        %v1236 = vunpack.c.l.s4 1934713408
        %v1237 = vunpack.c.0.s8 %v1236
        %v1238 = vlaneseq
        %v1239 = vshrl.u32 %v1238, 7
        %v1240 = vsub.s32 %v1237, %v1239
        %v1241 = vrot.slane %v1233, %v1240
        %v1243 = vunpack.c.l.s4 1934713408
        %v1244 = vunpack.c.0.s8 %v1243
        %v1245 = vlaneseq
        %v1246 = vshrl.u32 %v1245, 7
        %v1247 = vsub.s32 %v1244, %v1246
        %v1248 = vrot.slane %v1234, %v1247
        %v1249 = vcombine.low %v1216, %v1232
        %v1251 = vunpack.c.l.s4 1934713408
        %v1252 = vunpack.c.0.s8 %v1251
        %v1253 = vlaneseq
        %v1254 = vshrl.u32 %v1253, 7
        %v1255 = vsub.s32 %v1252, %v1254
        %v1256 = vrot.slane %v1249, %v1255
        %v1257 = vcombine.high %v1241, 0.0
        %v1258 = vcombine.high %v1248, 0.0
        %v1259 = vcombine.high %v1256, 0.0
        %1261 = vrot.lane.b32.xlu0 %v1197, 14
        %v1262 = vpop.permute.xlu0 %1261
        %1265 = vrot.lane.b32.xlu0 %v1180, 28
        %v1266 = vpop.permute.xlu0 %1265
        %1269 = vrot.lane.b32.xlu0 %v1198, 42
        %v1270 = vpop.permute.xlu0 %1269
        %1273 = vrot.lane.b32.xlu0 %v1189, 56
        %v1274 = vpop.permute.xlu0 %1273
        %1277 = vrot.lane.b32.xlu0 %v1199, 70
        %v1278 = vpop.permute.xlu0 %1277
        %1281 = vrot.lane.b32.xlu0 %v1196, 84
        %v1282 = vpop.permute.xlu0 %1281
        %1285 = vrot.lane.b32.xlu0 %v1200, 98
        %v1286 = vpop.permute.xlu0 %1285
        %1289 = vrot.lane.b32.xlu0 %v1241, 112
        %v1290 = vpop.permute.xlu0 %1289
        %1293 = vrot.lane.b32.xlu0 %v1257, 126
        %v1294 = vpop.permute.xlu0 %1293
        %1297 = vrot.lane.b32.xlu0 %v1248, 12
        %v1298 = vpop.permute.xlu0 %1297
        %1301 = vrot.lane.b32.xlu0 %v1258, 26
        %v1302 = vpop.permute.xlu0 %1301
        %1305 = vrot.lane.b32.xlu0 %v1256, 40
        %v1306 = vpop.permute.xlu0 %1305
        %1309 = vrot.lane.b32.xlu0 %v1259, 54
        %v1310 = vpop.permute.xlu0 %1309
        %v1312 = vsel %vm430, %v1173, %v1262
        %v1313 = vsel %vm432, %v1312, %v1266
        %v1314 = vsel %vm434, %v1313, %v1270
        %v1315 = vsel %vm436, %v1314, %v1274
        %v1316 = vsel %vm438, %v1315, %v1278
        %v1317 = vsel %vm440, %v1316, %v1282
        %v1318 = vsel %vm442, %v1317, %v1286
        %v1319 = vsel %vm444, %v1318, %v1290
        %v1320 = vsel %vm446, %v1319, %v1294
        %v1321 = vsel %vm448, %v1294, %v1298
        %v1322 = vsel %vm450, %v1321, %v1302
        %v1323 = vsel %vm452, %v1322, %v1306
        %v1324 = vsel %vm454, %v1323, %v1310
        %1325 = vrot.lane.b32.xlu0 %v899, 126
        %v1326 = vpop.permute.xlu0 %1325
        %1327 = vrot.lane.b32.xlu0 %v898, 126
        %v1328 = vpop.permute.xlu0 %1327
        %1329 = vrot.lane.b32.xlu0 %v902, 126
        %v1330 = vpop.permute.xlu0 %1329
        %1331 = vrot.lane.b32.xlu0 %v901, 126
        %v1332 = vpop.permute.xlu0 %1331
        %1333 = vrot.lane.b32.xlu0 %v905, 126
        %v1334 = vpop.permute.xlu0 %1333
        %1335 = vrot.lane.b32.xlu0 %v904, 126
        %v1336 = vpop.permute.xlu0 %1335
        %1337 = vrot.lane.b32.xlu0 %v908, 126
        %v1338 = vpop.permute.xlu0 %1337
        %1339 = vrot.lane.b32.xlu0 %v907, 126
        %v1340 = vpop.permute.xlu0 %1339
        %v1349 = vcombine.low %v1326, %v1334
        %v1350 = vcombine.high %v1326, %v1334
        %v1352 = vunpack.c.l.s4 1983009808
        %v1353 = vunpack.c.0.s8 %v1352
        %v1354 = vlaneseq
        %v1355 = vshrl.u32 %v1354, 7
        %v1356 = vsub.s32 %v1353, %v1355
        %v1357 = vrot.slane %v1349, %v1356
        %v1359 = vunpack.c.l.s4 1983009808
        %v1360 = vunpack.c.0.s8 %v1359
        %v1361 = vlaneseq
        %v1362 = vshrl.u32 %v1361, 7
        %v1363 = vsub.s32 %v1360, %v1362
        %v1364 = vrot.slane %v1350, %v1363
        %v1365 = vcombine.low %v1330, %v1338
        %v1366 = vcombine.high %v1330, %v1338
        %v1368 = vunpack.c.l.s4 1983009808
        %v1369 = vunpack.c.0.s8 %v1368
        %v1370 = vlaneseq
        %v1371 = vshrl.u32 %v1370, 7
        %v1372 = vsub.s32 %v1369, %v1371
        %v1373 = vrot.slane %v1365, %v1372
        %v1375 = vunpack.c.l.s4 1983009808
        %v1376 = vunpack.c.0.s8 %v1375
        %v1377 = vlaneseq
        %v1378 = vshrl.u32 %v1377, 7
        %v1379 = vsub.s32 %v1376, %v1378
        %v1380 = vrot.slane %v1366, %v1379
        %v1381 = vcombine.low %v1357, %v1373
        %v1382 = vcombine.high %v1357, %v1373
        %v1384 = vunpack.c.l.s4 1934713408
        %v1385 = vunpack.c.0.s8 %v1384
        %v1386 = vlaneseq
        %v1387 = vshrl.u32 %v1386, 7
        %v1388 = vsub.s32 %v1385, %v1387
        %v1389 = vrot.slane %v1381, %v1388
        %v1391 = vunpack.c.l.s4 1934713408
        %v1392 = vunpack.c.0.s8 %v1391
        %v1393 = vlaneseq
        %v1394 = vshrl.u32 %v1393, 7
        %v1395 = vsub.s32 %v1392, %v1394
        %v1396 = vrot.slane %v1382, %v1395
        %v1397 = vcombine.low %v1364, %v1380
        %v1398 = vcombine.high %v1364, %v1380
        %v1400 = vunpack.c.l.s4 1934713408
        %v1401 = vunpack.c.0.s8 %v1400
        %v1402 = vlaneseq
        %v1403 = vshrl.u32 %v1402, 7
        %v1404 = vsub.s32 %v1401, %v1403
        %v1405 = vrot.slane %v1397, %v1404
        %v1407 = vunpack.c.l.s4 1934713408
        %v1408 = vunpack.c.0.s8 %v1407
        %v1409 = vlaneseq
        %v1410 = vshrl.u32 %v1409, 7
        %v1411 = vsub.s32 %v1408, %v1410
        %v1412 = vrot.slane %v1398, %v1411
        %v1413 = vcombine.high %v1389, 0.0
        %v1414 = vcombine.high %v1396, 0.0
        %v1415 = vcombine.high %v1405, 0.0
        %v1416 = vcombine.high %v1412, 0.0
        %v1417 = vcombine.low %v1328, %v1336
        %v1418 = vcombine.high %v1328, %v1336
        %v1420 = vunpack.c.l.s4 1983009808
        %v1421 = vunpack.c.0.s8 %v1420
        %v1422 = vlaneseq
        %v1423 = vshrl.u32 %v1422, 7
        %v1424 = vsub.s32 %v1421, %v1423
        %v1425 = vrot.slane %v1417, %v1424
        %v1427 = vunpack.c.l.s4 1983009808
        %v1428 = vunpack.c.0.s8 %v1427
        %v1429 = vlaneseq
        %v1430 = vshrl.u32 %v1429, 7
        %v1431 = vsub.s32 %v1428, %v1430
        %v1432 = vrot.slane %v1418, %v1431
        %v1433 = vcombine.low %v1332, %v1340
        %v1434 = vcombine.high %v1332, %v1340
        %v1436 = vunpack.c.l.s4 1983009808
        %v1437 = vunpack.c.0.s8 %v1436
        %v1438 = vlaneseq
        %v1439 = vshrl.u32 %v1438, 7
        %v1440 = vsub.s32 %v1437, %v1439
        %v1441 = vrot.slane %v1433, %v1440
        %v1443 = vunpack.c.l.s4 1983009808
        %v1444 = vunpack.c.0.s8 %v1443
        %v1445 = vlaneseq
        %v1446 = vshrl.u32 %v1445, 7
        %v1447 = vsub.s32 %v1444, %v1446
        %v1448 = vrot.slane %v1434, %v1447
        %v1449 = vcombine.low %v1425, %v1441
        %v1450 = vcombine.high %v1425, %v1441
        %v1452 = vunpack.c.l.s4 1934713408
        %v1453 = vunpack.c.0.s8 %v1452
        %v1454 = vlaneseq
        %v1455 = vshrl.u32 %v1454, 7
        %v1456 = vsub.s32 %v1453, %v1455
        %v1457 = vrot.slane %v1449, %v1456
        %v1459 = vunpack.c.l.s4 1934713408
        %v1460 = vunpack.c.0.s8 %v1459
        %v1461 = vlaneseq
        %v1462 = vshrl.u32 %v1461, 7
        %v1463 = vsub.s32 %v1460, %v1462
        %v1464 = vrot.slane %v1450, %v1463
        %v1465 = vcombine.low %v1432, %v1448
        %v1467 = vunpack.c.l.s4 1934713408
        %v1468 = vunpack.c.0.s8 %v1467
        %v1469 = vlaneseq
        %v1470 = vshrl.u32 %v1469, 7
        %v1471 = vsub.s32 %v1468, %v1470
        %v1472 = vrot.slane %v1465, %v1471
        %v1473 = vcombine.high %v1457, 0.0
        %v1474 = vcombine.high %v1464, 0.0
        %v1475 = vcombine.high %v1472, 0.0
        %1477 = vrot.lane.b32.xlu0 %v1413, 14
        %v1478 = vpop.permute.xlu0 %1477
        %1481 = vrot.lane.b32.xlu0 %v1396, 28
        %v1482 = vpop.permute.xlu0 %1481
        %1485 = vrot.lane.b32.xlu0 %v1414, 42
        %v1486 = vpop.permute.xlu0 %1485
        %1489 = vrot.lane.b32.xlu0 %v1405, 56
        %v1490 = vpop.permute.xlu0 %1489
        %1493 = vrot.lane.b32.xlu0 %v1415, 70
        %v1494 = vpop.permute.xlu0 %1493
        %1497 = vrot.lane.b32.xlu0 %v1412, 84
        %v1498 = vpop.permute.xlu0 %1497
        %1501 = vrot.lane.b32.xlu0 %v1416, 98
        %v1502 = vpop.permute.xlu0 %1501
        %1505 = vrot.lane.b32.xlu0 %v1457, 112
        %v1506 = vpop.permute.xlu0 %1505
        %1509 = vrot.lane.b32.xlu0 %v1473, 126
        %v1510 = vpop.permute.xlu0 %1509
        %1513 = vrot.lane.b32.xlu0 %v1464, 12
        %v1514 = vpop.permute.xlu0 %1513
        %1517 = vrot.lane.b32.xlu0 %v1474, 26
        %v1518 = vpop.permute.xlu0 %1517
        %1521 = vrot.lane.b32.xlu0 %v1472, 40
        %v1522 = vpop.permute.xlu0 %1521
        %1525 = vrot.lane.b32.xlu0 %v1475, 54
        %v1526 = vpop.permute.xlu0 %1525
        %v1528 = vsel %vm430, %v1389, %v1478
        %v1529 = vsel %vm432, %v1528, %v1482
        %v1530 = vsel %vm434, %v1529, %v1486
        %v1531 = vsel %vm436, %v1530, %v1490
        %v1532 = vsel %vm438, %v1531, %v1494
        %v1533 = vsel %vm440, %v1532, %v1498
        %v1534 = vsel %vm442, %v1533, %v1502
        %v1535 = vsel %vm444, %v1534, %v1506
        %v1536 = vsel %vm446, %v1535, %v1510
        %v1537 = vsel %vm448, %v1510, %v1514
        %v1538 = vsel %vm450, %v1537, %v1518
        %v1539 = vsel %vm452, %v1538, %v1522
        %v1540 = vsel %vm454, %v1539, %v1526
        %vm1541 = vcmask 1045504
        %v1542 = vrot.slane %v243, 2
        %v1543 = vrot.slane %v244, 2
        %v1544 = vsel %vm1541, %v1542, %v1543
        %v1545 = vrot.slane %v245, 2
        %v1546 = vrot.slane %v246, 2
        %v1547 = vsel %vm1541, %v1545, %v1546
        %v1548 = vrot.slane %v247, 2
        %v1549 = vrot.slane %v248, 2
        %v1550 = vsel %vm1541, %v1548, %v1549
        %v1551 = vrot.slane %v249, 2
        %v1552 = vrot.slane %v250, 2
        %v1553 = vsel %vm1541, %v1551, %v1552
        %v1562 = vcombine.low %v1544, %v1550
        %v1563 = vcombine.high %v1544, %v1550
        %v1565 = vunpack.c.l.s4 1983009808
        %v1566 = vunpack.c.0.s8 %v1565
        %v1567 = vlaneseq
        %v1568 = vshrl.u32 %v1567, 7
        %v1569 = vsub.s32 %v1566, %v1568
        %v1570 = vrot.slane %v1562, %v1569
        %v1572 = vunpack.c.l.s4 1983009808
        %v1573 = vunpack.c.0.s8 %v1572
        %v1574 = vlaneseq
        %v1575 = vshrl.u32 %v1574, 7
        %v1576 = vsub.s32 %v1573, %v1575
        %v1577 = vrot.slane %v1563, %v1576
        %v1578 = vcombine.low %v1547, %v1553
        %v1579 = vcombine.high %v1547, %v1553
        %v1581 = vunpack.c.l.s4 1983009808
        %v1582 = vunpack.c.0.s8 %v1581
        %v1583 = vlaneseq
        %v1584 = vshrl.u32 %v1583, 7
        %v1585 = vsub.s32 %v1582, %v1584
        %v1586 = vrot.slane %v1578, %v1585
        %v1588 = vunpack.c.l.s4 1983009808
        %v1589 = vunpack.c.0.s8 %v1588
        %v1590 = vlaneseq
        %v1591 = vshrl.u32 %v1590, 7
        %v1592 = vsub.s32 %v1589, %v1591
        %v1593 = vrot.slane %v1579, %v1592
        %v1594 = vcombine.low %v1570, %v1586
        %v1595 = vcombine.high %v1570, %v1586
        %v1597 = vunpack.c.l.s4 1934713408
        %v1598 = vunpack.c.0.s8 %v1597
        %v1599 = vlaneseq
        %v1600 = vshrl.u32 %v1599, 7
        %v1601 = vsub.s32 %v1598, %v1600
        %v1602 = vrot.slane %v1594, %v1601
        %v1604 = vunpack.c.l.s4 1934713408
        %v1605 = vunpack.c.0.s8 %v1604
        %v1606 = vlaneseq
        %v1607 = vshrl.u32 %v1606, 7
        %v1608 = vsub.s32 %v1605, %v1607
        %v1609 = vrot.slane %v1595, %v1608
        %v1610 = vcombine.low %v1577, %v1593
        %v1611 = vcombine.high %v1577, %v1593
        %v1613 = vunpack.c.l.s4 1934713408
        %v1614 = vunpack.c.0.s8 %v1613
        %v1615 = vlaneseq
        %v1616 = vshrl.u32 %v1615, 7
        %v1617 = vsub.s32 %v1614, %v1616
        %v1618 = vrot.slane %v1610, %v1617
        %v1620 = vunpack.c.l.s4 1934713408
        %v1621 = vunpack.c.0.s8 %v1620
        %v1622 = vlaneseq
        %v1623 = vshrl.u32 %v1622, 7
        %v1624 = vsub.s32 %v1621, %v1623
        %v1625 = vrot.slane %v1611, %v1624
        %v1626 = vcombine.high %v1602, 0.0
        %v1627 = vcombine.high %v1609, 0.0
        %v1628 = vcombine.high %v1618, 0.0
        %v1629 = vcombine.high %v1625, 0.0
        %v1630 = vcombine.low %v1543, %v1549
        %v1631 = vcombine.high %v1543, %v1549
        %v1633 = vunpack.c.l.s4 1983009808
        %v1634 = vunpack.c.0.s8 %v1633
        %v1635 = vlaneseq
        %v1636 = vshrl.u32 %v1635, 7
        %v1637 = vsub.s32 %v1634, %v1636
        %v1638 = vrot.slane %v1630, %v1637
        %v1640 = vunpack.c.l.s4 1983009808
        %v1641 = vunpack.c.0.s8 %v1640
        %v1642 = vlaneseq
        %v1643 = vshrl.u32 %v1642, 7
        %v1644 = vsub.s32 %v1641, %v1643
        %v1645 = vrot.slane %v1631, %v1644
        %v1646 = vcombine.low %v1546, %v1552
        %v1647 = vcombine.high %v1546, %v1552
        %v1649 = vunpack.c.l.s4 1983009808
        %v1650 = vunpack.c.0.s8 %v1649
        %v1651 = vlaneseq
        %v1652 = vshrl.u32 %v1651, 7
        %v1653 = vsub.s32 %v1650, %v1652
        %v1654 = vrot.slane %v1646, %v1653
        %v1656 = vunpack.c.l.s4 1983009808
        %v1657 = vunpack.c.0.s8 %v1656
        %v1658 = vlaneseq
        %v1659 = vshrl.u32 %v1658, 7
        %v1660 = vsub.s32 %v1657, %v1659
        %v1661 = vrot.slane %v1647, %v1660
        %v1662 = vcombine.low %v1638, %v1654
        %v1663 = vcombine.high %v1638, %v1654
        %v1665 = vunpack.c.l.s4 1934713408
        %v1666 = vunpack.c.0.s8 %v1665
        %v1667 = vlaneseq
        %v1668 = vshrl.u32 %v1667, 7
        %v1669 = vsub.s32 %v1666, %v1668
        %v1670 = vrot.slane %v1662, %v1669
        %v1672 = vunpack.c.l.s4 1934713408
        %v1673 = vunpack.c.0.s8 %v1672
        %v1674 = vlaneseq
        %v1675 = vshrl.u32 %v1674, 7
        %v1676 = vsub.s32 %v1673, %v1675
        %v1677 = vrot.slane %v1663, %v1676
        %v1678 = vcombine.low %v1645, %v1661
        %v1680 = vunpack.c.l.s4 1934713408
        %v1681 = vunpack.c.0.s8 %v1680
        %v1682 = vlaneseq
        %v1683 = vshrl.u32 %v1682, 7
        %v1684 = vsub.s32 %v1681, %v1683
        %v1685 = vrot.slane %v1678, %v1684
        %v1686 = vcombine.high %v1670, 0.0
        %v1687 = vcombine.high %v1677, 0.0
        %v1688 = vcombine.high %v1685, 0.0
        %1690 = vrot.lane.b32.xlu0 %v1626, 14
        %v1691 = vpop.permute.xlu0 %1690
        %1694 = vrot.lane.b32.xlu0 %v1609, 28
        %v1695 = vpop.permute.xlu0 %1694
        %1698 = vrot.lane.b32.xlu0 %v1627, 42
        %v1699 = vpop.permute.xlu0 %1698
        %1702 = vrot.lane.b32.xlu0 %v1618, 56
        %v1703 = vpop.permute.xlu0 %1702
        %1706 = vrot.lane.b32.xlu0 %v1628, 70
        %v1707 = vpop.permute.xlu0 %1706
        %1710 = vrot.lane.b32.xlu0 %v1625, 84
        %v1711 = vpop.permute.xlu0 %1710
        %1714 = vrot.lane.b32.xlu0 %v1629, 98
        %v1715 = vpop.permute.xlu0 %1714
        %1718 = vrot.lane.b32.xlu0 %v1670, 112
        %v1719 = vpop.permute.xlu0 %1718
        %1722 = vrot.lane.b32.xlu0 %v1686, 126
        %v1723 = vpop.permute.xlu0 %1722
        %1726 = vrot.lane.b32.xlu0 %v1677, 12
        %v1727 = vpop.permute.xlu0 %1726
        %1730 = vrot.lane.b32.xlu0 %v1687, 26
        %v1731 = vpop.permute.xlu0 %1730
        %1734 = vrot.lane.b32.xlu0 %v1685, 40
        %v1735 = vpop.permute.xlu0 %1734
        %1738 = vrot.lane.b32.xlu0 %v1688, 54
        %v1739 = vpop.permute.xlu0 %1738
        %v1741 = vsel %vm430, %v1602, %v1691
        %v1742 = vsel %vm432, %v1741, %v1695
        %v1743 = vsel %vm434, %v1742, %v1699
        %v1744 = vsel %vm436, %v1743, %v1703
        %v1745 = vsel %vm438, %v1744, %v1707
        %v1746 = vsel %vm440, %v1745, %v1711
        %v1747 = vsel %vm442, %v1746, %v1715
        %v1748 = vsel %vm444, %v1747, %v1719
        %v1749 = vsel %vm446, %v1748, %v1723
        %v1750 = vsel %vm448, %v1723, %v1727
        %v1751 = vsel %vm450, %v1750, %v1731
        %v1752 = vsel %vm452, %v1751, %v1735
        %v1753 = vsel %vm454, %v1752, %v1739
        %1754 = vrot.lane.b32.xlu0 %v1544, 127
        %v1755 = vpop.permute.xlu0 %1754
        %1756 = vrot.lane.b32.xlu0 %v1543, 127
        %v1757 = vpop.permute.xlu0 %1756
        %1758 = vrot.lane.b32.xlu0 %v1547, 127
        %v1759 = vpop.permute.xlu0 %1758
        %1760 = vrot.lane.b32.xlu0 %v1546, 127
        %v1761 = vpop.permute.xlu0 %1760
        %1762 = vrot.lane.b32.xlu0 %v1550, 127
        %v1763 = vpop.permute.xlu0 %1762
        %1764 = vrot.lane.b32.xlu0 %v1549, 127
        %v1765 = vpop.permute.xlu0 %1764
        %1766 = vrot.lane.b32.xlu0 %v1553, 127
        %v1767 = vpop.permute.xlu0 %1766
        %1768 = vrot.lane.b32.xlu0 %v1552, 127
        %v1769 = vpop.permute.xlu0 %1768
        %v1778 = vcombine.low %v1755, %v1763
        %v1779 = vcombine.high %v1755, %v1763
        %v1781 = vunpack.c.l.s4 1983009808
        %v1782 = vunpack.c.0.s8 %v1781
        %v1783 = vlaneseq
        %v1784 = vshrl.u32 %v1783, 7
        %v1785 = vsub.s32 %v1782, %v1784
        %v1786 = vrot.slane %v1778, %v1785
        %v1788 = vunpack.c.l.s4 1983009808
        %v1789 = vunpack.c.0.s8 %v1788
        %v1790 = vlaneseq
        %v1791 = vshrl.u32 %v1790, 7
        %v1792 = vsub.s32 %v1789, %v1791
        %v1793 = vrot.slane %v1779, %v1792
        %v1794 = vcombine.low %v1759, %v1767
        %v1795 = vcombine.high %v1759, %v1767
        %v1797 = vunpack.c.l.s4 1983009808
        %v1798 = vunpack.c.0.s8 %v1797
        %v1799 = vlaneseq
        %v1800 = vshrl.u32 %v1799, 7
        %v1801 = vsub.s32 %v1798, %v1800
        %v1802 = vrot.slane %v1794, %v1801
        %v1804 = vunpack.c.l.s4 1983009808
        %v1805 = vunpack.c.0.s8 %v1804
        %v1806 = vlaneseq
        %v1807 = vshrl.u32 %v1806, 7
        %v1808 = vsub.s32 %v1805, %v1807
        %v1809 = vrot.slane %v1795, %v1808
        %v1810 = vcombine.low %v1786, %v1802
        %v1811 = vcombine.high %v1786, %v1802
        %v1813 = vunpack.c.l.s4 1934713408
        %v1814 = vunpack.c.0.s8 %v1813
        %v1815 = vlaneseq
        %v1816 = vshrl.u32 %v1815, 7
        %v1817 = vsub.s32 %v1814, %v1816
        %v1818 = vrot.slane %v1810, %v1817
        %v1820 = vunpack.c.l.s4 1934713408
        %v1821 = vunpack.c.0.s8 %v1820
        %v1822 = vlaneseq
        %v1823 = vshrl.u32 %v1822, 7
        %v1824 = vsub.s32 %v1821, %v1823
        %v1825 = vrot.slane %v1811, %v1824
        %v1826 = vcombine.low %v1793, %v1809
        %v1827 = vcombine.high %v1793, %v1809
        %v1829 = vunpack.c.l.s4 1934713408
        %v1830 = vunpack.c.0.s8 %v1829
        %v1831 = vlaneseq
        %v1832 = vshrl.u32 %v1831, 7
        %v1833 = vsub.s32 %v1830, %v1832
        %v1834 = vrot.slane %v1826, %v1833
        %v1836 = vunpack.c.l.s4 1934713408
        %v1837 = vunpack.c.0.s8 %v1836
        %v1838 = vlaneseq
        %v1839 = vshrl.u32 %v1838, 7
        %v1840 = vsub.s32 %v1837, %v1839
        %v1841 = vrot.slane %v1827, %v1840
        %v1842 = vcombine.high %v1818, 0.0
        %v1843 = vcombine.high %v1825, 0.0
        %v1844 = vcombine.high %v1834, 0.0
        %v1845 = vcombine.high %v1841, 0.0
        %v1846 = vcombine.low %v1757, %v1765
        %v1847 = vcombine.high %v1757, %v1765
        %v1849 = vunpack.c.l.s4 1983009808
        %v1850 = vunpack.c.0.s8 %v1849
        %v1851 = vlaneseq
        %v1852 = vshrl.u32 %v1851, 7
        %v1853 = vsub.s32 %v1850, %v1852
        %v1854 = vrot.slane %v1846, %v1853
        %v1856 = vunpack.c.l.s4 1983009808
        %v1857 = vunpack.c.0.s8 %v1856
        %v1858 = vlaneseq
        %v1859 = vshrl.u32 %v1858, 7
        %v1860 = vsub.s32 %v1857, %v1859
        %v1861 = vrot.slane %v1847, %v1860
        %v1862 = vcombine.low %v1761, %v1769
        %v1863 = vcombine.high %v1761, %v1769
        %v1865 = vunpack.c.l.s4 1983009808
        %v1866 = vunpack.c.0.s8 %v1865
        %v1867 = vlaneseq
        %v1868 = vshrl.u32 %v1867, 7
        %v1869 = vsub.s32 %v1866, %v1868
        %v1870 = vrot.slane %v1862, %v1869
        %v1872 = vunpack.c.l.s4 1983009808
        %v1873 = vunpack.c.0.s8 %v1872
        %v1874 = vlaneseq
        %v1875 = vshrl.u32 %v1874, 7
        %v1876 = vsub.s32 %v1873, %v1875
        %v1877 = vrot.slane %v1863, %v1876
        %v1878 = vcombine.low %v1854, %v1870
        %v1879 = vcombine.high %v1854, %v1870
        %v1881 = vunpack.c.l.s4 1934713408
        %v1882 = vunpack.c.0.s8 %v1881
        %v1883 = vlaneseq
        %v1884 = vshrl.u32 %v1883, 7
        %v1885 = vsub.s32 %v1882, %v1884
        %v1886 = vrot.slane %v1878, %v1885
        %v1888 = vunpack.c.l.s4 1934713408
        %v1889 = vunpack.c.0.s8 %v1888
        %v1890 = vlaneseq
        %v1891 = vshrl.u32 %v1890, 7
        %v1892 = vsub.s32 %v1889, %v1891
        %v1893 = vrot.slane %v1879, %v1892
        %v1894 = vcombine.low %v1861, %v1877
        %v1896 = vunpack.c.l.s4 1934713408
        %v1897 = vunpack.c.0.s8 %v1896
        %v1898 = vlaneseq
        %v1899 = vshrl.u32 %v1898, 7
        %v1900 = vsub.s32 %v1897, %v1899
        %v1901 = vrot.slane %v1894, %v1900
        %v1902 = vcombine.high %v1886, 0.0
        %v1903 = vcombine.high %v1893, 0.0
        %v1904 = vcombine.high %v1901, 0.0
        %1906 = vrot.lane.b32.xlu0 %v1842, 14
        %v1907 = vpop.permute.xlu0 %1906
        %1910 = vrot.lane.b32.xlu0 %v1825, 28
        %v1911 = vpop.permute.xlu0 %1910
        %1914 = vrot.lane.b32.xlu0 %v1843, 42
        %v1915 = vpop.permute.xlu0 %1914
        %1918 = vrot.lane.b32.xlu0 %v1834, 56
        %v1919 = vpop.permute.xlu0 %1918
        %1922 = vrot.lane.b32.xlu0 %v1844, 70
        %v1923 = vpop.permute.xlu0 %1922
        %1926 = vrot.lane.b32.xlu0 %v1841, 84
        %v1927 = vpop.permute.xlu0 %1926
        %1930 = vrot.lane.b32.xlu0 %v1845, 98
        %v1931 = vpop.permute.xlu0 %1930
        %1934 = vrot.lane.b32.xlu0 %v1886, 112
        %v1935 = vpop.permute.xlu0 %1934
        %1938 = vrot.lane.b32.xlu0 %v1902, 126
        %v1939 = vpop.permute.xlu0 %1938
        %1942 = vrot.lane.b32.xlu0 %v1893, 12
        %v1943 = vpop.permute.xlu0 %1942
        %1946 = vrot.lane.b32.xlu0 %v1903, 26
        %v1947 = vpop.permute.xlu0 %1946
        %1950 = vrot.lane.b32.xlu0 %v1901, 40
        %v1951 = vpop.permute.xlu0 %1950
        %1954 = vrot.lane.b32.xlu0 %v1904, 54
        %v1955 = vpop.permute.xlu0 %1954
        %v1957 = vsel %vm430, %v1818, %v1907
        %v1958 = vsel %vm432, %v1957, %v1911
        %v1959 = vsel %vm434, %v1958, %v1915
        %v1960 = vsel %vm436, %v1959, %v1919
        %v1961 = vsel %vm438, %v1960, %v1923
        %v1962 = vsel %vm440, %v1961, %v1927
        %v1963 = vsel %vm442, %v1962, %v1931
        %v1964 = vsel %vm444, %v1963, %v1935
        %v1965 = vsel %vm446, %v1964, %v1939
        %v1966 = vsel %vm448, %v1939, %v1943
        %v1967 = vsel %vm450, %v1966, %v1947
        %v1968 = vsel %vm452, %v1967, %v1951
        %v1969 = vsel %vm454, %v1968, %v1955
        %1970 = vrot.lane.b32.xlu0 %v1544, 126
        %v1971 = vpop.permute.xlu0 %1970
        %1972 = vrot.lane.b32.xlu0 %v1543, 126
        %v1973 = vpop.permute.xlu0 %1972
        %1974 = vrot.lane.b32.xlu0 %v1547, 126
        %v1975 = vpop.permute.xlu0 %1974
        %1976 = vrot.lane.b32.xlu0 %v1546, 126
        %v1977 = vpop.permute.xlu0 %1976
        %1978 = vrot.lane.b32.xlu0 %v1550, 126
        %v1979 = vpop.permute.xlu0 %1978
        %1980 = vrot.lane.b32.xlu0 %v1549, 126
        %v1981 = vpop.permute.xlu0 %1980
        %1982 = vrot.lane.b32.xlu0 %v1553, 126
        %v1983 = vpop.permute.xlu0 %1982
        %1984 = vrot.lane.b32.xlu0 %v1552, 126
        %v1985 = vpop.permute.xlu0 %1984
        %v1994 = vcombine.low %v1971, %v1979
        %v1995 = vcombine.high %v1971, %v1979
        %v1997 = vunpack.c.l.s4 1983009808
        %v1998 = vunpack.c.0.s8 %v1997
        %v1999 = vlaneseq
        %v2000 = vshrl.u32 %v1999, 7
        %v2001 = vsub.s32 %v1998, %v2000
        %v2002 = vrot.slane %v1994, %v2001
        %v2004 = vunpack.c.l.s4 1983009808
        %v2005 = vunpack.c.0.s8 %v2004
        %v2006 = vlaneseq
        %v2007 = vshrl.u32 %v2006, 7
        %v2008 = vsub.s32 %v2005, %v2007
        %v2009 = vrot.slane %v1995, %v2008
        %v2010 = vcombine.low %v1975, %v1983
        %v2011 = vcombine.high %v1975, %v1983
        %v2013 = vunpack.c.l.s4 1983009808
        %v2014 = vunpack.c.0.s8 %v2013
        %v2015 = vlaneseq
        %v2016 = vshrl.u32 %v2015, 7
        %v2017 = vsub.s32 %v2014, %v2016
        %v2018 = vrot.slane %v2010, %v2017
        %v2020 = vunpack.c.l.s4 1983009808
        %v2021 = vunpack.c.0.s8 %v2020
        %v2022 = vlaneseq
        %v2023 = vshrl.u32 %v2022, 7
        %v2024 = vsub.s32 %v2021, %v2023
        %v2025 = vrot.slane %v2011, %v2024
        %v2026 = vcombine.low %v2002, %v2018
        %v2027 = vcombine.high %v2002, %v2018
        %v2029 = vunpack.c.l.s4 1934713408
        %v2030 = vunpack.c.0.s8 %v2029
        %v2031 = vlaneseq
        %v2032 = vshrl.u32 %v2031, 7
        %v2033 = vsub.s32 %v2030, %v2032
        %v2034 = vrot.slane %v2026, %v2033
        %v2036 = vunpack.c.l.s4 1934713408
        %v2037 = vunpack.c.0.s8 %v2036
        %v2038 = vlaneseq
        %v2039 = vshrl.u32 %v2038, 7
        %v2040 = vsub.s32 %v2037, %v2039
        %v2041 = vrot.slane %v2027, %v2040
        %v2042 = vcombine.low %v2009, %v2025
        %v2043 = vcombine.high %v2009, %v2025
        %v2045 = vunpack.c.l.s4 1934713408
        %v2046 = vunpack.c.0.s8 %v2045
        %v2047 = vlaneseq
        %v2048 = vshrl.u32 %v2047, 7
        %v2049 = vsub.s32 %v2046, %v2048
        %v2050 = vrot.slane %v2042, %v2049
        %v2052 = vunpack.c.l.s4 1934713408
        %v2053 = vunpack.c.0.s8 %v2052
        %v2054 = vlaneseq
        %v2055 = vshrl.u32 %v2054, 7
        %v2056 = vsub.s32 %v2053, %v2055
        %v2057 = vrot.slane %v2043, %v2056
        %v2058 = vcombine.high %v2034, 0.0
        %v2059 = vcombine.high %v2041, 0.0
        %v2060 = vcombine.high %v2050, 0.0
        %v2061 = vcombine.high %v2057, 0.0
        %v2062 = vcombine.low %v1973, %v1981
        %v2063 = vcombine.high %v1973, %v1981
        %v2065 = vunpack.c.l.s4 1983009808
        %v2066 = vunpack.c.0.s8 %v2065
        %v2067 = vlaneseq
        %v2068 = vshrl.u32 %v2067, 7
        %v2069 = vsub.s32 %v2066, %v2068
        %v2070 = vrot.slane %v2062, %v2069
        %v2072 = vunpack.c.l.s4 1983009808
        %v2073 = vunpack.c.0.s8 %v2072
        %v2074 = vlaneseq
        %v2075 = vshrl.u32 %v2074, 7
        %v2076 = vsub.s32 %v2073, %v2075
        %v2077 = vrot.slane %v2063, %v2076
        %v2078 = vcombine.low %v1977, %v1985
        %v2079 = vcombine.high %v1977, %v1985
        %v2081 = vunpack.c.l.s4 1983009808
        %v2082 = vunpack.c.0.s8 %v2081
        %v2083 = vlaneseq
        %v2084 = vshrl.u32 %v2083, 7
        %v2085 = vsub.s32 %v2082, %v2084
        %v2086 = vrot.slane %v2078, %v2085
        %v2088 = vunpack.c.l.s4 1983009808
        %v2089 = vunpack.c.0.s8 %v2088
        %v2090 = vlaneseq
        %v2091 = vshrl.u32 %v2090, 7
        %v2092 = vsub.s32 %v2089, %v2091
        %v2093 = vrot.slane %v2079, %v2092
        %v2094 = vcombine.low %v2070, %v2086
        %v2095 = vcombine.high %v2070, %v2086
        %v2097 = vunpack.c.l.s4 1934713408
        %v2098 = vunpack.c.0.s8 %v2097
        %v2099 = vlaneseq
        %v2100 = vshrl.u32 %v2099, 7
        %v2101 = vsub.s32 %v2098, %v2100
        %v2102 = vrot.slane %v2094, %v2101
        %v2104 = vunpack.c.l.s4 1934713408
        %v2105 = vunpack.c.0.s8 %v2104
        %v2106 = vlaneseq
        %v2107 = vshrl.u32 %v2106, 7
        %v2108 = vsub.s32 %v2105, %v2107
        %v2109 = vrot.slane %v2095, %v2108
        %v2110 = vcombine.low %v2077, %v2093
        %v2112 = vunpack.c.l.s4 1934713408
        %v2113 = vunpack.c.0.s8 %v2112
        %v2114 = vlaneseq
        %v2115 = vshrl.u32 %v2114, 7
        %v2116 = vsub.s32 %v2113, %v2115
        %v2117 = vrot.slane %v2110, %v2116
        %v2118 = vcombine.high %v2102, 0.0
        %v2119 = vcombine.high %v2109, 0.0
        %v2120 = vcombine.high %v2117, 0.0
        %2122 = vrot.lane.b32.xlu0 %v2058, 14
        %v2123 = vpop.permute.xlu0 %2122
        %2126 = vrot.lane.b32.xlu0 %v2041, 28
        %v2127 = vpop.permute.xlu0 %2126
        %2130 = vrot.lane.b32.xlu0 %v2059, 42
        %v2131 = vpop.permute.xlu0 %2130
        %2134 = vrot.lane.b32.xlu0 %v2050, 56
        %v2135 = vpop.permute.xlu0 %2134
        %2138 = vrot.lane.b32.xlu0 %v2060, 70
        %v2139 = vpop.permute.xlu0 %2138
        %2142 = vrot.lane.b32.xlu0 %v2057, 84
        %v2143 = vpop.permute.xlu0 %2142
        %2146 = vrot.lane.b32.xlu0 %v2061, 98
        %v2147 = vpop.permute.xlu0 %2146
        %2150 = vrot.lane.b32.xlu0 %v2102, 112
        %v2151 = vpop.permute.xlu0 %2150
        %2154 = vrot.lane.b32.xlu0 %v2118, 126
        %v2155 = vpop.permute.xlu0 %2154
        %2158 = vrot.lane.b32.xlu0 %v2109, 12
        %v2159 = vpop.permute.xlu0 %2158
        %2162 = vrot.lane.b32.xlu0 %v2119, 26
        %v2163 = vpop.permute.xlu0 %2162
        %2166 = vrot.lane.b32.xlu0 %v2117, 40
        %v2167 = vpop.permute.xlu0 %2166
        %2170 = vrot.lane.b32.xlu0 %v2120, 54
        %v2171 = vpop.permute.xlu0 %2170
        %v2173 = vsel %vm430, %v2034, %v2123
        %v2174 = vsel %vm432, %v2173, %v2127
        %v2175 = vsel %vm434, %v2174, %v2131
        %v2176 = vsel %vm436, %v2175, %v2135
        %v2177 = vsel %vm438, %v2176, %v2139
        %v2178 = vsel %vm440, %v2177, %v2143
        %v2179 = vsel %vm442, %v2178, %v2147
        %v2180 = vsel %vm444, %v2179, %v2151
        %v2181 = vsel %vm446, %v2180, %v2155
        %v2182 = vsel %vm448, %v2155, %v2159
        %v2183 = vsel %vm450, %v2182, %v2163
        %v2184 = vsel %vm452, %v2183, %v2167
        %v2185 = vsel %vm454, %v2184, %v2171
        %v2188 = vrot.slane %v675, 4
        %v2189 = vrot.slane %v679, 4
        %v2194 = vrot.slane %v1104, 4
        %v2195 = vrot.slane %v1108, 4
        %v2200 = vrot.slane %v1536, 4
        %v2201 = vrot.slane %v1540, 4
        %v2206 = vrot.slane %v1965, 4
        %v2207 = vrot.slane %v1969, 4
        %vm2210 = vcmask 1043456
        %v2211 = vsel %vm2210, %v447, %v2188
        %v2212 = vsel %vm2210, %v455, %v2189
        %v2213 = vsel %vm2210, %v891, %v2194
        %v2214 = vsel %vm2210, %v895, %v2195
        %v2215 = vsel %vm2210, %v1320, %v2200
        %v2216 = vsel %vm2210, %v1324, %v2201
        %v2217 = vsel %vm2210, %v1749, %v2206
        %v2218 = vsel %vm2210, %v1753, %v2207
        %v2219 = vld [vmem:[%s1] sm:$0xff]
        %v2220 = vld [vmem:[%s2] sm:$0xff]
        %2222 = vset.pattern.permute.xlu0 0
        %2223 = vperm.xlu0 %2222, %v2220
        %v2224 = vpop.permute.xlu0 %2223
        %vm2226 = vcmask 293888
        %v2228 = vsel %vm2226, %v2219, 0
        %v2231 = vsel %vm2210, %v2181, 0
        %v2234 = vsel %vm2210, %v2185, 0
        %2236 = vmatprep.subr.mxu0 %v2212
        %2237 = vmatpush1.msra.mxu0 %v2211
        %2238 = vmatprep.subr.mxu0 %v2214
        %2239 = vmatpush1.msra.mxu0 %v2213
        %2240 = vmatprep.subr.mxu0 %v2216
        %2241 = vmatpush1.msra.mxu0 %v2215
        %2242 = vmatprep.subr.mxu0 %v2218
        %2243 = vmatpush1.msra.mxu0 %v2217
        %2244 = vmatprep.subr.mxu0 %v2234
        %2245 = vmatpush1.msra.mxu0 %v2231
        %2246 = vmatprep.subr.mxu0 0.0
        %2247 = vmatpush1.msra.mxu0 0.0
        %2248 = vmatprep.subr.mxu0 0.0
        %2249 = vmatpush1.msra.mxu0 0.0
        %2250 = vmatprep.subr.mxu0 0.0
        %2251 = vmatpush1.msra.mxu0 0.0
        %2252 = vmatprep.subr.mxu0 0.0
        %2253 = vmatpush1.msra.mxu0 0.0
        %2254 = vmatprep.subr.mxu0 0.0
        %2255 = vmatpush1.msra.mxu0 0.0
        %2256 = vmatprep.subr.mxu0 0.0
        %2257 = vmatpush1.msra.mxu0 0.0
        %2258 = vmatprep.subr.mxu0 0.0
        %2259 = vmatpush1.msra.mxu0 0.0
        %2260 = vmatprep.subr.mxu0 0.0
        %2261 = vmatpush1.msra.mxu0 0.0
        %2262 = vmatprep.subr.mxu0 0.0
        %2263 = vmatpush1.msra.mxu0 0.0
        %2264 = vmatprep.subr.mxu0 0.0
        %2265 = vmatpush1.msra.mxu0 0.0
        %2266 = vmatprep.subr.mxu0 0.0
        %2267 = vmatpush1.msra.mxu0 0.0
        %2268 = vmatprep.subr.mxu0 0.0
        %2269 = vmatpush1.msra.mxu0 0.0
        %2270 = vmatprep.subr.mxu0 0.0
        %2271 = vmatpush1.msra.mxu0 0.0
        %2272 = vmatprep.subr.mxu0 0.0
        %2273 = vmatpush1.msra.mxu0 0.0
        %2274 = vmatprep.subr.mxu0 0.0
        %2275 = vmatpush1.msra.mxu0 0.0
        %2276 = vmatprep.subr.mxu0 0.0
        %2277 = vmatpush1.msra.mxu0 0.0
        %2278 = vmatprep.subr.mxu0 0.0
        %2279 = vmatpush1.msra.mxu0 0.0
        %2280 = vmatprep.subr.mxu0 0.0
        %2281 = vmatpush1.msra.mxu0 0.0
        %2282 = vmatprep.subr.mxu0 0.0
        %2283 = vmatpush1.msra.mxu0 0.0
        %2284 = vmatprep.subr.mxu0 0.0
        %2285 = vmatpush1.msra.mxu0 0.0
        %2286 = vmatprep.subr.mxu0 0.0
        %2287 = vmatpush1.msra.mxu0 0.0
        %2288 = vmatprep.subr.mxu0 0.0
        %2289 = vmatpush1.msra.mxu0 0.0
        %2290 = vmatprep.subr.mxu0 0.0
        %2291 = vmatpush1.msra.mxu0 0.0
        %2292 = vmatprep.subr.mxu0 0.0
        %2293 = vmatpush1.msra.mxu0 0.0
        %2294 = vmatprep.subr.mxu0 0.0
        %2295 = vmatpush1.msra.mxu0 0.0
        %2296 = vmatprep.subr.mxu0 0.0
        %2297 = vmatpush1.msra.mxu0 0.0
        %2298 = vmatprep.subr.mxu0 0.0
        %2299 = vmatpush1.msra.mxu0 0.0
        %2300 = vmatprep.mubr.f32.mxu0 0.0
        %2301 = vmatmul.mubr.f32.gmra.mrb[0].mxu0 %v2228
        %v2302 = vpop.f32.mrb[0].mxu0
        %v2303 = vadd.f32 %v2224, %v2302
        %v2304 = vpop.f32.mrb[0].mxu0
        %v2305 = vadd.f32 %v2224, %v2304
        %2306 = vdwg.mxu0
        %v2307 = vmax.f32 %v2303, 0.0
        %v2308 = vmax.f32 %v2305, 0.0
        %2310 = vrot.lane.b32.xlu0 %v2307, 114
        %v2311 = vpop.permute.xlu0 %2310
        %2313 = vrot.lane.b32.xlu0 %v2307, 100
        %v2314 = vpop.permute.xlu0 %2313
        %2316 = vrot.lane.b32.xlu0 %v2307, 86
        %v2317 = vpop.permute.xlu0 %2316
        %2319 = vrot.lane.b32.xlu0 %v2307, 72
        %v2320 = vpop.permute.xlu0 %2319
        %2322 = vrot.lane.b32.xlu0 %v2307, 58
        %v2323 = vpop.permute.xlu0 %2322
        %2325 = vrot.lane.b32.xlu0 %v2307, 44
        %v2326 = vpop.permute.xlu0 %2325
        %2328 = vrot.lane.b32.xlu0 %v2307, 30
        %v2329 = vpop.permute.xlu0 %2328
        %2331 = vrot.lane.b32.xlu0 %v2307, 16
        %v2332 = vpop.permute.xlu0 %2331
        %2335 = vrot.lane.b32.xlu0 %v2307, 2
        %v2336 = vpop.permute.xlu0 %2335
        %2337 = vrot.lane.b32.xlu0 %v2308, 2
        %v2338 = vpop.permute.xlu0 %2337
        %vm2339 = vcmask 15360
        %v2340 = vsel %vm2339, %v2336, %v2338
        %2342 = vrot.lane.b32.xlu0 %v2308, 116
        %v2343 = vpop.permute.xlu0 %2342
        %2345 = vrot.lane.b32.xlu0 %v2308, 102
        %v2346 = vpop.permute.xlu0 %2345
        %2348 = vrot.lane.b32.xlu0 %v2308, 88
        %v2349 = vpop.permute.xlu0 %2348
        %2351 = vrot.lane.b32.xlu0 %v2308, 74
        %v2352 = vpop.permute.xlu0 %2351
        %v2354 = vcombine.low %v2307, %v2314
        %v2355 = vcombine.high %v2307, %v2314
        %v2357 = vunpack.c.l.s4 1983009808
        %v2358 = vunpack.c.0.s8 %v2357
        %v2359 = vlaneseq
        %v2360 = vshrl.u32 %v2359, 7
        %v2361 = vsub.s32 %v2358, %v2360
        %v2362 = vrot.slane %v2354, %v2361
        %v2364 = vunpack.c.l.s4 1983009808
        %v2365 = vunpack.c.0.s8 %v2364
        %v2366 = vlaneseq
        %v2367 = vshrl.u32 %v2366, 7
        %v2368 = vsub.s32 %v2365, %v2367
        %v2369 = vrot.slane %v2355, %v2368
        %v2370 = vcombine.low %v2311, %v2317
        %v2371 = vcombine.high %v2311, %v2317
        %v2373 = vunpack.c.l.s4 1983009808
        %v2374 = vunpack.c.0.s8 %v2373
        %v2375 = vlaneseq
        %v2376 = vshrl.u32 %v2375, 7
        %v2377 = vsub.s32 %v2374, %v2376
        %v2378 = vrot.slane %v2370, %v2377
        %v2380 = vunpack.c.l.s4 1983009808
        %v2381 = vunpack.c.0.s8 %v2380
        %v2382 = vlaneseq
        %v2383 = vshrl.u32 %v2382, 7
        %v2384 = vsub.s32 %v2381, %v2383
        %v2385 = vrot.slane %v2371, %v2384
        %v2386 = vcombine.low %v2320, %v2326
        %v2387 = vcombine.high %v2320, %v2326
        %v2389 = vunpack.c.l.s4 1983009808
        %v2390 = vunpack.c.0.s8 %v2389
        %v2391 = vlaneseq
        %v2392 = vshrl.u32 %v2391, 7
        %v2393 = vsub.s32 %v2390, %v2392
        %v2394 = vrot.slane %v2386, %v2393
        %v2396 = vunpack.c.l.s4 1983009808
        %v2397 = vunpack.c.0.s8 %v2396
        %v2398 = vlaneseq
        %v2399 = vshrl.u32 %v2398, 7
        %v2400 = vsub.s32 %v2397, %v2399
        %v2401 = vrot.slane %v2387, %v2400
        %v2402 = vcombine.low %v2323, %v2329
        %v2403 = vcombine.high %v2323, %v2329
        %v2405 = vunpack.c.l.s4 1983009808
        %v2406 = vunpack.c.0.s8 %v2405
        %v2407 = vlaneseq
        %v2408 = vshrl.u32 %v2407, 7
        %v2409 = vsub.s32 %v2406, %v2408
        %v2410 = vrot.slane %v2402, %v2409
        %v2412 = vunpack.c.l.s4 1983009808
        %v2413 = vunpack.c.0.s8 %v2412
        %v2414 = vlaneseq
        %v2415 = vshrl.u32 %v2414, 7
        %v2416 = vsub.s32 %v2413, %v2415
        %v2417 = vrot.slane %v2403, %v2416
        %v2418 = vcombine.low %v2362, %v2378
        %v2419 = vcombine.high %v2362, %v2378
        %v2421 = vunpack.c.l.s4 1934713408
        %v2422 = vunpack.c.0.s8 %v2421
        %v2423 = vlaneseq
        %v2424 = vshrl.u32 %v2423, 7
        %v2425 = vsub.s32 %v2422, %v2424
        %v2426 = vrot.slane %v2418, %v2425
        %v2428 = vunpack.c.l.s4 1934713408
        %v2429 = vunpack.c.0.s8 %v2428
        %v2430 = vlaneseq
        %v2431 = vshrl.u32 %v2430, 7
        %v2432 = vsub.s32 %v2429, %v2431
        %v2433 = vrot.slane %v2419, %v2432
        %v2434 = vcombine.low %v2369, %v2385
        %v2435 = vcombine.high %v2369, %v2385
        %v2437 = vunpack.c.l.s4 1934713408
        %v2438 = vunpack.c.0.s8 %v2437
        %v2439 = vlaneseq
        %v2440 = vshrl.u32 %v2439, 7
        %v2441 = vsub.s32 %v2438, %v2440
        %v2442 = vrot.slane %v2434, %v2441
        %v2444 = vunpack.c.l.s4 1934713408
        %v2445 = vunpack.c.0.s8 %v2444
        %v2446 = vlaneseq
        %v2447 = vshrl.u32 %v2446, 7
        %v2448 = vsub.s32 %v2445, %v2447
        %v2449 = vrot.slane %v2435, %v2448
        %v2450 = vcombine.low %v2394, %v2410
        %v2451 = vcombine.high %v2394, %v2410
        %v2453 = vunpack.c.l.s4 1934713408
        %v2454 = vunpack.c.0.s8 %v2453
        %v2455 = vlaneseq
        %v2456 = vshrl.u32 %v2455, 7
        %v2457 = vsub.s32 %v2454, %v2456
        %v2458 = vrot.slane %v2450, %v2457
        %v2460 = vunpack.c.l.s4 1934713408
        %v2461 = vunpack.c.0.s8 %v2460
        %v2462 = vlaneseq
        %v2463 = vshrl.u32 %v2462, 7
        %v2464 = vsub.s32 %v2461, %v2463
        %v2465 = vrot.slane %v2451, %v2464
        %v2466 = vcombine.low %v2401, %v2417
        %v2467 = vcombine.high %v2401, %v2417
        %v2469 = vunpack.c.l.s4 1934713408
        %v2470 = vunpack.c.0.s8 %v2469
        %v2471 = vlaneseq
        %v2472 = vshrl.u32 %v2471, 7
        %v2473 = vsub.s32 %v2470, %v2472
        %v2474 = vrot.slane %v2466, %v2473
        %v2476 = vunpack.c.l.s4 1934713408
        %v2477 = vunpack.c.0.s8 %v2476
        %v2478 = vlaneseq
        %v2479 = vshrl.u32 %v2478, 7
        %v2480 = vsub.s32 %v2477, %v2479
        %v2481 = vrot.slane %v2467, %v2480
        %v2482 = vcombine.low %v2426, %v2458
        %v2483 = vcombine.high %v2426, %v2458
        %v2484 = vcombine.low %v2433, %v2465
        %v2485 = vcombine.high %v2433, %v2465
        %v2486 = vcombine.low %v2442, %v2474
        %v2487 = vcombine.high %v2442, %v2474
        %v2488 = vcombine.low %v2449, %v2481
        %v2489 = vcombine.high %v2449, %v2481
        %v2490 = vcombine.low %v2332, %v2343
        %v2491 = vcombine.high %v2332, %v2343
        %v2493 = vunpack.c.l.s4 1983009808
        %v2494 = vunpack.c.0.s8 %v2493
        %v2495 = vlaneseq
        %v2496 = vshrl.u32 %v2495, 7
        %v2497 = vsub.s32 %v2494, %v2496
        %v2498 = vrot.slane %v2490, %v2497
        %v2500 = vunpack.c.l.s4 1983009808
        %v2501 = vunpack.c.0.s8 %v2500
        %v2502 = vlaneseq
        %v2503 = vshrl.u32 %v2502, 7
        %v2504 = vsub.s32 %v2501, %v2503
        %v2505 = vrot.slane %v2491, %v2504
        %v2506 = vcombine.low %v2340, %v2346
        %v2507 = vcombine.high %v2340, %v2346
        %v2509 = vunpack.c.l.s4 1983009808
        %v2510 = vunpack.c.0.s8 %v2509
        %v2511 = vlaneseq
        %v2512 = vshrl.u32 %v2511, 7
        %v2513 = vsub.s32 %v2510, %v2512
        %v2514 = vrot.slane %v2506, %v2513
        %v2516 = vunpack.c.l.s4 1983009808
        %v2517 = vunpack.c.0.s8 %v2516
        %v2518 = vlaneseq
        %v2519 = vshrl.u32 %v2518, 7
        %v2520 = vsub.s32 %v2517, %v2519
        %v2521 = vrot.slane %v2507, %v2520
        %v2522 = vcombine.high %v2349, 0.0
        %v2524 = vunpack.c.l.s4 1983009808
        %v2525 = vunpack.c.0.s8 %v2524
        %v2526 = vlaneseq
        %v2527 = vshrl.u32 %v2526, 7
        %v2528 = vsub.s32 %v2525, %v2527
        %v2529 = vrot.slane %v2349, %v2528
        %v2531 = vunpack.c.l.s4 1983009808
        %v2532 = vunpack.c.0.s8 %v2531
        %v2533 = vlaneseq
        %v2534 = vshrl.u32 %v2533, 7
        %v2535 = vsub.s32 %v2532, %v2534
        %v2536 = vrot.slane %v2522, %v2535
        %v2537 = vcombine.high %v2352, 0.0
        %v2539 = vunpack.c.l.s4 1983009808
        %v2540 = vunpack.c.0.s8 %v2539
        %v2541 = vlaneseq
        %v2542 = vshrl.u32 %v2541, 7
        %v2543 = vsub.s32 %v2540, %v2542
        %v2544 = vrot.slane %v2352, %v2543
        %v2546 = vunpack.c.l.s4 1983009808
        %v2547 = vunpack.c.0.s8 %v2546
        %v2548 = vlaneseq
        %v2549 = vshrl.u32 %v2548, 7
        %v2550 = vsub.s32 %v2547, %v2549
        %v2551 = vrot.slane %v2537, %v2550
        %v2552 = vcombine.low %v2498, %v2514
        %v2553 = vcombine.high %v2498, %v2514
        %v2555 = vunpack.c.l.s4 1934713408
        %v2556 = vunpack.c.0.s8 %v2555
        %v2557 = vlaneseq
        %v2558 = vshrl.u32 %v2557, 7
        %v2559 = vsub.s32 %v2556, %v2558
        %v2560 = vrot.slane %v2552, %v2559
        %v2562 = vunpack.c.l.s4 1934713408
        %v2563 = vunpack.c.0.s8 %v2562
        %v2564 = vlaneseq
        %v2565 = vshrl.u32 %v2564, 7
        %v2566 = vsub.s32 %v2563, %v2565
        %v2567 = vrot.slane %v2553, %v2566
        %v2568 = vcombine.low %v2505, %v2521
        %v2569 = vcombine.high %v2505, %v2521
        %v2571 = vunpack.c.l.s4 1934713408
        %v2572 = vunpack.c.0.s8 %v2571
        %v2573 = vlaneseq
        %v2574 = vshrl.u32 %v2573, 7
        %v2575 = vsub.s32 %v2572, %v2574
        %v2576 = vrot.slane %v2568, %v2575
        %v2578 = vunpack.c.l.s4 1934713408
        %v2579 = vunpack.c.0.s8 %v2578
        %v2580 = vlaneseq
        %v2581 = vshrl.u32 %v2580, 7
        %v2582 = vsub.s32 %v2579, %v2581
        %v2583 = vrot.slane %v2569, %v2582
        %v2584 = vcombine.low %v2529, %v2544
        %v2585 = vcombine.high %v2529, %v2544
        %v2587 = vunpack.c.l.s4 1934713408
        %v2588 = vunpack.c.0.s8 %v2587
        %v2589 = vlaneseq
        %v2590 = vshrl.u32 %v2589, 7
        %v2591 = vsub.s32 %v2588, %v2590
        %v2592 = vrot.slane %v2584, %v2591
        %v2594 = vunpack.c.l.s4 1934713408
        %v2595 = vunpack.c.0.s8 %v2594
        %v2596 = vlaneseq
        %v2597 = vshrl.u32 %v2596, 7
        %v2598 = vsub.s32 %v2595, %v2597
        %v2599 = vrot.slane %v2585, %v2598
        %v2600 = vcombine.low %v2536, %v2551
        %v2601 = vcombine.high %v2536, %v2551
        %v2603 = vunpack.c.l.s4 1934713408
        %v2604 = vunpack.c.0.s8 %v2603
        %v2605 = vlaneseq
        %v2606 = vshrl.u32 %v2605, 7
        %v2607 = vsub.s32 %v2604, %v2606
        %v2608 = vrot.slane %v2600, %v2607
        %v2610 = vunpack.c.l.s4 1934713408
        %v2611 = vunpack.c.0.s8 %v2610
        %v2612 = vlaneseq
        %v2613 = vshrl.u32 %v2612, 7
        %v2614 = vsub.s32 %v2611, %v2613
        %v2615 = vrot.slane %v2601, %v2614
        %v2616 = vcombine.low %v2560, %v2592
        %v2617 = vcombine.high %v2560, %v2592
        %v2618 = vcombine.low %v2567, %v2599
        %v2619 = vcombine.high %v2567, %v2599
        %v2620 = vcombine.low %v2576, %v2608
        %v2621 = vcombine.high %v2576, %v2608
        %v2622 = vcombine.low %v2583, %v2615
        %v2623 = vcombine.high %v2583, %v2615
        %v2624 = vcombine.low %v2482, %v2484
        %v2625 = vcombine.high %v2482, %v2484
        %v2627 = vunpack.c.l.s4 1983009808
        %v2628 = vunpack.c.0.s8 %v2627
        %v2629 = vlaneseq
        %v2630 = vshrl.u32 %v2629, 7
        %v2631 = vsub.s32 %v2628, %v2630
        %v2632 = vrot.slane %v2624, %v2631
        %v2634 = vunpack.c.l.s4 1983009808
        %v2635 = vunpack.c.0.s8 %v2634
        %v2636 = vlaneseq
        %v2637 = vshrl.u32 %v2636, 7
        %v2638 = vsub.s32 %v2635, %v2637
        %v2639 = vrot.slane %v2625, %v2638
        %v2640 = vcombine.low %v2483, %v2485
        %v2641 = vcombine.high %v2483, %v2485
        %v2643 = vunpack.c.l.s4 1983009808
        %v2644 = vunpack.c.0.s8 %v2643
        %v2645 = vlaneseq
        %v2646 = vshrl.u32 %v2645, 7
        %v2647 = vsub.s32 %v2644, %v2646
        %v2648 = vrot.slane %v2640, %v2647
        %v2650 = vunpack.c.l.s4 1983009808
        %v2651 = vunpack.c.0.s8 %v2650
        %v2652 = vlaneseq
        %v2653 = vshrl.u32 %v2652, 7
        %v2654 = vsub.s32 %v2651, %v2653
        %v2655 = vrot.slane %v2641, %v2654
        %v2656 = vcombine.low %v2486, %v2488
        %v2657 = vcombine.high %v2486, %v2488
        %v2659 = vunpack.c.l.s4 1983009808
        %v2660 = vunpack.c.0.s8 %v2659
        %v2661 = vlaneseq
        %v2662 = vshrl.u32 %v2661, 7
        %v2663 = vsub.s32 %v2660, %v2662
        %v2664 = vrot.slane %v2656, %v2663
        %v2666 = vunpack.c.l.s4 1983009808
        %v2667 = vunpack.c.0.s8 %v2666
        %v2668 = vlaneseq
        %v2669 = vshrl.u32 %v2668, 7
        %v2670 = vsub.s32 %v2667, %v2669
        %v2671 = vrot.slane %v2657, %v2670
        %v2672 = vcombine.low %v2487, %v2489
        %v2673 = vcombine.high %v2487, %v2489
        %v2675 = vunpack.c.l.s4 1983009808
        %v2676 = vunpack.c.0.s8 %v2675
        %v2677 = vlaneseq
        %v2678 = vshrl.u32 %v2677, 7
        %v2679 = vsub.s32 %v2676, %v2678
        %v2680 = vrot.slane %v2672, %v2679
        %v2682 = vunpack.c.l.s4 1983009808
        %v2683 = vunpack.c.0.s8 %v2682
        %v2684 = vlaneseq
        %v2685 = vshrl.u32 %v2684, 7
        %v2686 = vsub.s32 %v2683, %v2685
        %v2687 = vrot.slane %v2673, %v2686
        %v2688 = vcombine.low %v2632, %v2648
        %v2689 = vcombine.high %v2632, %v2648
        %v2691 = vunpack.c.l.s4 1934713408
        %v2692 = vunpack.c.0.s8 %v2691
        %v2693 = vlaneseq
        %v2694 = vshrl.u32 %v2693, 7
        %v2695 = vsub.s32 %v2692, %v2694
        %v2696 = vrot.slane %v2688, %v2695
        %v2698 = vunpack.c.l.s4 1934713408
        %v2699 = vunpack.c.0.s8 %v2698
        %v2700 = vlaneseq
        %v2701 = vshrl.u32 %v2700, 7
        %v2702 = vsub.s32 %v2699, %v2701
        %v2703 = vrot.slane %v2689, %v2702
        %v2704 = vcombine.low %v2639, %v2655
        %v2705 = vcombine.high %v2639, %v2655
        %v2707 = vunpack.c.l.s4 1934713408
        %v2708 = vunpack.c.0.s8 %v2707
        %v2709 = vlaneseq
        %v2710 = vshrl.u32 %v2709, 7
        %v2711 = vsub.s32 %v2708, %v2710
        %v2712 = vrot.slane %v2704, %v2711
        %v2714 = vunpack.c.l.s4 1934713408
        %v2715 = vunpack.c.0.s8 %v2714
        %v2716 = vlaneseq
        %v2717 = vshrl.u32 %v2716, 7
        %v2718 = vsub.s32 %v2715, %v2717
        %v2719 = vrot.slane %v2705, %v2718
        %v2720 = vcombine.low %v2664, %v2680
        %v2721 = vcombine.high %v2664, %v2680
        %v2723 = vunpack.c.l.s4 1934713408
        %v2724 = vunpack.c.0.s8 %v2723
        %v2725 = vlaneseq
        %v2726 = vshrl.u32 %v2725, 7
        %v2727 = vsub.s32 %v2724, %v2726
        %v2728 = vrot.slane %v2720, %v2727
        %v2730 = vunpack.c.l.s4 1934713408
        %v2731 = vunpack.c.0.s8 %v2730
        %v2732 = vlaneseq
        %v2733 = vshrl.u32 %v2732, 7
        %v2734 = vsub.s32 %v2731, %v2733
        %v2735 = vrot.slane %v2721, %v2734
        %v2736 = vcombine.low %v2671, %v2687
        %v2737 = vcombine.high %v2671, %v2687
        %v2739 = vunpack.c.l.s4 1934713408
        %v2740 = vunpack.c.0.s8 %v2739
        %v2741 = vlaneseq
        %v2742 = vshrl.u32 %v2741, 7
        %v2743 = vsub.s32 %v2740, %v2742
        %v2744 = vrot.slane %v2736, %v2743
        %v2746 = vunpack.c.l.s4 1934713408
        %v2747 = vunpack.c.0.s8 %v2746
        %v2748 = vlaneseq
        %v2749 = vshrl.u32 %v2748, 7
        %v2750 = vsub.s32 %v2747, %v2749
        %v2751 = vrot.slane %v2737, %v2750
        %v2752 = vcombine.low %v2696, %v2728
        %v2753 = vcombine.high %v2696, %v2728
        %v2754 = vcombine.low %v2703, %v2735
        %v2755 = vcombine.high %v2703, %v2735
        %v2756 = vcombine.low %v2712, %v2744
        %v2757 = vcombine.high %v2712, %v2744
        %v2758 = vcombine.low %v2719, %v2751
        %v2759 = vcombine.high %v2719, %v2751
        %v2760 = vcombine.low %v2616, %v2618
        %v2762 = vunpack.c.l.s4 1983009808
        %v2763 = vunpack.c.0.s8 %v2762
        %v2764 = vlaneseq
        %v2765 = vshrl.u32 %v2764, 7
        %v2766 = vsub.s32 %v2763, %v2765
        %v2767 = vrot.slane %v2760, %v2766
        %v2768 = vcombine.low %v2617, %v2619
        %v2770 = vunpack.c.l.s4 1983009808
        %v2771 = vunpack.c.0.s8 %v2770
        %v2772 = vlaneseq
        %v2773 = vshrl.u32 %v2772, 7
        %v2774 = vsub.s32 %v2771, %v2773
        %v2775 = vrot.slane %v2768, %v2774
        %v2776 = vcombine.low %v2620, %v2622
        %v2778 = vunpack.c.l.s4 1983009808
        %v2779 = vunpack.c.0.s8 %v2778
        %v2780 = vlaneseq
        %v2781 = vshrl.u32 %v2780, 7
        %v2782 = vsub.s32 %v2779, %v2781
        %v2783 = vrot.slane %v2776, %v2782
        %v2784 = vcombine.low %v2621, %v2623
        %v2786 = vunpack.c.l.s4 1983009808
        %v2787 = vunpack.c.0.s8 %v2786
        %v2788 = vlaneseq
        %v2789 = vshrl.u32 %v2788, 7
        %v2790 = vsub.s32 %v2787, %v2789
        %v2791 = vrot.slane %v2784, %v2790
        %v2792 = vcombine.low %v2767, %v2775
        %v2793 = vcombine.high %v2767, %v2775
        %v2795 = vunpack.c.l.s4 1934713408
        %v2796 = vunpack.c.0.s8 %v2795
        %v2797 = vlaneseq
        %v2798 = vshrl.u32 %v2797, 7
        %v2799 = vsub.s32 %v2796, %v2798
        %v2800 = vrot.slane %v2792, %v2799
        %v2802 = vunpack.c.l.s4 1934713408
        %v2803 = vunpack.c.0.s8 %v2802
        %v2804 = vlaneseq
        %v2805 = vshrl.u32 %v2804, 7
        %v2806 = vsub.s32 %v2803, %v2805
        %v2807 = vrot.slane %v2793, %v2806
        %v2808 = vcombine.low %v2783, %v2791
        %v2809 = vcombine.high %v2783, %v2791
        %v2811 = vunpack.c.l.s4 1934713408
        %v2812 = vunpack.c.0.s8 %v2811
        %v2813 = vlaneseq
        %v2814 = vshrl.u32 %v2813, 7
        %v2815 = vsub.s32 %v2812, %v2814
        %v2816 = vrot.slane %v2808, %v2815
        %v2818 = vunpack.c.l.s4 1934713408
        %v2819 = vunpack.c.0.s8 %v2818
        %v2820 = vlaneseq
        %v2821 = vshrl.u32 %v2820, 7
        %v2822 = vsub.s32 %v2819, %v2821
        %v2823 = vrot.slane %v2809, %v2822
        %v2824 = vcombine.low %v2800, %v2816
        %v2825 = vcombine.high %v2800, %v2816
        %v2826 = vcombine.low %v2807, %v2823
        %v2827 = vcombine.high %v2807, %v2823
        %2829 = vrot.lane.b32.xlu0 %v2753, 12
        %v2830 = vpop.permute.xlu0 %2829
        %2833 = vrot.lane.b32.xlu0 %v2754, 24
        %v2834 = vpop.permute.xlu0 %2833
        %2837 = vrot.lane.b32.xlu0 %v2755, 36
        %v2838 = vpop.permute.xlu0 %2837
        %2841 = vrot.lane.b32.xlu0 %v2756, 48
        %v2842 = vpop.permute.xlu0 %2841
        %2845 = vrot.lane.b32.xlu0 %v2757, 60
        %v2846 = vpop.permute.xlu0 %2845
        %2849 = vrot.lane.b32.xlu0 %v2758, 72
        %v2850 = vpop.permute.xlu0 %2849
        %2853 = vrot.lane.b32.xlu0 %v2759, 84
        %v2854 = vpop.permute.xlu0 %2853
        %2857 = vrot.lane.b32.xlu0 %v2824, 96
        %v2858 = vpop.permute.xlu0 %2857
        %2861 = vrot.lane.b32.xlu0 %v2825, 108
        %v2862 = vpop.permute.xlu0 %2861
        %2865 = vrot.lane.b32.xlu0 %v2826, 120
        %v2866 = vpop.permute.xlu0 %2865
        %2869 = vrot.lane.b32.xlu0 %v2827, 4
        %v2870 = vpop.permute.xlu0 %2869
        %v2872 = vsel %vm448, %v2752, %v2830
        %vm2873 = vcmask 195584
        %v2874 = vsel %vm2873, %v2872, %v2834
        %v2875 = vsel %vm2226, %v2874, %v2838
        %vm2876 = vcmask 392192
        %v2877 = vsel %vm2876, %v2875, %v2842
        %vm2878 = vcmask 490496
        %v2879 = vsel %vm2878, %v2877, %v2846
        %vm2880 = vcmask 588800
        %v2881 = vsel %vm2880, %v2879, %v2850
        %v2882 = vsel %vm440, %v2881, %v2854
        %vm2883 = vcmask 785408
        %v2884 = vsel %vm2883, %v2882, %v2858
        %vm2885 = vcmask 883712
        %v2886 = vsel %vm2885, %v2884, %v2862
        %vm2887 = vcmask 982016
        %v2888 = vsel %vm2887, %v2886, %v2866
        %vm2889 = vcmask 31744
        %v2890 = vsel %vm2889, %v2866, %v2870
        %2907 = vrot.lane.b32.xlu0 %v2482, 127
        %v2908 = vpop.permute.xlu0 %2907
        %2909 = vrot.lane.b32.xlu0 %v2616, 127
        %v2910 = vpop.permute.xlu0 %2909
        %2911 = vrot.lane.b32.xlu0 %v2483, 127
        %v2912 = vpop.permute.xlu0 %2911
        %2913 = vrot.lane.b32.xlu0 %v2617, 127
        %v2914 = vpop.permute.xlu0 %2913
        %2915 = vrot.lane.b32.xlu0 %v2484, 127
        %v2916 = vpop.permute.xlu0 %2915
        %2917 = vrot.lane.b32.xlu0 %v2618, 127
        %v2918 = vpop.permute.xlu0 %2917
        %2919 = vrot.lane.b32.xlu0 %v2485, 127
        %v2920 = vpop.permute.xlu0 %2919
        %2921 = vrot.lane.b32.xlu0 %v2619, 127
        %v2922 = vpop.permute.xlu0 %2921
        %2923 = vrot.lane.b32.xlu0 %v2486, 127
        %v2924 = vpop.permute.xlu0 %2923
        %2925 = vrot.lane.b32.xlu0 %v2620, 127
        %v2926 = vpop.permute.xlu0 %2925
        %2927 = vrot.lane.b32.xlu0 %v2487, 127
        %v2928 = vpop.permute.xlu0 %2927
        %2929 = vrot.lane.b32.xlu0 %v2621, 127
        %v2930 = vpop.permute.xlu0 %2929
        %2931 = vrot.lane.b32.xlu0 %v2488, 127
        %v2932 = vpop.permute.xlu0 %2931
        %2933 = vrot.lane.b32.xlu0 %v2622, 127
        %v2934 = vpop.permute.xlu0 %2933
        %2935 = vrot.lane.b32.xlu0 %v2489, 127
        %v2936 = vpop.permute.xlu0 %2935
        %2937 = vrot.lane.b32.xlu0 %v2623, 127
        %v2938 = vpop.permute.xlu0 %2937
        %v2955 = vcombine.low %v2908, %v2916
        %v2956 = vcombine.high %v2908, %v2916
        %v2958 = vunpack.c.l.s4 1983009808
        %v2959 = vunpack.c.0.s8 %v2958
        %v2960 = vlaneseq
        %v2961 = vshrl.u32 %v2960, 7
        %v2962 = vsub.s32 %v2959, %v2961
        %v2963 = vrot.slane %v2955, %v2962
        %v2965 = vunpack.c.l.s4 1983009808
        %v2966 = vunpack.c.0.s8 %v2965
        %v2967 = vlaneseq
        %v2968 = vshrl.u32 %v2967, 7
        %v2969 = vsub.s32 %v2966, %v2968
        %v2970 = vrot.slane %v2956, %v2969
        %v2971 = vcombine.low %v2912, %v2920
        %v2972 = vcombine.high %v2912, %v2920
        %v2974 = vunpack.c.l.s4 1983009808
        %v2975 = vunpack.c.0.s8 %v2974
        %v2976 = vlaneseq
        %v2977 = vshrl.u32 %v2976, 7
        %v2978 = vsub.s32 %v2975, %v2977
        %v2979 = vrot.slane %v2971, %v2978
        %v2981 = vunpack.c.l.s4 1983009808
        %v2982 = vunpack.c.0.s8 %v2981
        %v2983 = vlaneseq
        %v2984 = vshrl.u32 %v2983, 7
        %v2985 = vsub.s32 %v2982, %v2984
        %v2986 = vrot.slane %v2972, %v2985
        %v2987 = vcombine.low %v2924, %v2932
        %v2988 = vcombine.high %v2924, %v2932
        %v2990 = vunpack.c.l.s4 1983009808
        %v2991 = vunpack.c.0.s8 %v2990
        %v2992 = vlaneseq
        %v2993 = vshrl.u32 %v2992, 7
        %v2994 = vsub.s32 %v2991, %v2993
        %v2995 = vrot.slane %v2987, %v2994
        %v2997 = vunpack.c.l.s4 1983009808
        %v2998 = vunpack.c.0.s8 %v2997
        %v2999 = vlaneseq
        %v3000 = vshrl.u32 %v2999, 7
        %v3001 = vsub.s32 %v2998, %v3000
        %v3002 = vrot.slane %v2988, %v3001
        %v3003 = vcombine.low %v2928, %v2936
        %v3004 = vcombine.high %v2928, %v2936
        %v3006 = vunpack.c.l.s4 1983009808
        %v3007 = vunpack.c.0.s8 %v3006
        %v3008 = vlaneseq
        %v3009 = vshrl.u32 %v3008, 7
        %v3010 = vsub.s32 %v3007, %v3009
        %v3011 = vrot.slane %v3003, %v3010
        %v3013 = vunpack.c.l.s4 1983009808
        %v3014 = vunpack.c.0.s8 %v3013
        %v3015 = vlaneseq
        %v3016 = vshrl.u32 %v3015, 7
        %v3017 = vsub.s32 %v3014, %v3016
        %v3018 = vrot.slane %v3004, %v3017
        %v3019 = vcombine.low %v2963, %v2979
        %v3020 = vcombine.high %v2963, %v2979
        %v3022 = vunpack.c.l.s4 1934713408
        %v3023 = vunpack.c.0.s8 %v3022
        %v3024 = vlaneseq
        %v3025 = vshrl.u32 %v3024, 7
        %v3026 = vsub.s32 %v3023, %v3025
        %v3027 = vrot.slane %v3019, %v3026
        %v3029 = vunpack.c.l.s4 1934713408
        %v3030 = vunpack.c.0.s8 %v3029
        %v3031 = vlaneseq
        %v3032 = vshrl.u32 %v3031, 7
        %v3033 = vsub.s32 %v3030, %v3032
        %v3034 = vrot.slane %v3020, %v3033
        %v3035 = vcombine.low %v2970, %v2986
        %v3036 = vcombine.high %v2970, %v2986
        %v3038 = vunpack.c.l.s4 1934713408
        %v3039 = vunpack.c.0.s8 %v3038
        %v3040 = vlaneseq
        %v3041 = vshrl.u32 %v3040, 7
        %v3042 = vsub.s32 %v3039, %v3041
        %v3043 = vrot.slane %v3035, %v3042
        %v3045 = vunpack.c.l.s4 1934713408
        %v3046 = vunpack.c.0.s8 %v3045
        %v3047 = vlaneseq
        %v3048 = vshrl.u32 %v3047, 7
        %v3049 = vsub.s32 %v3046, %v3048
        %v3050 = vrot.slane %v3036, %v3049
        %v3051 = vcombine.low %v2995, %v3011
        %v3052 = vcombine.high %v2995, %v3011
        %v3054 = vunpack.c.l.s4 1934713408
        %v3055 = vunpack.c.0.s8 %v3054
        %v3056 = vlaneseq
        %v3057 = vshrl.u32 %v3056, 7
        %v3058 = vsub.s32 %v3055, %v3057
        %v3059 = vrot.slane %v3051, %v3058
        %v3061 = vunpack.c.l.s4 1934713408
        %v3062 = vunpack.c.0.s8 %v3061
        %v3063 = vlaneseq
        %v3064 = vshrl.u32 %v3063, 7
        %v3065 = vsub.s32 %v3062, %v3064
        %v3066 = vrot.slane %v3052, %v3065
        %v3067 = vcombine.low %v3002, %v3018
        %v3068 = vcombine.high %v3002, %v3018
        %v3070 = vunpack.c.l.s4 1934713408
        %v3071 = vunpack.c.0.s8 %v3070
        %v3072 = vlaneseq
        %v3073 = vshrl.u32 %v3072, 7
        %v3074 = vsub.s32 %v3071, %v3073
        %v3075 = vrot.slane %v3067, %v3074
        %v3077 = vunpack.c.l.s4 1934713408
        %v3078 = vunpack.c.0.s8 %v3077
        %v3079 = vlaneseq
        %v3080 = vshrl.u32 %v3079, 7
        %v3081 = vsub.s32 %v3078, %v3080
        %v3082 = vrot.slane %v3068, %v3081
        %v3083 = vcombine.low %v3027, %v3059
        %v3084 = vcombine.high %v3027, %v3059
        %v3085 = vcombine.low %v3034, %v3066
        %v3086 = vcombine.high %v3034, %v3066
        %v3087 = vcombine.low %v3043, %v3075
        %v3088 = vcombine.high %v3043, %v3075
        %v3089 = vcombine.low %v3050, %v3082
        %v3090 = vcombine.high %v3050, %v3082
        %v3091 = vcombine.low %v2910, %v2918
        %v3093 = vunpack.c.l.s4 1983009808
        %v3094 = vunpack.c.0.s8 %v3093
        %v3095 = vlaneseq
        %v3096 = vshrl.u32 %v3095, 7
        %v3097 = vsub.s32 %v3094, %v3096
        %v3098 = vrot.slane %v3091, %v3097
        %v3099 = vcombine.low %v2914, %v2922
        %v3101 = vunpack.c.l.s4 1983009808
        %v3102 = vunpack.c.0.s8 %v3101
        %v3103 = vlaneseq
        %v3104 = vshrl.u32 %v3103, 7
        %v3105 = vsub.s32 %v3102, %v3104
        %v3106 = vrot.slane %v3099, %v3105
        %v3107 = vcombine.low %v2926, %v2934
        %v3109 = vunpack.c.l.s4 1983009808
        %v3110 = vunpack.c.0.s8 %v3109
        %v3111 = vlaneseq
        %v3112 = vshrl.u32 %v3111, 7
        %v3113 = vsub.s32 %v3110, %v3112
        %v3114 = vrot.slane %v3107, %v3113
        %v3115 = vcombine.low %v2930, %v2938
        %v3117 = vunpack.c.l.s4 1983009808
        %v3118 = vunpack.c.0.s8 %v3117
        %v3119 = vlaneseq
        %v3120 = vshrl.u32 %v3119, 7
        %v3121 = vsub.s32 %v3118, %v3120
        %v3122 = vrot.slane %v3115, %v3121
        %v3123 = vcombine.low %v3098, %v3106
        %v3124 = vcombine.high %v3098, %v3106
        %v3126 = vunpack.c.l.s4 1934713408
        %v3127 = vunpack.c.0.s8 %v3126
        %v3128 = vlaneseq
        %v3129 = vshrl.u32 %v3128, 7
        %v3130 = vsub.s32 %v3127, %v3129
        %v3131 = vrot.slane %v3123, %v3130
        %v3133 = vunpack.c.l.s4 1934713408
        %v3134 = vunpack.c.0.s8 %v3133
        %v3135 = vlaneseq
        %v3136 = vshrl.u32 %v3135, 7
        %v3137 = vsub.s32 %v3134, %v3136
        %v3138 = vrot.slane %v3124, %v3137
        %v3139 = vcombine.low %v3114, %v3122
        %v3140 = vcombine.high %v3114, %v3122
        %v3142 = vunpack.c.l.s4 1934713408
        %v3143 = vunpack.c.0.s8 %v3142
        %v3144 = vlaneseq
        %v3145 = vshrl.u32 %v3144, 7
        %v3146 = vsub.s32 %v3143, %v3145
        %v3147 = vrot.slane %v3139, %v3146
        %v3149 = vunpack.c.l.s4 1934713408
        %v3150 = vunpack.c.0.s8 %v3149
        %v3151 = vlaneseq
        %v3152 = vshrl.u32 %v3151, 7
        %v3153 = vsub.s32 %v3150, %v3152
        %v3154 = vrot.slane %v3140, %v3153
        %v3155 = vcombine.low %v3131, %v3147
        %v3156 = vcombine.high %v3131, %v3147
        %v3157 = vcombine.low %v3138, %v3154
        %v3158 = vcombine.high %v3138, %v3154
        %3160 = vrot.lane.b32.xlu0 %v3084, 12
        %v3161 = vpop.permute.xlu0 %3160
        %3164 = vrot.lane.b32.xlu0 %v3085, 24
        %v3165 = vpop.permute.xlu0 %3164
        %3168 = vrot.lane.b32.xlu0 %v3086, 36
        %v3169 = vpop.permute.xlu0 %3168
        %3172 = vrot.lane.b32.xlu0 %v3087, 48
        %v3173 = vpop.permute.xlu0 %3172
        %3176 = vrot.lane.b32.xlu0 %v3088, 60
        %v3177 = vpop.permute.xlu0 %3176
        %3180 = vrot.lane.b32.xlu0 %v3089, 72
        %v3181 = vpop.permute.xlu0 %3180
        %3184 = vrot.lane.b32.xlu0 %v3090, 84
        %v3185 = vpop.permute.xlu0 %3184
        %3188 = vrot.lane.b32.xlu0 %v3155, 96
        %v3189 = vpop.permute.xlu0 %3188
        %3192 = vrot.lane.b32.xlu0 %v3156, 108
        %v3193 = vpop.permute.xlu0 %3192
        %3196 = vrot.lane.b32.xlu0 %v3157, 120
        %v3197 = vpop.permute.xlu0 %3196
        %3200 = vrot.lane.b32.xlu0 %v3158, 4
        %v3201 = vpop.permute.xlu0 %3200
        %v3203 = vsel %vm448, %v3083, %v3161
        %v3204 = vsel %vm2873, %v3203, %v3165
        %v3205 = vsel %vm2226, %v3204, %v3169
        %v3206 = vsel %vm2876, %v3205, %v3173
        %v3207 = vsel %vm2878, %v3206, %v3177
        %v3208 = vsel %vm2880, %v3207, %v3181
        %v3209 = vsel %vm440, %v3208, %v3185
        %v3210 = vsel %vm2883, %v3209, %v3189
        %v3211 = vsel %vm2885, %v3210, %v3193
        %v3212 = vsel %vm2887, %v3211, %v3197
        %v3213 = vsel %vm2889, %v3197, %v3201
        %3214 = vrot.lane.b32.xlu0 %v2482, 126
        %v3215 = vpop.permute.xlu0 %3214
        %3216 = vrot.lane.b32.xlu0 %v2616, 126
        %v3217 = vpop.permute.xlu0 %3216
        %3218 = vrot.lane.b32.xlu0 %v2483, 126
        %v3219 = vpop.permute.xlu0 %3218
        %3220 = vrot.lane.b32.xlu0 %v2617, 126
        %v3221 = vpop.permute.xlu0 %3220
        %3222 = vrot.lane.b32.xlu0 %v2484, 126
        %v3223 = vpop.permute.xlu0 %3222
        %3224 = vrot.lane.b32.xlu0 %v2618, 126
        %v3225 = vpop.permute.xlu0 %3224
        %3226 = vrot.lane.b32.xlu0 %v2485, 126
        %v3227 = vpop.permute.xlu0 %3226
        %3228 = vrot.lane.b32.xlu0 %v2619, 126
        %v3229 = vpop.permute.xlu0 %3228
        %3230 = vrot.lane.b32.xlu0 %v2486, 126
        %v3231 = vpop.permute.xlu0 %3230
        %3232 = vrot.lane.b32.xlu0 %v2620, 126
        %v3233 = vpop.permute.xlu0 %3232
        %3234 = vrot.lane.b32.xlu0 %v2487, 126
        %v3235 = vpop.permute.xlu0 %3234
        %3236 = vrot.lane.b32.xlu0 %v2621, 126
        %v3237 = vpop.permute.xlu0 %3236
        %3238 = vrot.lane.b32.xlu0 %v2488, 126
        %v3239 = vpop.permute.xlu0 %3238
        %3240 = vrot.lane.b32.xlu0 %v2622, 126
        %v3241 = vpop.permute.xlu0 %3240
        %3242 = vrot.lane.b32.xlu0 %v2489, 126
        %v3243 = vpop.permute.xlu0 %3242
        %3244 = vrot.lane.b32.xlu0 %v2623, 126
        %v3245 = vpop.permute.xlu0 %3244
        %v3262 = vcombine.low %v3215, %v3223
        %v3263 = vcombine.high %v3215, %v3223
        %v3265 = vunpack.c.l.s4 1983009808
        %v3266 = vunpack.c.0.s8 %v3265
        %v3267 = vlaneseq
        %v3268 = vshrl.u32 %v3267, 7
        %v3269 = vsub.s32 %v3266, %v3268
        %v3270 = vrot.slane %v3262, %v3269
        %v3272 = vunpack.c.l.s4 1983009808
        %v3273 = vunpack.c.0.s8 %v3272
        %v3274 = vlaneseq
        %v3275 = vshrl.u32 %v3274, 7
        %v3276 = vsub.s32 %v3273, %v3275
        %v3277 = vrot.slane %v3263, %v3276
        %v3278 = vcombine.low %v3219, %v3227
        %v3279 = vcombine.high %v3219, %v3227
        %v3281 = vunpack.c.l.s4 1983009808
        %v3282 = vunpack.c.0.s8 %v3281
        %v3283 = vlaneseq
        %v3284 = vshrl.u32 %v3283, 7
        %v3285 = vsub.s32 %v3282, %v3284
        %v3286 = vrot.slane %v3278, %v3285
        %v3288 = vunpack.c.l.s4 1983009808
        %v3289 = vunpack.c.0.s8 %v3288
        %v3290 = vlaneseq
        %v3291 = vshrl.u32 %v3290, 7
        %v3292 = vsub.s32 %v3289, %v3291
        %v3293 = vrot.slane %v3279, %v3292
        %v3294 = vcombine.low %v3231, %v3239
        %v3295 = vcombine.high %v3231, %v3239
        %v3297 = vunpack.c.l.s4 1983009808
        %v3298 = vunpack.c.0.s8 %v3297
        %v3299 = vlaneseq
        %v3300 = vshrl.u32 %v3299, 7
        %v3301 = vsub.s32 %v3298, %v3300
        %v3302 = vrot.slane %v3294, %v3301
        %v3304 = vunpack.c.l.s4 1983009808
        %v3305 = vunpack.c.0.s8 %v3304
        %v3306 = vlaneseq
        %v3307 = vshrl.u32 %v3306, 7
        %v3308 = vsub.s32 %v3305, %v3307
        %v3309 = vrot.slane %v3295, %v3308
        %v3310 = vcombine.low %v3235, %v3243
        %v3311 = vcombine.high %v3235, %v3243
        %v3313 = vunpack.c.l.s4 1983009808
        %v3314 = vunpack.c.0.s8 %v3313
        %v3315 = vlaneseq
        %v3316 = vshrl.u32 %v3315, 7
        %v3317 = vsub.s32 %v3314, %v3316
        %v3318 = vrot.slane %v3310, %v3317
        %v3320 = vunpack.c.l.s4 1983009808
        %v3321 = vunpack.c.0.s8 %v3320
        %v3322 = vlaneseq
        %v3323 = vshrl.u32 %v3322, 7
        %v3324 = vsub.s32 %v3321, %v3323
        %v3325 = vrot.slane %v3311, %v3324
        %v3326 = vcombine.low %v3270, %v3286
        %v3327 = vcombine.high %v3270, %v3286
        %v3329 = vunpack.c.l.s4 1934713408
        %v3330 = vunpack.c.0.s8 %v3329
        %v3331 = vlaneseq
        %v3332 = vshrl.u32 %v3331, 7
        %v3333 = vsub.s32 %v3330, %v3332
        %v3334 = vrot.slane %v3326, %v3333
        %v3336 = vunpack.c.l.s4 1934713408
        %v3337 = vunpack.c.0.s8 %v3336
        %v3338 = vlaneseq
        %v3339 = vshrl.u32 %v3338, 7
        %v3340 = vsub.s32 %v3337, %v3339
        %v3341 = vrot.slane %v3327, %v3340
        %v3342 = vcombine.low %v3277, %v3293
        %v3343 = vcombine.high %v3277, %v3293
        %v3345 = vunpack.c.l.s4 1934713408
        %v3346 = vunpack.c.0.s8 %v3345
        %v3347 = vlaneseq
        %v3348 = vshrl.u32 %v3347, 7
        %v3349 = vsub.s32 %v3346, %v3348
        %v3350 = vrot.slane %v3342, %v3349
        %v3352 = vunpack.c.l.s4 1934713408
        %v3353 = vunpack.c.0.s8 %v3352
        %v3354 = vlaneseq
        %v3355 = vshrl.u32 %v3354, 7
        %v3356 = vsub.s32 %v3353, %v3355
        %v3357 = vrot.slane %v3343, %v3356
        %v3358 = vcombine.low %v3302, %v3318
        %v3359 = vcombine.high %v3302, %v3318
        %v3361 = vunpack.c.l.s4 1934713408
        %v3362 = vunpack.c.0.s8 %v3361
        %v3363 = vlaneseq
        %v3364 = vshrl.u32 %v3363, 7
        %v3365 = vsub.s32 %v3362, %v3364
        %v3366 = vrot.slane %v3358, %v3365
        %v3368 = vunpack.c.l.s4 1934713408
        %v3369 = vunpack.c.0.s8 %v3368
        %v3370 = vlaneseq
        %v3371 = vshrl.u32 %v3370, 7
        %v3372 = vsub.s32 %v3369, %v3371
        %v3373 = vrot.slane %v3359, %v3372
        %v3374 = vcombine.low %v3309, %v3325
        %v3375 = vcombine.high %v3309, %v3325
        %v3377 = vunpack.c.l.s4 1934713408
        %v3378 = vunpack.c.0.s8 %v3377
        %v3379 = vlaneseq
        %v3380 = vshrl.u32 %v3379, 7
        %v3381 = vsub.s32 %v3378, %v3380
        %v3382 = vrot.slane %v3374, %v3381
        %v3384 = vunpack.c.l.s4 1934713408
        %v3385 = vunpack.c.0.s8 %v3384
        %v3386 = vlaneseq
        %v3387 = vshrl.u32 %v3386, 7
        %v3388 = vsub.s32 %v3385, %v3387
        %v3389 = vrot.slane %v3375, %v3388
        %v3390 = vcombine.low %v3334, %v3366
        %v3391 = vcombine.high %v3334, %v3366
        %v3392 = vcombine.low %v3341, %v3373
        %v3393 = vcombine.high %v3341, %v3373
        %v3394 = vcombine.low %v3350, %v3382
        %v3395 = vcombine.high %v3350, %v3382
        %v3396 = vcombine.low %v3357, %v3389
        %v3397 = vcombine.high %v3357, %v3389
        %v3398 = vcombine.low %v3217, %v3225
        %v3400 = vunpack.c.l.s4 1983009808
        %v3401 = vunpack.c.0.s8 %v3400
        %v3402 = vlaneseq
        %v3403 = vshrl.u32 %v3402, 7
        %v3404 = vsub.s32 %v3401, %v3403
        %v3405 = vrot.slane %v3398, %v3404
        %v3406 = vcombine.low %v3221, %v3229
        %v3408 = vunpack.c.l.s4 1983009808
        %v3409 = vunpack.c.0.s8 %v3408
        %v3410 = vlaneseq
        %v3411 = vshrl.u32 %v3410, 7
        %v3412 = vsub.s32 %v3409, %v3411
        %v3413 = vrot.slane %v3406, %v3412
        %v3414 = vcombine.low %v3233, %v3241
        %v3416 = vunpack.c.l.s4 1983009808
        %v3417 = vunpack.c.0.s8 %v3416
        %v3418 = vlaneseq
        %v3419 = vshrl.u32 %v3418, 7
        %v3420 = vsub.s32 %v3417, %v3419
        %v3421 = vrot.slane %v3414, %v3420
        %v3422 = vcombine.low %v3237, %v3245
        %v3424 = vunpack.c.l.s4 1983009808
        %v3425 = vunpack.c.0.s8 %v3424
        %v3426 = vlaneseq
        %v3427 = vshrl.u32 %v3426, 7
        %v3428 = vsub.s32 %v3425, %v3427
        %v3429 = vrot.slane %v3422, %v3428
        %v3430 = vcombine.low %v3405, %v3413
        %v3431 = vcombine.high %v3405, %v3413
        %v3433 = vunpack.c.l.s4 1934713408
        %v3434 = vunpack.c.0.s8 %v3433
        %v3435 = vlaneseq
        %v3436 = vshrl.u32 %v3435, 7
        %v3437 = vsub.s32 %v3434, %v3436
        %v3438 = vrot.slane %v3430, %v3437
        %v3440 = vunpack.c.l.s4 1934713408
        %v3441 = vunpack.c.0.s8 %v3440
        %v3442 = vlaneseq
        %v3443 = vshrl.u32 %v3442, 7
        %v3444 = vsub.s32 %v3441, %v3443
        %v3445 = vrot.slane %v3431, %v3444
        %v3446 = vcombine.low %v3421, %v3429
        %v3447 = vcombine.high %v3421, %v3429
        %v3449 = vunpack.c.l.s4 1934713408
        %v3450 = vunpack.c.0.s8 %v3449
        %v3451 = vlaneseq
        %v3452 = vshrl.u32 %v3451, 7
        %v3453 = vsub.s32 %v3450, %v3452
        %v3454 = vrot.slane %v3446, %v3453
        %v3456 = vunpack.c.l.s4 1934713408
        %v3457 = vunpack.c.0.s8 %v3456
        %v3458 = vlaneseq
        %v3459 = vshrl.u32 %v3458, 7
        %v3460 = vsub.s32 %v3457, %v3459
        %v3461 = vrot.slane %v3447, %v3460
        %v3462 = vcombine.low %v3438, %v3454
        %v3463 = vcombine.high %v3438, %v3454
        %v3464 = vcombine.low %v3445, %v3461
        %v3465 = vcombine.high %v3445, %v3461
        %3467 = vrot.lane.b32.xlu0 %v3391, 12
        %v3468 = vpop.permute.xlu0 %3467
        %3471 = vrot.lane.b32.xlu0 %v3392, 24
        %v3472 = vpop.permute.xlu0 %3471
        %3475 = vrot.lane.b32.xlu0 %v3393, 36
        %v3476 = vpop.permute.xlu0 %3475
        %3479 = vrot.lane.b32.xlu0 %v3394, 48
        %v3480 = vpop.permute.xlu0 %3479
        %3483 = vrot.lane.b32.xlu0 %v3395, 60
        %v3484 = vpop.permute.xlu0 %3483
        %3487 = vrot.lane.b32.xlu0 %v3396, 72
        %v3488 = vpop.permute.xlu0 %3487
        %3491 = vrot.lane.b32.xlu0 %v3397, 84
        %v3492 = vpop.permute.xlu0 %3491
        %3495 = vrot.lane.b32.xlu0 %v3462, 96
        %v3496 = vpop.permute.xlu0 %3495
        %3499 = vrot.lane.b32.xlu0 %v3463, 108
        %v3500 = vpop.permute.xlu0 %3499
        %3503 = vrot.lane.b32.xlu0 %v3464, 120
        %v3504 = vpop.permute.xlu0 %3503
        %3507 = vrot.lane.b32.xlu0 %v3465, 4
        %v3508 = vpop.permute.xlu0 %3507
        %v3510 = vsel %vm448, %v3390, %v3468
        %v3511 = vsel %vm2873, %v3510, %v3472
        %v3512 = vsel %vm2226, %v3511, %v3476
        %v3513 = vsel %vm2876, %v3512, %v3480
        %v3514 = vsel %vm2878, %v3513, %v3484
        %v3515 = vsel %vm2880, %v3514, %v3488
        %v3516 = vsel %vm440, %v3515, %v3492
        %v3517 = vsel %vm2883, %v3516, %v3496
        %v3518 = vsel %vm2885, %v3517, %v3500
        %v3519 = vsel %vm2887, %v3518, %v3504
        %v3520 = vsel %vm2889, %v3504, %v3508
        %v3521 = vrot.slane %v2482, 1
        %v3522 = vrot.slane %v2616, 1
        %v3523 = vsel %vm896, %v3521, %v3522
        %v3524 = vrot.slane %v2483, 1
        %v3525 = vrot.slane %v2617, 1
        %v3526 = vsel %vm896, %v3524, %v3525
        %v3527 = vrot.slane %v2484, 1
        %v3528 = vrot.slane %v2618, 1
        %v3529 = vsel %vm896, %v3527, %v3528
        %v3530 = vrot.slane %v2485, 1
        %v3531 = vrot.slane %v2619, 1
        %v3532 = vsel %vm896, %v3530, %v3531
        %v3533 = vrot.slane %v2486, 1
        %v3534 = vrot.slane %v2620, 1
        %v3535 = vsel %vm896, %v3533, %v3534
        %v3536 = vrot.slane %v2487, 1
        %v3537 = vrot.slane %v2621, 1
        %v3538 = vsel %vm896, %v3536, %v3537
        %v3539 = vrot.slane %v2488, 1
        %v3540 = vrot.slane %v2622, 1
        %v3541 = vsel %vm896, %v3539, %v3540
        %v3542 = vrot.slane %v2489, 1
        %v3543 = vrot.slane %v2623, 1
        %v3544 = vsel %vm896, %v3542, %v3543
        %v3561 = vcombine.low %v3523, %v3529
        %v3562 = vcombine.high %v3523, %v3529
        %v3564 = vunpack.c.l.s4 1983009808
        %v3565 = vunpack.c.0.s8 %v3564
        %v3566 = vlaneseq
        %v3567 = vshrl.u32 %v3566, 7
        %v3568 = vsub.s32 %v3565, %v3567
        %v3569 = vrot.slane %v3561, %v3568
        %v3571 = vunpack.c.l.s4 1983009808
        %v3572 = vunpack.c.0.s8 %v3571
        %v3573 = vlaneseq
        %v3574 = vshrl.u32 %v3573, 7
        %v3575 = vsub.s32 %v3572, %v3574
        %v3576 = vrot.slane %v3562, %v3575
        %v3577 = vcombine.low %v3526, %v3532
        %v3578 = vcombine.high %v3526, %v3532
        %v3580 = vunpack.c.l.s4 1983009808
        %v3581 = vunpack.c.0.s8 %v3580
        %v3582 = vlaneseq
        %v3583 = vshrl.u32 %v3582, 7
        %v3584 = vsub.s32 %v3581, %v3583
        %v3585 = vrot.slane %v3577, %v3584
        %v3587 = vunpack.c.l.s4 1983009808
        %v3588 = vunpack.c.0.s8 %v3587
        %v3589 = vlaneseq
        %v3590 = vshrl.u32 %v3589, 7
        %v3591 = vsub.s32 %v3588, %v3590
        %v3592 = vrot.slane %v3578, %v3591
        %v3593 = vcombine.low %v3535, %v3541
        %v3594 = vcombine.high %v3535, %v3541
        %v3596 = vunpack.c.l.s4 1983009808
        %v3597 = vunpack.c.0.s8 %v3596
        %v3598 = vlaneseq
        %v3599 = vshrl.u32 %v3598, 7
        %v3600 = vsub.s32 %v3597, %v3599
        %v3601 = vrot.slane %v3593, %v3600
        %v3603 = vunpack.c.l.s4 1983009808
        %v3604 = vunpack.c.0.s8 %v3603
        %v3605 = vlaneseq
        %v3606 = vshrl.u32 %v3605, 7
        %v3607 = vsub.s32 %v3604, %v3606
        %v3608 = vrot.slane %v3594, %v3607
        %v3609 = vcombine.low %v3538, %v3544
        %v3610 = vcombine.high %v3538, %v3544
        %v3612 = vunpack.c.l.s4 1983009808
        %v3613 = vunpack.c.0.s8 %v3612
        %v3614 = vlaneseq
        %v3615 = vshrl.u32 %v3614, 7
        %v3616 = vsub.s32 %v3613, %v3615
        %v3617 = vrot.slane %v3609, %v3616
        %v3619 = vunpack.c.l.s4 1983009808
        %v3620 = vunpack.c.0.s8 %v3619
        %v3621 = vlaneseq
        %v3622 = vshrl.u32 %v3621, 7
        %v3623 = vsub.s32 %v3620, %v3622
        %v3624 = vrot.slane %v3610, %v3623
        %v3625 = vcombine.low %v3569, %v3585
        %v3626 = vcombine.high %v3569, %v3585
        %v3628 = vunpack.c.l.s4 1934713408
        %v3629 = vunpack.c.0.s8 %v3628
        %v3630 = vlaneseq
        %v3631 = vshrl.u32 %v3630, 7
        %v3632 = vsub.s32 %v3629, %v3631
        %v3633 = vrot.slane %v3625, %v3632
        %v3635 = vunpack.c.l.s4 1934713408
        %v3636 = vunpack.c.0.s8 %v3635
        %v3637 = vlaneseq
        %v3638 = vshrl.u32 %v3637, 7
        %v3639 = vsub.s32 %v3636, %v3638
        %v3640 = vrot.slane %v3626, %v3639
        %v3641 = vcombine.low %v3576, %v3592
        %v3642 = vcombine.high %v3576, %v3592
        %v3644 = vunpack.c.l.s4 1934713408
        %v3645 = vunpack.c.0.s8 %v3644
        %v3646 = vlaneseq
        %v3647 = vshrl.u32 %v3646, 7
        %v3648 = vsub.s32 %v3645, %v3647
        %v3649 = vrot.slane %v3641, %v3648
        %v3651 = vunpack.c.l.s4 1934713408
        %v3652 = vunpack.c.0.s8 %v3651
        %v3653 = vlaneseq
        %v3654 = vshrl.u32 %v3653, 7
        %v3655 = vsub.s32 %v3652, %v3654
        %v3656 = vrot.slane %v3642, %v3655
        %v3657 = vcombine.low %v3601, %v3617
        %v3658 = vcombine.high %v3601, %v3617
        %v3660 = vunpack.c.l.s4 1934713408
        %v3661 = vunpack.c.0.s8 %v3660
        %v3662 = vlaneseq
        %v3663 = vshrl.u32 %v3662, 7
        %v3664 = vsub.s32 %v3661, %v3663
        %v3665 = vrot.slane %v3657, %v3664
        %v3667 = vunpack.c.l.s4 1934713408
        %v3668 = vunpack.c.0.s8 %v3667
        %v3669 = vlaneseq
        %v3670 = vshrl.u32 %v3669, 7
        %v3671 = vsub.s32 %v3668, %v3670
        %v3672 = vrot.slane %v3658, %v3671
        %v3673 = vcombine.low %v3608, %v3624
        %v3674 = vcombine.high %v3608, %v3624
        %v3676 = vunpack.c.l.s4 1934713408
        %v3677 = vunpack.c.0.s8 %v3676
        %v3678 = vlaneseq
        %v3679 = vshrl.u32 %v3678, 7
        %v3680 = vsub.s32 %v3677, %v3679
        %v3681 = vrot.slane %v3673, %v3680
        %v3683 = vunpack.c.l.s4 1934713408
        %v3684 = vunpack.c.0.s8 %v3683
        %v3685 = vlaneseq
        %v3686 = vshrl.u32 %v3685, 7
        %v3687 = vsub.s32 %v3684, %v3686
        %v3688 = vrot.slane %v3674, %v3687
        %v3689 = vcombine.low %v3633, %v3665
        %v3690 = vcombine.high %v3633, %v3665
        %v3691 = vcombine.low %v3640, %v3672
        %v3692 = vcombine.high %v3640, %v3672
        %v3693 = vcombine.low %v3649, %v3681
        %v3694 = vcombine.high %v3649, %v3681
        %v3695 = vcombine.low %v3656, %v3688
        %v3696 = vcombine.high %v3656, %v3688
        %v3697 = vcombine.low %v3522, %v3528
        %v3699 = vunpack.c.l.s4 1983009808
        %v3700 = vunpack.c.0.s8 %v3699
        %v3701 = vlaneseq
        %v3702 = vshrl.u32 %v3701, 7
        %v3703 = vsub.s32 %v3700, %v3702
        %v3704 = vrot.slane %v3697, %v3703
        %v3705 = vcombine.low %v3525, %v3531
        %v3707 = vunpack.c.l.s4 1983009808
        %v3708 = vunpack.c.0.s8 %v3707
        %v3709 = vlaneseq
        %v3710 = vshrl.u32 %v3709, 7
        %v3711 = vsub.s32 %v3708, %v3710
        %v3712 = vrot.slane %v3705, %v3711
        %v3713 = vcombine.low %v3534, %v3540
        %v3715 = vunpack.c.l.s4 1983009808
        %v3716 = vunpack.c.0.s8 %v3715
        %v3717 = vlaneseq
        %v3718 = vshrl.u32 %v3717, 7
        %v3719 = vsub.s32 %v3716, %v3718
        %v3720 = vrot.slane %v3713, %v3719
        %v3721 = vcombine.low %v3537, %v3543
        %v3723 = vunpack.c.l.s4 1983009808
        %v3724 = vunpack.c.0.s8 %v3723
        %v3725 = vlaneseq
        %v3726 = vshrl.u32 %v3725, 7
        %v3727 = vsub.s32 %v3724, %v3726
        %v3728 = vrot.slane %v3721, %v3727
        %v3729 = vcombine.low %v3704, %v3712
        %v3730 = vcombine.high %v3704, %v3712
        %v3732 = vunpack.c.l.s4 1934713408
        %v3733 = vunpack.c.0.s8 %v3732
        %v3734 = vlaneseq
        %v3735 = vshrl.u32 %v3734, 7
        %v3736 = vsub.s32 %v3733, %v3735
        %v3737 = vrot.slane %v3729, %v3736
        %v3739 = vunpack.c.l.s4 1934713408
        %v3740 = vunpack.c.0.s8 %v3739
        %v3741 = vlaneseq
        %v3742 = vshrl.u32 %v3741, 7
        %v3743 = vsub.s32 %v3740, %v3742
        %v3744 = vrot.slane %v3730, %v3743
        %v3745 = vcombine.low %v3720, %v3728
        %v3746 = vcombine.high %v3720, %v3728
        %v3748 = vunpack.c.l.s4 1934713408
        %v3749 = vunpack.c.0.s8 %v3748
        %v3750 = vlaneseq
        %v3751 = vshrl.u32 %v3750, 7
        %v3752 = vsub.s32 %v3749, %v3751
        %v3753 = vrot.slane %v3745, %v3752
        %v3755 = vunpack.c.l.s4 1934713408
        %v3756 = vunpack.c.0.s8 %v3755
        %v3757 = vlaneseq
        %v3758 = vshrl.u32 %v3757, 7
        %v3759 = vsub.s32 %v3756, %v3758
        %v3760 = vrot.slane %v3746, %v3759
        %v3761 = vcombine.low %v3737, %v3753
        %v3762 = vcombine.high %v3737, %v3753
        %v3763 = vcombine.low %v3744, %v3760
        %v3764 = vcombine.high %v3744, %v3760
        %3766 = vrot.lane.b32.xlu0 %v3690, 12
        %v3767 = vpop.permute.xlu0 %3766
        %3770 = vrot.lane.b32.xlu0 %v3691, 24
        %v3771 = vpop.permute.xlu0 %3770
        %3774 = vrot.lane.b32.xlu0 %v3692, 36
        %v3775 = vpop.permute.xlu0 %3774
        %3778 = vrot.lane.b32.xlu0 %v3693, 48
        %v3779 = vpop.permute.xlu0 %3778
        %3782 = vrot.lane.b32.xlu0 %v3694, 60
        %v3783 = vpop.permute.xlu0 %3782
        %3786 = vrot.lane.b32.xlu0 %v3695, 72
        %v3787 = vpop.permute.xlu0 %3786
        %3790 = vrot.lane.b32.xlu0 %v3696, 84
        %v3791 = vpop.permute.xlu0 %3790
        %3794 = vrot.lane.b32.xlu0 %v3761, 96
        %v3795 = vpop.permute.xlu0 %3794
        %3798 = vrot.lane.b32.xlu0 %v3762, 108
        %v3799 = vpop.permute.xlu0 %3798
        %3802 = vrot.lane.b32.xlu0 %v3763, 120
        %v3803 = vpop.permute.xlu0 %3802
        %3806 = vrot.lane.b32.xlu0 %v3764, 4
        %v3807 = vpop.permute.xlu0 %3806
        %v3809 = vsel %vm448, %v3689, %v3767
        %v3810 = vsel %vm2873, %v3809, %v3771
        %v3811 = vsel %vm2226, %v3810, %v3775
        %v3812 = vsel %vm2876, %v3811, %v3779
        %v3813 = vsel %vm2878, %v3812, %v3783
        %v3814 = vsel %vm2880, %v3813, %v3787
        %v3815 = vsel %vm440, %v3814, %v3791
        %v3816 = vsel %vm2883, %v3815, %v3795
        %v3817 = vsel %vm2885, %v3816, %v3799
        %v3818 = vsel %vm2887, %v3817, %v3803
        %v3819 = vsel %vm2889, %v3803, %v3807
        %3820 = vrot.lane.b32.xlu0 %v3523, 127
        %v3821 = vpop.permute.xlu0 %3820
        %3822 = vrot.lane.b32.xlu0 %v3522, 127
        %v3823 = vpop.permute.xlu0 %3822
        %3824 = vrot.lane.b32.xlu0 %v3526, 127
        %v3825 = vpop.permute.xlu0 %3824
        %3826 = vrot.lane.b32.xlu0 %v3525, 127
        %v3827 = vpop.permute.xlu0 %3826
        %3828 = vrot.lane.b32.xlu0 %v3529, 127
        %v3829 = vpop.permute.xlu0 %3828
        %3830 = vrot.lane.b32.xlu0 %v3528, 127
        %v3831 = vpop.permute.xlu0 %3830
        %3832 = vrot.lane.b32.xlu0 %v3532, 127
        %v3833 = vpop.permute.xlu0 %3832
        %3834 = vrot.lane.b32.xlu0 %v3531, 127
        %v3835 = vpop.permute.xlu0 %3834
        %3836 = vrot.lane.b32.xlu0 %v3535, 127
        %v3837 = vpop.permute.xlu0 %3836
        %3838 = vrot.lane.b32.xlu0 %v3534, 127
        %v3839 = vpop.permute.xlu0 %3838
        %3840 = vrot.lane.b32.xlu0 %v3538, 127
        %v3841 = vpop.permute.xlu0 %3840
        %3842 = vrot.lane.b32.xlu0 %v3537, 127
        %v3843 = vpop.permute.xlu0 %3842
        %3844 = vrot.lane.b32.xlu0 %v3541, 127
        %v3845 = vpop.permute.xlu0 %3844
        %3846 = vrot.lane.b32.xlu0 %v3540, 127
        %v3847 = vpop.permute.xlu0 %3846
        %3848 = vrot.lane.b32.xlu0 %v3544, 127
        %v3849 = vpop.permute.xlu0 %3848
        %3850 = vrot.lane.b32.xlu0 %v3543, 127
        %v3851 = vpop.permute.xlu0 %3850
        %v3868 = vcombine.low %v3821, %v3829
        %v3869 = vcombine.high %v3821, %v3829
        %v3871 = vunpack.c.l.s4 1983009808
        %v3872 = vunpack.c.0.s8 %v3871
        %v3873 = vlaneseq
        %v3874 = vshrl.u32 %v3873, 7
        %v3875 = vsub.s32 %v3872, %v3874
        %v3876 = vrot.slane %v3868, %v3875
        %v3878 = vunpack.c.l.s4 1983009808
        %v3879 = vunpack.c.0.s8 %v3878
        %v3880 = vlaneseq
        %v3881 = vshrl.u32 %v3880, 7
        %v3882 = vsub.s32 %v3879, %v3881
        %v3883 = vrot.slane %v3869, %v3882
        %v3884 = vcombine.low %v3825, %v3833
        %v3885 = vcombine.high %v3825, %v3833
        %v3887 = vunpack.c.l.s4 1983009808
        %v3888 = vunpack.c.0.s8 %v3887
        %v3889 = vlaneseq
        %v3890 = vshrl.u32 %v3889, 7
        %v3891 = vsub.s32 %v3888, %v3890
        %v3892 = vrot.slane %v3884, %v3891
        %v3894 = vunpack.c.l.s4 1983009808
        %v3895 = vunpack.c.0.s8 %v3894
        %v3896 = vlaneseq
        %v3897 = vshrl.u32 %v3896, 7
        %v3898 = vsub.s32 %v3895, %v3897
        %v3899 = vrot.slane %v3885, %v3898
        %v3900 = vcombine.low %v3837, %v3845
        %v3901 = vcombine.high %v3837, %v3845
        %v3903 = vunpack.c.l.s4 1983009808
        %v3904 = vunpack.c.0.s8 %v3903
        %v3905 = vlaneseq
        %v3906 = vshrl.u32 %v3905, 7
        %v3907 = vsub.s32 %v3904, %v3906
        %v3908 = vrot.slane %v3900, %v3907
        %v3910 = vunpack.c.l.s4 1983009808
        %v3911 = vunpack.c.0.s8 %v3910
        %v3912 = vlaneseq
        %v3913 = vshrl.u32 %v3912, 7
        %v3914 = vsub.s32 %v3911, %v3913
        %v3915 = vrot.slane %v3901, %v3914
        %v3916 = vcombine.low %v3841, %v3849
        %v3917 = vcombine.high %v3841, %v3849
        %v3919 = vunpack.c.l.s4 1983009808
        %v3920 = vunpack.c.0.s8 %v3919
        %v3921 = vlaneseq
        %v3922 = vshrl.u32 %v3921, 7
        %v3923 = vsub.s32 %v3920, %v3922
        %v3924 = vrot.slane %v3916, %v3923
        %v3926 = vunpack.c.l.s4 1983009808
        %v3927 = vunpack.c.0.s8 %v3926
        %v3928 = vlaneseq
        %v3929 = vshrl.u32 %v3928, 7
        %v3930 = vsub.s32 %v3927, %v3929
        %v3931 = vrot.slane %v3917, %v3930
        %v3932 = vcombine.low %v3876, %v3892
        %v3933 = vcombine.high %v3876, %v3892
        %v3935 = vunpack.c.l.s4 1934713408
        %v3936 = vunpack.c.0.s8 %v3935
        %v3937 = vlaneseq
        %v3938 = vshrl.u32 %v3937, 7
        %v3939 = vsub.s32 %v3936, %v3938
        %v3940 = vrot.slane %v3932, %v3939
        %v3942 = vunpack.c.l.s4 1934713408
        %v3943 = vunpack.c.0.s8 %v3942
        %v3944 = vlaneseq
        %v3945 = vshrl.u32 %v3944, 7
        %v3946 = vsub.s32 %v3943, %v3945
        %v3947 = vrot.slane %v3933, %v3946
        %v3948 = vcombine.low %v3883, %v3899
        %v3949 = vcombine.high %v3883, %v3899
        %v3951 = vunpack.c.l.s4 1934713408
        %v3952 = vunpack.c.0.s8 %v3951
        %v3953 = vlaneseq
        %v3954 = vshrl.u32 %v3953, 7
        %v3955 = vsub.s32 %v3952, %v3954
        %v3956 = vrot.slane %v3948, %v3955
        %v3958 = vunpack.c.l.s4 1934713408
        %v3959 = vunpack.c.0.s8 %v3958
        %v3960 = vlaneseq
        %v3961 = vshrl.u32 %v3960, 7
        %v3962 = vsub.s32 %v3959, %v3961
        %v3963 = vrot.slane %v3949, %v3962
        %v3964 = vcombine.low %v3908, %v3924
        %v3965 = vcombine.high %v3908, %v3924
        %v3967 = vunpack.c.l.s4 1934713408
        %v3968 = vunpack.c.0.s8 %v3967
        %v3969 = vlaneseq
        %v3970 = vshrl.u32 %v3969, 7
        %v3971 = vsub.s32 %v3968, %v3970
        %v3972 = vrot.slane %v3964, %v3971
        %v3974 = vunpack.c.l.s4 1934713408
        %v3975 = vunpack.c.0.s8 %v3974
        %v3976 = vlaneseq
        %v3977 = vshrl.u32 %v3976, 7
        %v3978 = vsub.s32 %v3975, %v3977
        %v3979 = vrot.slane %v3965, %v3978
        %v3980 = vcombine.low %v3915, %v3931
        %v3981 = vcombine.high %v3915, %v3931
        %v3983 = vunpack.c.l.s4 1934713408
        %v3984 = vunpack.c.0.s8 %v3983
        %v3985 = vlaneseq
        %v3986 = vshrl.u32 %v3985, 7
        %v3987 = vsub.s32 %v3984, %v3986
        %v3988 = vrot.slane %v3980, %v3987
        %v3990 = vunpack.c.l.s4 1934713408
        %v3991 = vunpack.c.0.s8 %v3990
        %v3992 = vlaneseq
        %v3993 = vshrl.u32 %v3992, 7
        %v3994 = vsub.s32 %v3991, %v3993
        %v3995 = vrot.slane %v3981, %v3994
        %v3996 = vcombine.low %v3940, %v3972
        %v3997 = vcombine.high %v3940, %v3972
        %v3998 = vcombine.low %v3947, %v3979
        %v3999 = vcombine.high %v3947, %v3979
        %v4000 = vcombine.low %v3956, %v3988
        %v4001 = vcombine.high %v3956, %v3988
        %v4002 = vcombine.low %v3963, %v3995
        %v4003 = vcombine.high %v3963, %v3995
        %v4004 = vcombine.low %v3823, %v3831
        %v4006 = vunpack.c.l.s4 1983009808
        %v4007 = vunpack.c.0.s8 %v4006
        %v4008 = vlaneseq
        %v4009 = vshrl.u32 %v4008, 7
        %v4010 = vsub.s32 %v4007, %v4009
        %v4011 = vrot.slane %v4004, %v4010
        %v4012 = vcombine.low %v3827, %v3835
        %v4014 = vunpack.c.l.s4 1983009808
        %v4015 = vunpack.c.0.s8 %v4014
        %v4016 = vlaneseq
        %v4017 = vshrl.u32 %v4016, 7
        %v4018 = vsub.s32 %v4015, %v4017
        %v4019 = vrot.slane %v4012, %v4018
        %v4020 = vcombine.low %v3839, %v3847
        %v4022 = vunpack.c.l.s4 1983009808
        %v4023 = vunpack.c.0.s8 %v4022
        %v4024 = vlaneseq
        %v4025 = vshrl.u32 %v4024, 7
        %v4026 = vsub.s32 %v4023, %v4025
        %v4027 = vrot.slane %v4020, %v4026
        %v4028 = vcombine.low %v3843, %v3851
        %v4030 = vunpack.c.l.s4 1983009808
        %v4031 = vunpack.c.0.s8 %v4030
        %v4032 = vlaneseq
        %v4033 = vshrl.u32 %v4032, 7
        %v4034 = vsub.s32 %v4031, %v4033
        %v4035 = vrot.slane %v4028, %v4034
        %v4036 = vcombine.low %v4011, %v4019
        %v4037 = vcombine.high %v4011, %v4019
        %v4039 = vunpack.c.l.s4 1934713408
        %v4040 = vunpack.c.0.s8 %v4039
        %v4041 = vlaneseq
        %v4042 = vshrl.u32 %v4041, 7
        %v4043 = vsub.s32 %v4040, %v4042
        %v4044 = vrot.slane %v4036, %v4043
        %v4046 = vunpack.c.l.s4 1934713408
        %v4047 = vunpack.c.0.s8 %v4046
        %v4048 = vlaneseq
        %v4049 = vshrl.u32 %v4048, 7
        %v4050 = vsub.s32 %v4047, %v4049
        %v4051 = vrot.slane %v4037, %v4050
        %v4052 = vcombine.low %v4027, %v4035
        %v4053 = vcombine.high %v4027, %v4035
        %v4055 = vunpack.c.l.s4 1934713408
        %v4056 = vunpack.c.0.s8 %v4055
        %v4057 = vlaneseq
        %v4058 = vshrl.u32 %v4057, 7
        %v4059 = vsub.s32 %v4056, %v4058
        %v4060 = vrot.slane %v4052, %v4059
        %v4062 = vunpack.c.l.s4 1934713408
        %v4063 = vunpack.c.0.s8 %v4062
        %v4064 = vlaneseq
        %v4065 = vshrl.u32 %v4064, 7
        %v4066 = vsub.s32 %v4063, %v4065
        %v4067 = vrot.slane %v4053, %v4066
        %v4068 = vcombine.low %v4044, %v4060
        %v4069 = vcombine.high %v4044, %v4060
        %v4070 = vcombine.low %v4051, %v4067
        %v4071 = vcombine.high %v4051, %v4067
        %4073 = vrot.lane.b32.xlu0 %v3997, 12
        %v4074 = vpop.permute.xlu0 %4073
        %4077 = vrot.lane.b32.xlu0 %v3998, 24
        %v4078 = vpop.permute.xlu0 %4077
        %4081 = vrot.lane.b32.xlu0 %v3999, 36
        %v4082 = vpop.permute.xlu0 %4081
        %4085 = vrot.lane.b32.xlu0 %v4000, 48
        %v4086 = vpop.permute.xlu0 %4085
        %4089 = vrot.lane.b32.xlu0 %v4001, 60
        %v4090 = vpop.permute.xlu0 %4089
        %4093 = vrot.lane.b32.xlu0 %v4002, 72
        %v4094 = vpop.permute.xlu0 %4093
        %4097 = vrot.lane.b32.xlu0 %v4003, 84
        %v4098 = vpop.permute.xlu0 %4097
        %4101 = vrot.lane.b32.xlu0 %v4068, 96
        %v4102 = vpop.permute.xlu0 %4101
        %4105 = vrot.lane.b32.xlu0 %v4069, 108
        %v4106 = vpop.permute.xlu0 %4105
        %4109 = vrot.lane.b32.xlu0 %v4070, 120
        %v4110 = vpop.permute.xlu0 %4109
        %4113 = vrot.lane.b32.xlu0 %v4071, 4
        %v4114 = vpop.permute.xlu0 %4113
        %v4116 = vsel %vm448, %v3996, %v4074
        %v4117 = vsel %vm2873, %v4116, %v4078
        %v4118 = vsel %vm2226, %v4117, %v4082
        %v4119 = vsel %vm2876, %v4118, %v4086
        %v4120 = vsel %vm2878, %v4119, %v4090
        %v4121 = vsel %vm2880, %v4120, %v4094
        %v4122 = vsel %vm440, %v4121, %v4098
        %v4123 = vsel %vm2883, %v4122, %v4102
        %v4124 = vsel %vm2885, %v4123, %v4106
        %v4125 = vsel %vm2887, %v4124, %v4110
        %v4126 = vsel %vm2889, %v4110, %v4114
        %4127 = vrot.lane.b32.xlu0 %v3523, 126
        %v4128 = vpop.permute.xlu0 %4127
        %4129 = vrot.lane.b32.xlu0 %v3522, 126
        %v4130 = vpop.permute.xlu0 %4129
        %4131 = vrot.lane.b32.xlu0 %v3526, 126
        %v4132 = vpop.permute.xlu0 %4131
        %4133 = vrot.lane.b32.xlu0 %v3525, 126
        %v4134 = vpop.permute.xlu0 %4133
        %4135 = vrot.lane.b32.xlu0 %v3529, 126
        %v4136 = vpop.permute.xlu0 %4135
        %4137 = vrot.lane.b32.xlu0 %v3528, 126
        %v4138 = vpop.permute.xlu0 %4137
        %4139 = vrot.lane.b32.xlu0 %v3532, 126
        %v4140 = vpop.permute.xlu0 %4139
        %4141 = vrot.lane.b32.xlu0 %v3531, 126
        %v4142 = vpop.permute.xlu0 %4141
        %4143 = vrot.lane.b32.xlu0 %v3535, 126
        %v4144 = vpop.permute.xlu0 %4143
        %4145 = vrot.lane.b32.xlu0 %v3534, 126
        %v4146 = vpop.permute.xlu0 %4145
        %4147 = vrot.lane.b32.xlu0 %v3538, 126
        %v4148 = vpop.permute.xlu0 %4147
        %4149 = vrot.lane.b32.xlu0 %v3537, 126
        %v4150 = vpop.permute.xlu0 %4149
        %4151 = vrot.lane.b32.xlu0 %v3541, 126
        %v4152 = vpop.permute.xlu0 %4151
        %4153 = vrot.lane.b32.xlu0 %v3540, 126
        %v4154 = vpop.permute.xlu0 %4153
        %4155 = vrot.lane.b32.xlu0 %v3544, 126
        %v4156 = vpop.permute.xlu0 %4155
        %4157 = vrot.lane.b32.xlu0 %v3543, 126
        %v4158 = vpop.permute.xlu0 %4157
        %v4175 = vcombine.low %v4128, %v4136
        %v4176 = vcombine.high %v4128, %v4136
        %v4178 = vunpack.c.l.s4 1983009808
        %v4179 = vunpack.c.0.s8 %v4178
        %v4180 = vlaneseq
        %v4181 = vshrl.u32 %v4180, 7
        %v4182 = vsub.s32 %v4179, %v4181
        %v4183 = vrot.slane %v4175, %v4182
        %v4185 = vunpack.c.l.s4 1983009808
        %v4186 = vunpack.c.0.s8 %v4185
        %v4187 = vlaneseq
        %v4188 = vshrl.u32 %v4187, 7
        %v4189 = vsub.s32 %v4186, %v4188
        %v4190 = vrot.slane %v4176, %v4189
        %v4191 = vcombine.low %v4132, %v4140
        %v4192 = vcombine.high %v4132, %v4140
        %v4194 = vunpack.c.l.s4 1983009808
        %v4195 = vunpack.c.0.s8 %v4194
        %v4196 = vlaneseq
        %v4197 = vshrl.u32 %v4196, 7
        %v4198 = vsub.s32 %v4195, %v4197
        %v4199 = vrot.slane %v4191, %v4198
        %v4201 = vunpack.c.l.s4 1983009808
        %v4202 = vunpack.c.0.s8 %v4201
        %v4203 = vlaneseq
        %v4204 = vshrl.u32 %v4203, 7
        %v4205 = vsub.s32 %v4202, %v4204
        %v4206 = vrot.slane %v4192, %v4205
        %v4207 = vcombine.low %v4144, %v4152
        %v4208 = vcombine.high %v4144, %v4152
        %v4210 = vunpack.c.l.s4 1983009808
        %v4211 = vunpack.c.0.s8 %v4210
        %v4212 = vlaneseq
        %v4213 = vshrl.u32 %v4212, 7
        %v4214 = vsub.s32 %v4211, %v4213
        %v4215 = vrot.slane %v4207, %v4214
        %v4217 = vunpack.c.l.s4 1983009808
        %v4218 = vunpack.c.0.s8 %v4217
        %v4219 = vlaneseq
        %v4220 = vshrl.u32 %v4219, 7
        %v4221 = vsub.s32 %v4218, %v4220
        %v4222 = vrot.slane %v4208, %v4221
        %v4223 = vcombine.low %v4148, %v4156
        %v4224 = vcombine.high %v4148, %v4156
        %v4226 = vunpack.c.l.s4 1983009808
        %v4227 = vunpack.c.0.s8 %v4226
        %v4228 = vlaneseq
        %v4229 = vshrl.u32 %v4228, 7
        %v4230 = vsub.s32 %v4227, %v4229
        %v4231 = vrot.slane %v4223, %v4230
        %v4233 = vunpack.c.l.s4 1983009808
        %v4234 = vunpack.c.0.s8 %v4233
        %v4235 = vlaneseq
        %v4236 = vshrl.u32 %v4235, 7
        %v4237 = vsub.s32 %v4234, %v4236
        %v4238 = vrot.slane %v4224, %v4237
        %v4239 = vcombine.low %v4183, %v4199
        %v4240 = vcombine.high %v4183, %v4199
        %v4242 = vunpack.c.l.s4 1934713408
        %v4243 = vunpack.c.0.s8 %v4242
        %v4244 = vlaneseq
        %v4245 = vshrl.u32 %v4244, 7
        %v4246 = vsub.s32 %v4243, %v4245
        %v4247 = vrot.slane %v4239, %v4246
        %v4249 = vunpack.c.l.s4 1934713408
        %v4250 = vunpack.c.0.s8 %v4249
        %v4251 = vlaneseq
        %v4252 = vshrl.u32 %v4251, 7
        %v4253 = vsub.s32 %v4250, %v4252
        %v4254 = vrot.slane %v4240, %v4253
        %v4255 = vcombine.low %v4190, %v4206
        %v4256 = vcombine.high %v4190, %v4206
        %v4258 = vunpack.c.l.s4 1934713408
        %v4259 = vunpack.c.0.s8 %v4258
        %v4260 = vlaneseq
        %v4261 = vshrl.u32 %v4260, 7
        %v4262 = vsub.s32 %v4259, %v4261
        %v4263 = vrot.slane %v4255, %v4262
        %v4265 = vunpack.c.l.s4 1934713408
        %v4266 = vunpack.c.0.s8 %v4265
        %v4267 = vlaneseq
        %v4268 = vshrl.u32 %v4267, 7
        %v4269 = vsub.s32 %v4266, %v4268
        %v4270 = vrot.slane %v4256, %v4269
        %v4271 = vcombine.low %v4215, %v4231
        %v4272 = vcombine.high %v4215, %v4231
        %v4274 = vunpack.c.l.s4 1934713408
        %v4275 = vunpack.c.0.s8 %v4274
        %v4276 = vlaneseq
        %v4277 = vshrl.u32 %v4276, 7
        %v4278 = vsub.s32 %v4275, %v4277
        %v4279 = vrot.slane %v4271, %v4278
        %v4281 = vunpack.c.l.s4 1934713408
        %v4282 = vunpack.c.0.s8 %v4281
        %v4283 = vlaneseq
        %v4284 = vshrl.u32 %v4283, 7
        %v4285 = vsub.s32 %v4282, %v4284
        %v4286 = vrot.slane %v4272, %v4285
        %v4287 = vcombine.low %v4222, %v4238
        %v4288 = vcombine.high %v4222, %v4238
        %v4290 = vunpack.c.l.s4 1934713408
        %v4291 = vunpack.c.0.s8 %v4290
        %v4292 = vlaneseq
        %v4293 = vshrl.u32 %v4292, 7
        %v4294 = vsub.s32 %v4291, %v4293
        %v4295 = vrot.slane %v4287, %v4294
        %v4297 = vunpack.c.l.s4 1934713408
        %v4298 = vunpack.c.0.s8 %v4297
        %v4299 = vlaneseq
        %v4300 = vshrl.u32 %v4299, 7
        %v4301 = vsub.s32 %v4298, %v4300
        %v4302 = vrot.slane %v4288, %v4301
        %v4303 = vcombine.low %v4247, %v4279
        %v4304 = vcombine.high %v4247, %v4279
        %v4305 = vcombine.low %v4254, %v4286
        %v4306 = vcombine.high %v4254, %v4286
        %v4307 = vcombine.low %v4263, %v4295
        %v4308 = vcombine.high %v4263, %v4295
        %v4309 = vcombine.low %v4270, %v4302
        %v4310 = vcombine.high %v4270, %v4302
        %v4311 = vcombine.low %v4130, %v4138
        %v4313 = vunpack.c.l.s4 1983009808
        %v4314 = vunpack.c.0.s8 %v4313
        %v4315 = vlaneseq
        %v4316 = vshrl.u32 %v4315, 7
        %v4317 = vsub.s32 %v4314, %v4316
        %v4318 = vrot.slane %v4311, %v4317
        %v4319 = vcombine.low %v4134, %v4142
        %v4321 = vunpack.c.l.s4 1983009808
        %v4322 = vunpack.c.0.s8 %v4321
        %v4323 = vlaneseq
        %v4324 = vshrl.u32 %v4323, 7
        %v4325 = vsub.s32 %v4322, %v4324
        %v4326 = vrot.slane %v4319, %v4325
        %v4327 = vcombine.low %v4146, %v4154
        %v4329 = vunpack.c.l.s4 1983009808
        %v4330 = vunpack.c.0.s8 %v4329
        %v4331 = vlaneseq
        %v4332 = vshrl.u32 %v4331, 7
        %v4333 = vsub.s32 %v4330, %v4332
        %v4334 = vrot.slane %v4327, %v4333
        %v4335 = vcombine.low %v4150, %v4158
        %v4337 = vunpack.c.l.s4 1983009808
        %v4338 = vunpack.c.0.s8 %v4337
        %v4339 = vlaneseq
        %v4340 = vshrl.u32 %v4339, 7
        %v4341 = vsub.s32 %v4338, %v4340
        %v4342 = vrot.slane %v4335, %v4341
        %v4343 = vcombine.low %v4318, %v4326
        %v4344 = vcombine.high %v4318, %v4326
        %v4346 = vunpack.c.l.s4 1934713408
        %v4347 = vunpack.c.0.s8 %v4346
        %v4348 = vlaneseq
        %v4349 = vshrl.u32 %v4348, 7
        %v4350 = vsub.s32 %v4347, %v4349
        %v4351 = vrot.slane %v4343, %v4350
        %v4353 = vunpack.c.l.s4 1934713408
        %v4354 = vunpack.c.0.s8 %v4353
        %v4355 = vlaneseq
        %v4356 = vshrl.u32 %v4355, 7
        %v4357 = vsub.s32 %v4354, %v4356
        %v4358 = vrot.slane %v4344, %v4357
        %v4359 = vcombine.low %v4334, %v4342
        %v4360 = vcombine.high %v4334, %v4342
        %v4362 = vunpack.c.l.s4 1934713408
        %v4363 = vunpack.c.0.s8 %v4362
        %v4364 = vlaneseq
        %v4365 = vshrl.u32 %v4364, 7
        %v4366 = vsub.s32 %v4363, %v4365
        %v4367 = vrot.slane %v4359, %v4366
        %v4369 = vunpack.c.l.s4 1934713408
        %v4370 = vunpack.c.0.s8 %v4369
        %v4371 = vlaneseq
        %v4372 = vshrl.u32 %v4371, 7
        %v4373 = vsub.s32 %v4370, %v4372
        %v4374 = vrot.slane %v4360, %v4373
        %v4375 = vcombine.low %v4351, %v4367
        %v4376 = vcombine.high %v4351, %v4367
        %v4377 = vcombine.low %v4358, %v4374
        %v4378 = vcombine.high %v4358, %v4374
        %4380 = vrot.lane.b32.xlu0 %v4304, 12
        %v4381 = vpop.permute.xlu0 %4380
        %4384 = vrot.lane.b32.xlu0 %v4305, 24
        %v4385 = vpop.permute.xlu0 %4384
        %4388 = vrot.lane.b32.xlu0 %v4306, 36
        %v4389 = vpop.permute.xlu0 %4388
        %4392 = vrot.lane.b32.xlu0 %v4307, 48
        %v4393 = vpop.permute.xlu0 %4392
        %4396 = vrot.lane.b32.xlu0 %v4308, 60
        %v4397 = vpop.permute.xlu0 %4396
        %4400 = vrot.lane.b32.xlu0 %v4309, 72
        %v4401 = vpop.permute.xlu0 %4400
        %4404 = vrot.lane.b32.xlu0 %v4310, 84
        %v4405 = vpop.permute.xlu0 %4404
        %4408 = vrot.lane.b32.xlu0 %v4375, 96
        %v4409 = vpop.permute.xlu0 %4408
        %4412 = vrot.lane.b32.xlu0 %v4376, 108
        %v4413 = vpop.permute.xlu0 %4412
        %4416 = vrot.lane.b32.xlu0 %v4377, 120
        %v4417 = vpop.permute.xlu0 %4416
        %4420 = vrot.lane.b32.xlu0 %v4378, 4
        %v4421 = vpop.permute.xlu0 %4420
        %v4423 = vsel %vm448, %v4303, %v4381
        %v4424 = vsel %vm2873, %v4423, %v4385
        %v4425 = vsel %vm2226, %v4424, %v4389
        %v4426 = vsel %vm2876, %v4425, %v4393
        %v4427 = vsel %vm2878, %v4426, %v4397
        %v4428 = vsel %vm2880, %v4427, %v4401
        %v4429 = vsel %vm440, %v4428, %v4405
        %v4430 = vsel %vm2883, %v4429, %v4409
        %v4431 = vsel %vm2885, %v4430, %v4413
        %v4432 = vsel %vm2887, %v4431, %v4417
        %v4433 = vsel %vm2889, %v4417, %v4421
        %v4434 = vrot.slane %v2482, 2
        %v4435 = vrot.slane %v2616, 2
        %v4436 = vsel %vm1541, %v4434, %v4435
        %v4437 = vrot.slane %v2483, 2
        %v4438 = vrot.slane %v2617, 2
        %v4439 = vsel %vm1541, %v4437, %v4438
        %v4440 = vrot.slane %v2484, 2
        %v4441 = vrot.slane %v2618, 2
        %v4442 = vsel %vm1541, %v4440, %v4441
        %v4443 = vrot.slane %v2485, 2
        %v4444 = vrot.slane %v2619, 2
        %v4445 = vsel %vm1541, %v4443, %v4444
        %v4446 = vrot.slane %v2486, 2
        %v4447 = vrot.slane %v2620, 2
        %v4448 = vsel %vm1541, %v4446, %v4447
        %v4449 = vrot.slane %v2487, 2
        %v4450 = vrot.slane %v2621, 2
        %v4451 = vsel %vm1541, %v4449, %v4450
        %v4452 = vrot.slane %v2488, 2
        %v4453 = vrot.slane %v2622, 2
        %v4454 = vsel %vm1541, %v4452, %v4453
        %v4455 = vrot.slane %v2489, 2
        %v4456 = vrot.slane %v2623, 2
        %v4457 = vsel %vm1541, %v4455, %v4456
        %v4474 = vcombine.low %v4436, %v4442
        %v4475 = vcombine.high %v4436, %v4442
        %v4477 = vunpack.c.l.s4 1983009808
        %v4478 = vunpack.c.0.s8 %v4477
        %v4479 = vlaneseq
        %v4480 = vshrl.u32 %v4479, 7
        %v4481 = vsub.s32 %v4478, %v4480
        %v4482 = vrot.slane %v4474, %v4481
        %v4484 = vunpack.c.l.s4 1983009808
        %v4485 = vunpack.c.0.s8 %v4484
        %v4486 = vlaneseq
        %v4487 = vshrl.u32 %v4486, 7
        %v4488 = vsub.s32 %v4485, %v4487
        %v4489 = vrot.slane %v4475, %v4488
        %v4490 = vcombine.low %v4439, %v4445
        %v4491 = vcombine.high %v4439, %v4445
        %v4493 = vunpack.c.l.s4 1983009808
        %v4494 = vunpack.c.0.s8 %v4493
        %v4495 = vlaneseq
        %v4496 = vshrl.u32 %v4495, 7
        %v4497 = vsub.s32 %v4494, %v4496
        %v4498 = vrot.slane %v4490, %v4497
        %v4500 = vunpack.c.l.s4 1983009808
        %v4501 = vunpack.c.0.s8 %v4500
        %v4502 = vlaneseq
        %v4503 = vshrl.u32 %v4502, 7
        %v4504 = vsub.s32 %v4501, %v4503
        %v4505 = vrot.slane %v4491, %v4504
        %v4506 = vcombine.low %v4448, %v4454
        %v4507 = vcombine.high %v4448, %v4454
        %v4509 = vunpack.c.l.s4 1983009808
        %v4510 = vunpack.c.0.s8 %v4509
        %v4511 = vlaneseq
        %v4512 = vshrl.u32 %v4511, 7
        %v4513 = vsub.s32 %v4510, %v4512
        %v4514 = vrot.slane %v4506, %v4513
        %v4516 = vunpack.c.l.s4 1983009808
        %v4517 = vunpack.c.0.s8 %v4516
        %v4518 = vlaneseq
        %v4519 = vshrl.u32 %v4518, 7
        %v4520 = vsub.s32 %v4517, %v4519
        %v4521 = vrot.slane %v4507, %v4520
        %v4522 = vcombine.low %v4451, %v4457
        %v4523 = vcombine.high %v4451, %v4457
        %v4525 = vunpack.c.l.s4 1983009808
        %v4526 = vunpack.c.0.s8 %v4525
        %v4527 = vlaneseq
        %v4528 = vshrl.u32 %v4527, 7
        %v4529 = vsub.s32 %v4526, %v4528
        %v4530 = vrot.slane %v4522, %v4529
        %v4532 = vunpack.c.l.s4 1983009808
        %v4533 = vunpack.c.0.s8 %v4532
        %v4534 = vlaneseq
        %v4535 = vshrl.u32 %v4534, 7
        %v4536 = vsub.s32 %v4533, %v4535
        %v4537 = vrot.slane %v4523, %v4536
        %v4538 = vcombine.low %v4482, %v4498
        %v4539 = vcombine.high %v4482, %v4498
        %v4541 = vunpack.c.l.s4 1934713408
        %v4542 = vunpack.c.0.s8 %v4541
        %v4543 = vlaneseq
        %v4544 = vshrl.u32 %v4543, 7
        %v4545 = vsub.s32 %v4542, %v4544
        %v4546 = vrot.slane %v4538, %v4545
        %v4548 = vunpack.c.l.s4 1934713408
        %v4549 = vunpack.c.0.s8 %v4548
        %v4550 = vlaneseq
        %v4551 = vshrl.u32 %v4550, 7
        %v4552 = vsub.s32 %v4549, %v4551
        %v4553 = vrot.slane %v4539, %v4552
        %v4554 = vcombine.low %v4489, %v4505
        %v4555 = vcombine.high %v4489, %v4505
        %v4557 = vunpack.c.l.s4 1934713408
        %v4558 = vunpack.c.0.s8 %v4557
        %v4559 = vlaneseq
        %v4560 = vshrl.u32 %v4559, 7
        %v4561 = vsub.s32 %v4558, %v4560
        %v4562 = vrot.slane %v4554, %v4561
        %v4564 = vunpack.c.l.s4 1934713408
        %v4565 = vunpack.c.0.s8 %v4564
        %v4566 = vlaneseq
        %v4567 = vshrl.u32 %v4566, 7
        %v4568 = vsub.s32 %v4565, %v4567
        %v4569 = vrot.slane %v4555, %v4568
        %v4570 = vcombine.low %v4514, %v4530
        %v4571 = vcombine.high %v4514, %v4530
        %v4573 = vunpack.c.l.s4 1934713408
        %v4574 = vunpack.c.0.s8 %v4573
        %v4575 = vlaneseq
        %v4576 = vshrl.u32 %v4575, 7
        %v4577 = vsub.s32 %v4574, %v4576
        %v4578 = vrot.slane %v4570, %v4577
        %v4580 = vunpack.c.l.s4 1934713408
        %v4581 = vunpack.c.0.s8 %v4580
        %v4582 = vlaneseq
        %v4583 = vshrl.u32 %v4582, 7
        %v4584 = vsub.s32 %v4581, %v4583
        %v4585 = vrot.slane %v4571, %v4584
        %v4586 = vcombine.low %v4521, %v4537
        %v4587 = vcombine.high %v4521, %v4537
        %v4589 = vunpack.c.l.s4 1934713408
        %v4590 = vunpack.c.0.s8 %v4589
        %v4591 = vlaneseq
        %v4592 = vshrl.u32 %v4591, 7
        %v4593 = vsub.s32 %v4590, %v4592
        %v4594 = vrot.slane %v4586, %v4593
        %v4596 = vunpack.c.l.s4 1934713408
        %v4597 = vunpack.c.0.s8 %v4596
        %v4598 = vlaneseq
        %v4599 = vshrl.u32 %v4598, 7
        %v4600 = vsub.s32 %v4597, %v4599
        %v4601 = vrot.slane %v4587, %v4600
        %v4602 = vcombine.low %v4546, %v4578
        %v4603 = vcombine.high %v4546, %v4578
        %v4604 = vcombine.low %v4553, %v4585
        %v4605 = vcombine.high %v4553, %v4585
        %v4606 = vcombine.low %v4562, %v4594
        %v4607 = vcombine.high %v4562, %v4594
        %v4608 = vcombine.low %v4569, %v4601
        %v4609 = vcombine.high %v4569, %v4601
        %v4610 = vcombine.low %v4435, %v4441
        %v4612 = vunpack.c.l.s4 1983009808
        %v4613 = vunpack.c.0.s8 %v4612
        %v4614 = vlaneseq
        %v4615 = vshrl.u32 %v4614, 7
        %v4616 = vsub.s32 %v4613, %v4615
        %v4617 = vrot.slane %v4610, %v4616
        %v4618 = vcombine.low %v4438, %v4444
        %v4620 = vunpack.c.l.s4 1983009808
        %v4621 = vunpack.c.0.s8 %v4620
        %v4622 = vlaneseq
        %v4623 = vshrl.u32 %v4622, 7
        %v4624 = vsub.s32 %v4621, %v4623
        %v4625 = vrot.slane %v4618, %v4624
        %v4626 = vcombine.low %v4447, %v4453
        %v4628 = vunpack.c.l.s4 1983009808
        %v4629 = vunpack.c.0.s8 %v4628
        %v4630 = vlaneseq
        %v4631 = vshrl.u32 %v4630, 7
        %v4632 = vsub.s32 %v4629, %v4631
        %v4633 = vrot.slane %v4626, %v4632
        %v4634 = vcombine.low %v4450, %v4456
        %v4636 = vunpack.c.l.s4 1983009808
        %v4637 = vunpack.c.0.s8 %v4636
        %v4638 = vlaneseq
        %v4639 = vshrl.u32 %v4638, 7
        %v4640 = vsub.s32 %v4637, %v4639
        %v4641 = vrot.slane %v4634, %v4640
        %v4642 = vcombine.low %v4617, %v4625
        %v4643 = vcombine.high %v4617, %v4625
        %v4645 = vunpack.c.l.s4 1934713408
        %v4646 = vunpack.c.0.s8 %v4645
        %v4647 = vlaneseq
        %v4648 = vshrl.u32 %v4647, 7
        %v4649 = vsub.s32 %v4646, %v4648
        %v4650 = vrot.slane %v4642, %v4649
        %v4652 = vunpack.c.l.s4 1934713408
        %v4653 = vunpack.c.0.s8 %v4652
        %v4654 = vlaneseq
        %v4655 = vshrl.u32 %v4654, 7
        %v4656 = vsub.s32 %v4653, %v4655
        %v4657 = vrot.slane %v4643, %v4656
        %v4658 = vcombine.low %v4633, %v4641
        %v4659 = vcombine.high %v4633, %v4641
        %v4661 = vunpack.c.l.s4 1934713408
        %v4662 = vunpack.c.0.s8 %v4661
        %v4663 = vlaneseq
        %v4664 = vshrl.u32 %v4663, 7
        %v4665 = vsub.s32 %v4662, %v4664
        %v4666 = vrot.slane %v4658, %v4665
        %v4668 = vunpack.c.l.s4 1934713408
        %v4669 = vunpack.c.0.s8 %v4668
        %v4670 = vlaneseq
        %v4671 = vshrl.u32 %v4670, 7
        %v4672 = vsub.s32 %v4669, %v4671
        %v4673 = vrot.slane %v4659, %v4672
        %v4674 = vcombine.low %v4650, %v4666
        %v4675 = vcombine.high %v4650, %v4666
        %v4676 = vcombine.low %v4657, %v4673
        %v4677 = vcombine.high %v4657, %v4673
        %4679 = vrot.lane.b32.xlu0 %v4603, 12
        %v4680 = vpop.permute.xlu0 %4679
        %4683 = vrot.lane.b32.xlu0 %v4604, 24
        %v4684 = vpop.permute.xlu0 %4683
        %4687 = vrot.lane.b32.xlu0 %v4605, 36
        %v4688 = vpop.permute.xlu0 %4687
        %4691 = vrot.lane.b32.xlu0 %v4606, 48
        %v4692 = vpop.permute.xlu0 %4691
        %4695 = vrot.lane.b32.xlu0 %v4607, 60
        %v4696 = vpop.permute.xlu0 %4695
        %4699 = vrot.lane.b32.xlu0 %v4608, 72
        %v4700 = vpop.permute.xlu0 %4699
        %4703 = vrot.lane.b32.xlu0 %v4609, 84
        %v4704 = vpop.permute.xlu0 %4703
        %4707 = vrot.lane.b32.xlu0 %v4674, 96
        %v4708 = vpop.permute.xlu0 %4707
        %4711 = vrot.lane.b32.xlu0 %v4675, 108
        %v4712 = vpop.permute.xlu0 %4711
        %4715 = vrot.lane.b32.xlu0 %v4676, 120
        %v4716 = vpop.permute.xlu0 %4715
        %4719 = vrot.lane.b32.xlu0 %v4677, 4
        %v4720 = vpop.permute.xlu0 %4719
        %v4722 = vsel %vm448, %v4602, %v4680
        %v4723 = vsel %vm2873, %v4722, %v4684
        %v4724 = vsel %vm2226, %v4723, %v4688
        %v4725 = vsel %vm2876, %v4724, %v4692
        %v4726 = vsel %vm2878, %v4725, %v4696
        %v4727 = vsel %vm2880, %v4726, %v4700
        %v4728 = vsel %vm440, %v4727, %v4704
        %v4729 = vsel %vm2883, %v4728, %v4708
        %v4730 = vsel %vm2885, %v4729, %v4712
        %v4731 = vsel %vm2887, %v4730, %v4716
        %v4732 = vsel %vm2889, %v4716, %v4720
        %4733 = vrot.lane.b32.xlu0 %v4436, 127
        %v4734 = vpop.permute.xlu0 %4733
        %4735 = vrot.lane.b32.xlu0 %v4435, 127
        %v4736 = vpop.permute.xlu0 %4735
        %4737 = vrot.lane.b32.xlu0 %v4439, 127
        %v4738 = vpop.permute.xlu0 %4737
        %4739 = vrot.lane.b32.xlu0 %v4438, 127
        %v4740 = vpop.permute.xlu0 %4739
        %4741 = vrot.lane.b32.xlu0 %v4442, 127
        %v4742 = vpop.permute.xlu0 %4741
        %4743 = vrot.lane.b32.xlu0 %v4441, 127
        %v4744 = vpop.permute.xlu0 %4743
        %4745 = vrot.lane.b32.xlu0 %v4445, 127
        %v4746 = vpop.permute.xlu0 %4745
        %4747 = vrot.lane.b32.xlu0 %v4444, 127
        %v4748 = vpop.permute.xlu0 %4747
        %4749 = vrot.lane.b32.xlu0 %v4448, 127
        %v4750 = vpop.permute.xlu0 %4749
        %4751 = vrot.lane.b32.xlu0 %v4447, 127
        %v4752 = vpop.permute.xlu0 %4751
        %4753 = vrot.lane.b32.xlu0 %v4451, 127
        %v4754 = vpop.permute.xlu0 %4753
        %4755 = vrot.lane.b32.xlu0 %v4450, 127
        %v4756 = vpop.permute.xlu0 %4755
        %4757 = vrot.lane.b32.xlu0 %v4454, 127
        %v4758 = vpop.permute.xlu0 %4757
        %4759 = vrot.lane.b32.xlu0 %v4453, 127
        %v4760 = vpop.permute.xlu0 %4759
        %4761 = vrot.lane.b32.xlu0 %v4457, 127
        %v4762 = vpop.permute.xlu0 %4761
        %4763 = vrot.lane.b32.xlu0 %v4456, 127
        %v4764 = vpop.permute.xlu0 %4763
        %v4781 = vcombine.low %v4734, %v4742
        %v4782 = vcombine.high %v4734, %v4742
        %v4784 = vunpack.c.l.s4 1983009808
        %v4785 = vunpack.c.0.s8 %v4784
        %v4786 = vlaneseq
        %v4787 = vshrl.u32 %v4786, 7
        %v4788 = vsub.s32 %v4785, %v4787
        %v4789 = vrot.slane %v4781, %v4788
        %v4791 = vunpack.c.l.s4 1983009808
        %v4792 = vunpack.c.0.s8 %v4791
        %v4793 = vlaneseq
        %v4794 = vshrl.u32 %v4793, 7
        %v4795 = vsub.s32 %v4792, %v4794
        %v4796 = vrot.slane %v4782, %v4795
        %v4797 = vcombine.low %v4738, %v4746
        %v4798 = vcombine.high %v4738, %v4746
        %v4800 = vunpack.c.l.s4 1983009808
        %v4801 = vunpack.c.0.s8 %v4800
        %v4802 = vlaneseq
        %v4803 = vshrl.u32 %v4802, 7
        %v4804 = vsub.s32 %v4801, %v4803
        %v4805 = vrot.slane %v4797, %v4804
        %v4807 = vunpack.c.l.s4 1983009808
        %v4808 = vunpack.c.0.s8 %v4807
        %v4809 = vlaneseq
        %v4810 = vshrl.u32 %v4809, 7
        %v4811 = vsub.s32 %v4808, %v4810
        %v4812 = vrot.slane %v4798, %v4811
        %v4813 = vcombine.low %v4750, %v4758
        %v4814 = vcombine.high %v4750, %v4758
        %v4816 = vunpack.c.l.s4 1983009808
        %v4817 = vunpack.c.0.s8 %v4816
        %v4818 = vlaneseq
        %v4819 = vshrl.u32 %v4818, 7
        %v4820 = vsub.s32 %v4817, %v4819
        %v4821 = vrot.slane %v4813, %v4820
        %v4823 = vunpack.c.l.s4 1983009808
        %v4824 = vunpack.c.0.s8 %v4823
        %v4825 = vlaneseq
        %v4826 = vshrl.u32 %v4825, 7
        %v4827 = vsub.s32 %v4824, %v4826
        %v4828 = vrot.slane %v4814, %v4827
        %v4829 = vcombine.low %v4754, %v4762
        %v4830 = vcombine.high %v4754, %v4762
        %v4832 = vunpack.c.l.s4 1983009808
        %v4833 = vunpack.c.0.s8 %v4832
        %v4834 = vlaneseq
        %v4835 = vshrl.u32 %v4834, 7
        %v4836 = vsub.s32 %v4833, %v4835
        %v4837 = vrot.slane %v4829, %v4836
        %v4839 = vunpack.c.l.s4 1983009808
        %v4840 = vunpack.c.0.s8 %v4839
        %v4841 = vlaneseq
        %v4842 = vshrl.u32 %v4841, 7
        %v4843 = vsub.s32 %v4840, %v4842
        %v4844 = vrot.slane %v4830, %v4843
        %v4845 = vcombine.low %v4789, %v4805
        %v4846 = vcombine.high %v4789, %v4805
        %v4848 = vunpack.c.l.s4 1934713408
        %v4849 = vunpack.c.0.s8 %v4848
        %v4850 = vlaneseq
        %v4851 = vshrl.u32 %v4850, 7
        %v4852 = vsub.s32 %v4849, %v4851
        %v4853 = vrot.slane %v4845, %v4852
        %v4855 = vunpack.c.l.s4 1934713408
        %v4856 = vunpack.c.0.s8 %v4855
        %v4857 = vlaneseq
        %v4858 = vshrl.u32 %v4857, 7
        %v4859 = vsub.s32 %v4856, %v4858
        %v4860 = vrot.slane %v4846, %v4859
        %v4861 = vcombine.low %v4796, %v4812
        %v4862 = vcombine.high %v4796, %v4812
        %v4864 = vunpack.c.l.s4 1934713408
        %v4865 = vunpack.c.0.s8 %v4864
        %v4866 = vlaneseq
        %v4867 = vshrl.u32 %v4866, 7
        %v4868 = vsub.s32 %v4865, %v4867
        %v4869 = vrot.slane %v4861, %v4868
        %v4871 = vunpack.c.l.s4 1934713408
        %v4872 = vunpack.c.0.s8 %v4871
        %v4873 = vlaneseq
        %v4874 = vshrl.u32 %v4873, 7
        %v4875 = vsub.s32 %v4872, %v4874
        %v4876 = vrot.slane %v4862, %v4875
        %v4877 = vcombine.low %v4821, %v4837
        %v4878 = vcombine.high %v4821, %v4837
        %v4880 = vunpack.c.l.s4 1934713408
        %v4881 = vunpack.c.0.s8 %v4880
        %v4882 = vlaneseq
        %v4883 = vshrl.u32 %v4882, 7
        %v4884 = vsub.s32 %v4881, %v4883
        %v4885 = vrot.slane %v4877, %v4884
        %v4887 = vunpack.c.l.s4 1934713408
        %v4888 = vunpack.c.0.s8 %v4887
        %v4889 = vlaneseq
        %v4890 = vshrl.u32 %v4889, 7
        %v4891 = vsub.s32 %v4888, %v4890
        %v4892 = vrot.slane %v4878, %v4891
        %v4893 = vcombine.low %v4828, %v4844
        %v4894 = vcombine.high %v4828, %v4844
        %v4896 = vunpack.c.l.s4 1934713408
        %v4897 = vunpack.c.0.s8 %v4896
        %v4898 = vlaneseq
        %v4899 = vshrl.u32 %v4898, 7
        %v4900 = vsub.s32 %v4897, %v4899
        %v4901 = vrot.slane %v4893, %v4900
        %v4903 = vunpack.c.l.s4 1934713408
        %v4904 = vunpack.c.0.s8 %v4903
        %v4905 = vlaneseq
        %v4906 = vshrl.u32 %v4905, 7
        %v4907 = vsub.s32 %v4904, %v4906
        %v4908 = vrot.slane %v4894, %v4907
        %v4909 = vcombine.low %v4853, %v4885
        %v4910 = vcombine.high %v4853, %v4885
        %v4911 = vcombine.low %v4860, %v4892
        %v4912 = vcombine.high %v4860, %v4892
        %v4913 = vcombine.low %v4869, %v4901
        %v4914 = vcombine.high %v4869, %v4901
        %v4915 = vcombine.low %v4876, %v4908
        %v4916 = vcombine.high %v4876, %v4908
        %v4917 = vcombine.low %v4736, %v4744
        %v4919 = vunpack.c.l.s4 1983009808
        %v4920 = vunpack.c.0.s8 %v4919
        %v4921 = vlaneseq
        %v4922 = vshrl.u32 %v4921, 7
        %v4923 = vsub.s32 %v4920, %v4922
        %v4924 = vrot.slane %v4917, %v4923
        %v4925 = vcombine.low %v4740, %v4748
        %v4927 = vunpack.c.l.s4 1983009808
        %v4928 = vunpack.c.0.s8 %v4927
        %v4929 = vlaneseq
        %v4930 = vshrl.u32 %v4929, 7
        %v4931 = vsub.s32 %v4928, %v4930
        %v4932 = vrot.slane %v4925, %v4931
        %v4933 = vcombine.low %v4752, %v4760
        %v4935 = vunpack.c.l.s4 1983009808
        %v4936 = vunpack.c.0.s8 %v4935
        %v4937 = vlaneseq
        %v4938 = vshrl.u32 %v4937, 7
        %v4939 = vsub.s32 %v4936, %v4938
        %v4940 = vrot.slane %v4933, %v4939
        %v4941 = vcombine.low %v4756, %v4764
        %v4943 = vunpack.c.l.s4 1983009808
        %v4944 = vunpack.c.0.s8 %v4943
        %v4945 = vlaneseq
        %v4946 = vshrl.u32 %v4945, 7
        %v4947 = vsub.s32 %v4944, %v4946
        %v4948 = vrot.slane %v4941, %v4947
        %v4949 = vcombine.low %v4924, %v4932
        %v4950 = vcombine.high %v4924, %v4932
        %v4952 = vunpack.c.l.s4 1934713408
        %v4953 = vunpack.c.0.s8 %v4952
        %v4954 = vlaneseq
        %v4955 = vshrl.u32 %v4954, 7
        %v4956 = vsub.s32 %v4953, %v4955
        %v4957 = vrot.slane %v4949, %v4956
        %v4959 = vunpack.c.l.s4 1934713408
        %v4960 = vunpack.c.0.s8 %v4959
        %v4961 = vlaneseq
        %v4962 = vshrl.u32 %v4961, 7
        %v4963 = vsub.s32 %v4960, %v4962
        %v4964 = vrot.slane %v4950, %v4963
        %v4965 = vcombine.low %v4940, %v4948
        %v4966 = vcombine.high %v4940, %v4948
        %v4968 = vunpack.c.l.s4 1934713408
        %v4969 = vunpack.c.0.s8 %v4968
        %v4970 = vlaneseq
        %v4971 = vshrl.u32 %v4970, 7
        %v4972 = vsub.s32 %v4969, %v4971
        %v4973 = vrot.slane %v4965, %v4972
        %v4975 = vunpack.c.l.s4 1934713408
        %v4976 = vunpack.c.0.s8 %v4975
        %v4977 = vlaneseq
        %v4978 = vshrl.u32 %v4977, 7
        %v4979 = vsub.s32 %v4976, %v4978
        %v4980 = vrot.slane %v4966, %v4979
        %v4981 = vcombine.low %v4957, %v4973
        %v4982 = vcombine.high %v4957, %v4973
        %v4983 = vcombine.low %v4964, %v4980
        %v4984 = vcombine.high %v4964, %v4980
        %4986 = vrot.lane.b32.xlu0 %v4910, 12
        %v4987 = vpop.permute.xlu0 %4986
        %4990 = vrot.lane.b32.xlu0 %v4911, 24
        %v4991 = vpop.permute.xlu0 %4990
        %4994 = vrot.lane.b32.xlu0 %v4912, 36
        %v4995 = vpop.permute.xlu0 %4994
        %4998 = vrot.lane.b32.xlu0 %v4913, 48
        %v4999 = vpop.permute.xlu0 %4998
        %5002 = vrot.lane.b32.xlu0 %v4914, 60
        %v5003 = vpop.permute.xlu0 %5002
        %5006 = vrot.lane.b32.xlu0 %v4915, 72
        %v5007 = vpop.permute.xlu0 %5006
        %5010 = vrot.lane.b32.xlu0 %v4916, 84
        %v5011 = vpop.permute.xlu0 %5010
        %5014 = vrot.lane.b32.xlu0 %v4981, 96
        %v5015 = vpop.permute.xlu0 %5014
        %5018 = vrot.lane.b32.xlu0 %v4982, 108
        %v5019 = vpop.permute.xlu0 %5018
        %5022 = vrot.lane.b32.xlu0 %v4983, 120
        %v5023 = vpop.permute.xlu0 %5022
        %5026 = vrot.lane.b32.xlu0 %v4984, 4
        %v5027 = vpop.permute.xlu0 %5026
        %v5029 = vsel %vm448, %v4909, %v4987
        %v5030 = vsel %vm2873, %v5029, %v4991
        %v5031 = vsel %vm2226, %v5030, %v4995
        %v5032 = vsel %vm2876, %v5031, %v4999
        %v5033 = vsel %vm2878, %v5032, %v5003
        %v5034 = vsel %vm2880, %v5033, %v5007
        %v5035 = vsel %vm440, %v5034, %v5011
        %v5036 = vsel %vm2883, %v5035, %v5015
        %v5037 = vsel %vm2885, %v5036, %v5019
        %v5038 = vsel %vm2887, %v5037, %v5023
        %v5039 = vsel %vm2889, %v5023, %v5027
        %5040 = vrot.lane.b32.xlu0 %v4436, 126
        %v5041 = vpop.permute.xlu0 %5040
        %5042 = vrot.lane.b32.xlu0 %v4435, 126
        %v5043 = vpop.permute.xlu0 %5042
        %5044 = vrot.lane.b32.xlu0 %v4439, 126
        %v5045 = vpop.permute.xlu0 %5044
        %5046 = vrot.lane.b32.xlu0 %v4438, 126
        %v5047 = vpop.permute.xlu0 %5046
        %5048 = vrot.lane.b32.xlu0 %v4442, 126
        %v5049 = vpop.permute.xlu0 %5048
        %5050 = vrot.lane.b32.xlu0 %v4441, 126
        %v5051 = vpop.permute.xlu0 %5050
        %5052 = vrot.lane.b32.xlu0 %v4445, 126
        %v5053 = vpop.permute.xlu0 %5052
        %5054 = vrot.lane.b32.xlu0 %v4444, 126
        %v5055 = vpop.permute.xlu0 %5054
        %5056 = vrot.lane.b32.xlu0 %v4448, 126
        %v5057 = vpop.permute.xlu0 %5056
        %5058 = vrot.lane.b32.xlu0 %v4447, 126
        %v5059 = vpop.permute.xlu0 %5058
        %5060 = vrot.lane.b32.xlu0 %v4451, 126
        %v5061 = vpop.permute.xlu0 %5060
        %5062 = vrot.lane.b32.xlu0 %v4450, 126
        %v5063 = vpop.permute.xlu0 %5062
        %5064 = vrot.lane.b32.xlu0 %v4454, 126
        %v5065 = vpop.permute.xlu0 %5064
        %5066 = vrot.lane.b32.xlu0 %v4453, 126
        %v5067 = vpop.permute.xlu0 %5066
        %5068 = vrot.lane.b32.xlu0 %v4457, 126
        %v5069 = vpop.permute.xlu0 %5068
        %5070 = vrot.lane.b32.xlu0 %v4456, 126
        %v5071 = vpop.permute.xlu0 %5070
        %v5088 = vcombine.low %v5041, %v5049
        %v5089 = vcombine.high %v5041, %v5049
        %v5091 = vunpack.c.l.s4 1983009808
        %v5092 = vunpack.c.0.s8 %v5091
        %v5093 = vlaneseq
        %v5094 = vshrl.u32 %v5093, 7
        %v5095 = vsub.s32 %v5092, %v5094
        %v5096 = vrot.slane %v5088, %v5095
        %v5098 = vunpack.c.l.s4 1983009808
        %v5099 = vunpack.c.0.s8 %v5098
        %v5100 = vlaneseq
        %v5101 = vshrl.u32 %v5100, 7
        %v5102 = vsub.s32 %v5099, %v5101
        %v5103 = vrot.slane %v5089, %v5102
        %v5104 = vcombine.low %v5045, %v5053
        %v5105 = vcombine.high %v5045, %v5053
        %v5107 = vunpack.c.l.s4 1983009808
        %v5108 = vunpack.c.0.s8 %v5107
        %v5109 = vlaneseq
        %v5110 = vshrl.u32 %v5109, 7
        %v5111 = vsub.s32 %v5108, %v5110
        %v5112 = vrot.slane %v5104, %v5111
        %v5114 = vunpack.c.l.s4 1983009808
        %v5115 = vunpack.c.0.s8 %v5114
        %v5116 = vlaneseq
        %v5117 = vshrl.u32 %v5116, 7
        %v5118 = vsub.s32 %v5115, %v5117
        %v5119 = vrot.slane %v5105, %v5118
        %v5120 = vcombine.low %v5057, %v5065
        %v5121 = vcombine.high %v5057, %v5065
        %v5123 = vunpack.c.l.s4 1983009808
        %v5124 = vunpack.c.0.s8 %v5123
        %v5125 = vlaneseq
        %v5126 = vshrl.u32 %v5125, 7
        %v5127 = vsub.s32 %v5124, %v5126
        %v5128 = vrot.slane %v5120, %v5127
        %v5130 = vunpack.c.l.s4 1983009808
        %v5131 = vunpack.c.0.s8 %v5130
        %v5132 = vlaneseq
        %v5133 = vshrl.u32 %v5132, 7
        %v5134 = vsub.s32 %v5131, %v5133
        %v5135 = vrot.slane %v5121, %v5134
        %v5136 = vcombine.low %v5061, %v5069
        %v5137 = vcombine.high %v5061, %v5069
        %v5139 = vunpack.c.l.s4 1983009808
        %v5140 = vunpack.c.0.s8 %v5139
        %v5141 = vlaneseq
        %v5142 = vshrl.u32 %v5141, 7
        %v5143 = vsub.s32 %v5140, %v5142
        %v5144 = vrot.slane %v5136, %v5143
        %v5146 = vunpack.c.l.s4 1983009808
        %v5147 = vunpack.c.0.s8 %v5146
        %v5148 = vlaneseq
        %v5149 = vshrl.u32 %v5148, 7
        %v5150 = vsub.s32 %v5147, %v5149
        %v5151 = vrot.slane %v5137, %v5150
        %v5152 = vcombine.low %v5096, %v5112
        %v5153 = vcombine.high %v5096, %v5112
        %v5155 = vunpack.c.l.s4 1934713408
        %v5156 = vunpack.c.0.s8 %v5155
        %v5157 = vlaneseq
        %v5158 = vshrl.u32 %v5157, 7
        %v5159 = vsub.s32 %v5156, %v5158
        %v5160 = vrot.slane %v5152, %v5159
        %v5162 = vunpack.c.l.s4 1934713408
        %v5163 = vunpack.c.0.s8 %v5162
        %v5164 = vlaneseq
        %v5165 = vshrl.u32 %v5164, 7
        %v5166 = vsub.s32 %v5163, %v5165
        %v5167 = vrot.slane %v5153, %v5166
        %v5168 = vcombine.low %v5103, %v5119
        %v5169 = vcombine.high %v5103, %v5119
        %v5171 = vunpack.c.l.s4 1934713408
        %v5172 = vunpack.c.0.s8 %v5171
        %v5173 = vlaneseq
        %v5174 = vshrl.u32 %v5173, 7
        %v5175 = vsub.s32 %v5172, %v5174
        %v5176 = vrot.slane %v5168, %v5175
        %v5178 = vunpack.c.l.s4 1934713408
        %v5179 = vunpack.c.0.s8 %v5178
        %v5180 = vlaneseq
        %v5181 = vshrl.u32 %v5180, 7
        %v5182 = vsub.s32 %v5179, %v5181
        %v5183 = vrot.slane %v5169, %v5182
        %v5184 = vcombine.low %v5128, %v5144
        %v5185 = vcombine.high %v5128, %v5144
        %v5187 = vunpack.c.l.s4 1934713408
        %v5188 = vunpack.c.0.s8 %v5187
        %v5189 = vlaneseq
        %v5190 = vshrl.u32 %v5189, 7
        %v5191 = vsub.s32 %v5188, %v5190
        %v5192 = vrot.slane %v5184, %v5191
        %v5194 = vunpack.c.l.s4 1934713408
        %v5195 = vunpack.c.0.s8 %v5194
        %v5196 = vlaneseq
        %v5197 = vshrl.u32 %v5196, 7
        %v5198 = vsub.s32 %v5195, %v5197
        %v5199 = vrot.slane %v5185, %v5198
        %v5200 = vcombine.low %v5135, %v5151
        %v5201 = vcombine.high %v5135, %v5151
        %v5203 = vunpack.c.l.s4 1934713408
        %v5204 = vunpack.c.0.s8 %v5203
        %v5205 = vlaneseq
        %v5206 = vshrl.u32 %v5205, 7
        %v5207 = vsub.s32 %v5204, %v5206
        %v5208 = vrot.slane %v5200, %v5207
        %v5210 = vunpack.c.l.s4 1934713408
        %v5211 = vunpack.c.0.s8 %v5210
        %v5212 = vlaneseq
        %v5213 = vshrl.u32 %v5212, 7
        %v5214 = vsub.s32 %v5211, %v5213
        %v5215 = vrot.slane %v5201, %v5214
        %v5216 = vcombine.low %v5160, %v5192
        %v5217 = vcombine.high %v5160, %v5192
        %v5218 = vcombine.low %v5167, %v5199
        %v5219 = vcombine.high %v5167, %v5199
        %v5220 = vcombine.low %v5176, %v5208
        %v5221 = vcombine.high %v5176, %v5208
        %v5222 = vcombine.low %v5183, %v5215
        %v5223 = vcombine.high %v5183, %v5215
        %v5224 = vcombine.low %v5043, %v5051
        %v5226 = vunpack.c.l.s4 1983009808
        %v5227 = vunpack.c.0.s8 %v5226
        %v5228 = vlaneseq
        %v5229 = vshrl.u32 %v5228, 7
        %v5230 = vsub.s32 %v5227, %v5229
        %v5231 = vrot.slane %v5224, %v5230
        %v5232 = vcombine.low %v5047, %v5055
        %v5234 = vunpack.c.l.s4 1983009808
        %v5235 = vunpack.c.0.s8 %v5234
        %v5236 = vlaneseq
        %v5237 = vshrl.u32 %v5236, 7
        %v5238 = vsub.s32 %v5235, %v5237
        %v5239 = vrot.slane %v5232, %v5238
        %v5240 = vcombine.low %v5059, %v5067
        %v5242 = vunpack.c.l.s4 1983009808
        %v5243 = vunpack.c.0.s8 %v5242
        %v5244 = vlaneseq
        %v5245 = vshrl.u32 %v5244, 7
        %v5246 = vsub.s32 %v5243, %v5245
        %v5247 = vrot.slane %v5240, %v5246
        %v5248 = vcombine.low %v5063, %v5071
        %v5250 = vunpack.c.l.s4 1983009808
        %v5251 = vunpack.c.0.s8 %v5250
        %v5252 = vlaneseq
        %v5253 = vshrl.u32 %v5252, 7
        %v5254 = vsub.s32 %v5251, %v5253
        %v5255 = vrot.slane %v5248, %v5254
        %v5256 = vcombine.low %v5231, %v5239
        %v5257 = vcombine.high %v5231, %v5239
        %v5259 = vunpack.c.l.s4 1934713408
        %v5260 = vunpack.c.0.s8 %v5259
        %v5261 = vlaneseq
        %v5262 = vshrl.u32 %v5261, 7
        %v5263 = vsub.s32 %v5260, %v5262
        %v5264 = vrot.slane %v5256, %v5263
        %v5266 = vunpack.c.l.s4 1934713408
        %v5267 = vunpack.c.0.s8 %v5266
        %v5268 = vlaneseq
        %v5269 = vshrl.u32 %v5268, 7
        %v5270 = vsub.s32 %v5267, %v5269
        %v5271 = vrot.slane %v5257, %v5270
        %v5272 = vcombine.low %v5247, %v5255
        %v5273 = vcombine.high %v5247, %v5255
        %v5275 = vunpack.c.l.s4 1934713408
        %v5276 = vunpack.c.0.s8 %v5275
        %v5277 = vlaneseq
        %v5278 = vshrl.u32 %v5277, 7
        %v5279 = vsub.s32 %v5276, %v5278
        %v5280 = vrot.slane %v5272, %v5279
        %v5282 = vunpack.c.l.s4 1934713408
        %v5283 = vunpack.c.0.s8 %v5282
        %v5284 = vlaneseq
        %v5285 = vshrl.u32 %v5284, 7
        %v5286 = vsub.s32 %v5283, %v5285
        %v5287 = vrot.slane %v5273, %v5286
        %v5288 = vcombine.low %v5264, %v5280
        %v5289 = vcombine.high %v5264, %v5280
        %v5290 = vcombine.low %v5271, %v5287
        %v5291 = vcombine.high %v5271, %v5287
        %5293 = vrot.lane.b32.xlu0 %v5217, 12
        %v5294 = vpop.permute.xlu0 %5293
        %5297 = vrot.lane.b32.xlu0 %v5218, 24
        %v5298 = vpop.permute.xlu0 %5297
        %5301 = vrot.lane.b32.xlu0 %v5219, 36
        %v5302 = vpop.permute.xlu0 %5301
        %5305 = vrot.lane.b32.xlu0 %v5220, 48
        %v5306 = vpop.permute.xlu0 %5305
        %5309 = vrot.lane.b32.xlu0 %v5221, 60
        %v5310 = vpop.permute.xlu0 %5309
        %5313 = vrot.lane.b32.xlu0 %v5222, 72
        %v5314 = vpop.permute.xlu0 %5313
        %5317 = vrot.lane.b32.xlu0 %v5223, 84
        %v5318 = vpop.permute.xlu0 %5317
        %5321 = vrot.lane.b32.xlu0 %v5288, 96
        %v5322 = vpop.permute.xlu0 %5321
        %5325 = vrot.lane.b32.xlu0 %v5289, 108
        %v5326 = vpop.permute.xlu0 %5325
        %5329 = vrot.lane.b32.xlu0 %v5290, 120
        %v5330 = vpop.permute.xlu0 %5329
        %5333 = vrot.lane.b32.xlu0 %v5291, 4
        %v5334 = vpop.permute.xlu0 %5333
        %v5336 = vsel %vm448, %v5216, %v5294
        %v5337 = vsel %vm2873, %v5336, %v5298
        %v5338 = vsel %vm2226, %v5337, %v5302
        %v5339 = vsel %vm2876, %v5338, %v5306
        %v5340 = vsel %vm2878, %v5339, %v5310
        %v5341 = vsel %vm2880, %v5340, %v5314
        %v5342 = vsel %vm440, %v5341, %v5318
        %v5343 = vsel %vm2883, %v5342, %v5322
        %v5344 = vsel %vm2885, %v5343, %v5326
        %v5345 = vsel %vm2887, %v5344, %v5330
        %v5346 = vsel %vm2889, %v5330, %v5334
        %v5347 = vld [vmem:[%s3] sm:$0xff]
        %v5348 = vld [vmem:[%s4] sm:$0xff]
        %5350 = vset.pattern.permute.xlu0 0
        %5351 = vperm.xlu0 %5350, %v5348
        %v5352 = vpop.permute.xlu0 %5351
        %v5355 = vsel %vm2880, %v5347, 0
        %5357 = vmatprep.subr.mxu0 %v2890
        %5358 = vmatpush1.msra.mxu0 %v2888
        %5359 = vmatprep.subr.mxu0 %v3213
        %5360 = vmatpush1.msra.mxu0 %v3212
        %5361 = vmatprep.subr.mxu0 %v3520
        %5362 = vmatpush1.msra.mxu0 %v3519
        %5363 = vmatprep.subr.mxu0 %v3819
        %5364 = vmatpush1.msra.mxu0 %v3818
        %5365 = vmatprep.subr.mxu0 %v4126
        %5366 = vmatpush1.msra.mxu0 %v4125
        %5367 = vmatprep.subr.mxu0 %v4433
        %5368 = vmatpush1.msra.mxu0 %v4432
        %5369 = vmatprep.subr.mxu0 %v4732
        %5370 = vmatpush1.msra.mxu0 %v4731
        %5371 = vmatprep.subr.mxu0 %v5039
        %5372 = vmatpush1.msra.mxu0 %v5038
        %5373 = vmatprep.subr.mxu0 %v5346
        %5374 = vmatpush1.msra.mxu0 %v5345
        %5375 = vmatprep.subr.mxu0 0.0
        %5376 = vmatpush1.msra.mxu0 0.0
        %5377 = vmatprep.subr.mxu0 0.0
        %5378 = vmatpush1.msra.mxu0 0.0
        %5379 = vmatprep.subr.mxu0 0.0
        %5380 = vmatpush1.msra.mxu0 0.0
        %5381 = vmatprep.subr.mxu0 0.0
        %5382 = vmatpush1.msra.mxu0 0.0
        %5383 = vmatprep.subr.mxu0 0.0
        %5384 = vmatpush1.msra.mxu0 0.0
        %5385 = vmatprep.subr.mxu0 0.0
        %5386 = vmatpush1.msra.mxu0 0.0
        %5387 = vmatprep.subr.mxu0 0.0
        %5388 = vmatpush1.msra.mxu0 0.0
        %5389 = vmatprep.subr.mxu0 0.0
        %5390 = vmatpush1.msra.mxu0 0.0
        %5391 = vmatprep.subr.mxu0 0.0
        %5392 = vmatpush1.msra.mxu0 0.0
        %5393 = vmatprep.subr.mxu0 0.0
        %5394 = vmatpush1.msra.mxu0 0.0
        %5395 = vmatprep.subr.mxu0 0.0
        %5396 = vmatpush1.msra.mxu0 0.0
        %5397 = vmatprep.subr.mxu0 0.0
        %5398 = vmatpush1.msra.mxu0 0.0
        %5399 = vmatprep.subr.mxu0 0.0
        %5400 = vmatpush1.msra.mxu0 0.0
        %5401 = vmatprep.subr.mxu0 0.0
        %5402 = vmatpush1.msra.mxu0 0.0
        %5403 = vmatprep.subr.mxu0 0.0
        %5404 = vmatpush1.msra.mxu0 0.0
        %5405 = vmatprep.subr.mxu0 0.0
        %5406 = vmatpush1.msra.mxu0 0.0
        %5407 = vmatprep.subr.mxu0 0.0
        %5408 = vmatpush1.msra.mxu0 0.0
        %5409 = vmatprep.subr.mxu0 0.0
        %5410 = vmatpush1.msra.mxu0 0.0
        %5411 = vmatprep.subr.mxu0 0.0
        %5412 = vmatpush1.msra.mxu0 0.0
        %5413 = vmatprep.subr.mxu0 0.0
        %5414 = vmatpush1.msra.mxu0 0.0
        %5415 = vmatprep.subr.mxu0 0.0
        %5416 = vmatpush1.msra.mxu0 0.0
        %5417 = vmatprep.subr.mxu0 0.0
        %5418 = vmatpush1.msra.mxu0 0.0
        %5419 = vmatprep.subr.mxu0 0.0
        %5420 = vmatpush1.msra.mxu0 0.0
        %5421 = vmatprep.mubr.f32.mxu0 0.0
        %5422 = vmatmul.mubr.f32.gmra.mrb[0].mxu0 %v5355
        %v5423 = vpop.f32.mrb[0].mxu0
        %v5424 = vadd.f32 %v5352, %v5423
        %v5425 = vpop.f32.mrb[0].mxu0
        %v5426 = vadd.f32 %v5352, %v5425
        %5427 = vdwg.mxu0
        %v5428 = vmax.f32 %v5424, 0.0
        %v5429 = vmax.f32 %v5426, 0.0
        %5430 = vst [vmem:[%s242] sm:$0xff] %v5428
        %vm5431 = vcmask 130048
        %5432 = vst.msk [vmem:[%s242 + $0x8] sm:$0xff] %vm5431, %v5429
        %s5433 = sand.u32 %s140, 1
        %s5434 = scalar_lea.sflag [#allocation4], %s5433
        %s5435 = sand.u32 %s140, 1
        %s5436 = smul.addr %s5435, 16
        %s5437 = scalar_lea.vmem [#allocation5], %s5436
        // Predicated region
        $region45: #{tpu_custom_call.1} parent=39 // pred_check
          %p5438 = pneg %p150
        $region46: #{tpu_custom_call.1} parent=39 // pred_check_branch
          %5440 = sbr.rel (%p5438) target = $region48
        $region47: #{tpu_custom_call.1} parent=39 // pred_region
          %s5442 = ssub.s32 256, 256
          %5443 = vsyncadd %s5434, %s5442
          %s5444 = smul.addr %s22, 2
          %s5445 = smul.addr %s5444, 128
          %s5446 = scalar_lea.hbm %s5, %s5445
          %s5448 = sshll.u32 %s5437, 4
          %s5449 = int_to_ptr.vmem [resolvable:$true] %s5448
          %5451 = dma.vmem_to_hbm [thread:$0]  %s5449, 256, %s5446, %s5434
        $region48: #{tpu_custom_call.1} parent=39 // pred_fallthru
          _
      $region40: #{tpu_custom_call.1} parent=5 // pred_fallthru
        _
      %p5452 = scmp.le.s32.totalorder 2, %s17
      // Predicated region
      $region49: #{tpu_custom_call.1} parent=5 // pred_check
        %p5453 = pneg %p5452
      $region50: #{tpu_custom_call.1} parent=5 // pred_check_branch
        %5455 = sbr.rel (%p5453) target = $region52
      $region51: #{tpu_custom_call.1} parent=5 // pred_region
        %s5456 = ssub.s32 %s17, 2
        // Predicated region
        $region53: #{tpu_custom_call.1} parent=51 // pred_check
          %p5457 = pneg %p156
        $region54: #{tpu_custom_call.1} parent=51 // pred_check_branch
          %5459 = sbr.rel (%p5457) target = $region56
        $region55: #{tpu_custom_call.1} parent=51 // pred_region
          %s5460 = sand.u32 %s141, 1
          %s5461 = scalar_lea.sflag [#allocation4], %s5460
          %s5462 = sand.u32 %s141, 1
          %s5463 = smul.addr %s5462, 16
          %s5464 = scalar_lea.vmem [#allocation5], %s5463
          %5465 = dma.done %s5461, 256
        $region56: #{tpu_custom_call.1} parent=51 // pred_fallthru
          _
      $region52: #{tpu_custom_call.1} parent=5 // pred_fallthru
        _
    $region6: #{tpu_custom_call.1} parent=1 // loop_footer
      %s21 = sadd.s32 1, %s17
    $region7: #{tpu_custom_call.1} parent=1 // loop_footer_branch
      %16 = sbr.rel target = $region3
    $region8: #{tpu_custom_call.1} parent=1 // loop_exit
      _
    %5466 = vsyncpa [#allocation3], 1
    %s5467 = scalar_lea.sflag [#allocation3], 1
    %5468 = vsyncpa %s5467, 1
    %5469 = vsyncpa [#allocation4], 1
    %s5470 = scalar_lea.sflag [#allocation4], 1
    %5471 = vsyncpa %s5470, 1

</llo_original>
